<compile_context>
chip_gen: v6e
topology: v6e:2x2x1
jax: 0.10.0
libtpu: 0.0.40
codegen_flags: <defaults>
</compile_context>

<pallas_src>
import numpy as np
import jax
import jax.numpy as jnp
from jax import lax
from jax.experimental import pallas as pl
from jax.experimental.pallas import tpu as pltpu

# ----- small hyperparameters (module uses n_embd=384, n_head=6, ...; scaled down) -----
VOCAB = 65            # char-level vocab size
VOCAB_PAD = 128       # lane-dense padded width (tok rows / logits lanes)
N_EMBD = 32
BLOCK_SIZE = 16
N_HEAD = 4
N_LAYER = 2
HEAD = N_EMBD // N_HEAD
EPS = 1e-5            # nn.LayerNorm default eps
NEG = -1e30           # additive causal-mask value
PAD_BIAS = -1e9       # lm_head bias for the 63 padded vocab lanes (softmax-safe)


def _layernorm(z, g, b):
    mu = jnp.mean(z, axis=-1, keepdims=True)
    var = jnp.mean((z - mu) ** 2, axis=-1, keepdims=True)
    return (z - mu) * lax.rsqrt(var + EPS) * g + b


# ---------------------------------------------------------------------------
# Single fused kernel: embedding + all transformer blocks + final LN + lm_head
# for the whole (B, T) batch in one invocation.
# ---------------------------------------------------------------------------
def _make_kernel(B, T):
    BT = B * T

    def kernel(idx_ref, tok_ref, pos_ref,
               g1_ref, b1_ref, wqkv_ref, wo_ref, bo_ref,
               g2_ref, b2_ref, w1_ref, bf1_ref, w2_ref, bf2_ref,
               gf_ref, bfin_ref, wl_ref, bl_ref,
               out_ref):
        # ---- token + positional embedding fused in-kernel (one-hot matmul) ----
        ids = idx_ref[...]                                            # (BT,1) int32
        lane = lax.broadcasted_iota(jnp.int32, (BT, VOCAB_PAD), 1)
        onehot = (lane == ids).astype(jnp.float32)                    # (BT,128)
        x = jnp.dot(onehot, tok_ref[...], preferred_element_type=jnp.float32)
        x = x + jnp.tile(pos_ref[0:T, :], (B, 1))                     # (BT, C)

        # Causal additive mask built once for the whole forward.
        row = lax.broadcasted_iota(jnp.int32, (T, T), 0)
        col = lax.broadcasted_iota(jnp.int32, (T, T), 1)
        neg_mask = jnp.where(row >= col, 0.0, NEG).astype(jnp.float32)
        scale = jnp.float32(float(N_EMBD) ** -0.5)   # reference quirk: C**-0.5, C = n_embd

        for l in range(N_LAYER):                     # unrolled; static layer slices
            # --- x = x + sa(ln1(x)) : multi-head causal self-attention ---
            h = _layernorm(x, g1_ref[l], b1_ref[l])
            qkv = jnp.dot(h, wqkv_ref[l], preferred_element_type=jnp.float32)  # (BT,3C)
            q = qkv[:, 0 * N_EMBD:1 * N_EMBD] * scale          # scale folded into q once
            k = qkv[:, 1 * N_EMBD:2 * N_EMBD]
            v = qkv[:, 2 * N_EMBD:3 * N_EMBD]

            att_rows = []
            for b in range(B):                                  # per batch element
                r = slice(b * T, (b + 1) * T)
                qb, kb, vb = q[r], k[r], v[r]

                # per-head scores via dot_general (contract last dims -> no .T)
                shifted = []
                for hh in range(N_HEAD):
                    c = slice(hh * HEAD, (hh + 1) * HEAD)
                    s = lax.dot_general(
                        qb[:, c], kb[:, c],
                        dimension_numbers=(((1,), (1,)), ((), ())),
                        preferred_element_type=jnp.float32)     # (T, T)
                    s = s + neg_mask
                    shifted.append(s - jnp.max(s, axis=-1, keepdims=True))

                # heads packed along lanes -> one batched exp per layer per batch
                slab = jnp.concatenate(shifted, axis=-1)        # (T, N_HEAD*T)
                e = jnp.exp(slab)

                outs = []
                for hh in range(N_HEAD):
                    eh = e[:, hh * T:(hh + 1) * T]
                    pmat = eh * pl.reciprocal(
                        jnp.sum(eh, axis=-1, keepdims=True), approx=True)
                    outs.append(jnp.dot(pmat, vb[:, hh * HEAD:(hh + 1) * HEAD],
                                        preferred_element_type=jnp.float32))
                att_rows.append(jnp.concatenate(outs, axis=-1))  # (T, C)

            att = jnp.concatenate(att_rows, axis=0)              # (BT, C)
            x = x + jnp.dot(att, wo_ref[l],
                            preferred_element_type=jnp.float32) + bo_ref[l]

            # --- x = x + ffwd(ln2(x)) ---
            h2 = _layernorm(x, g2_ref[l], b2_ref[l])
            f = jnp.dot(h2, w1_ref[l], preferred_element_type=jnp.float32) + bf1_ref[l]
            f = jnp.maximum(f, 0.0)
            x = x + jnp.dot(f, w2_ref[l], preferred_element_type=jnp.float32) + bf2_ref[l]

        # --- final LayerNorm + lm_head (lane-dense, VOCAB padded to 128) ---
        hf = _layernorm(x, gf_ref[...], bfin_ref[...])
        out_ref[...] = jnp.dot(hf, wl_ref[...],
                               preferred_element_type=jnp.float32) + bl_ref[...]

    return kernel


# ---------------------------------------------------------------------------
# Wrapper (mirrors GPTLanguageModel.forward: returns (logits, loss))
# ---------------------------------------------------------------------------
def gpt_forward(idx, params, targets=None):
    B, T = idx.shape
    BT = B * T
    p = params['packed']
    weights = [p['tok'], p['pos'],
               p['g1'], p['b1'], p['wqkv'], p['wo'], p['bo'],
               p['g2'], p['b2'], p['w1'], p['bf1'], p['w2'], p['bf2'],
               p['gf'], p['bf'], p['wl'], p['bl']]
    idx2d = idx.reshape(BT, 1).astype(jnp.int32)

    # Whole-array VMEM refs, no grid: single kernel step, weights never re-DMA'd.
    # NOTE(real config, n_embd=384/n_layer=6): set vmem_limit_bytes explicitly and
    # use bf16 MXU operands / a streamed layer axis on v7x (64 MiB VMEM).
    vmem = pl.BlockSpec(memory_space=pltpu.MemorySpace.VMEM)
    logits_pad = pl.pallas_call(
        _make_kernel(B, T),
        out_shape=jax.ShapeDtypeStruct((BT, VOCAB_PAD), jnp.float32),
        in_specs=[vmem] * (1 + len(weights)),
        out_specs=vmem,
    )(idx2d, *weights)

    # slice padded lanes away BEFORE any softmax / loss
    logits = logits_pad[:, :VOCAB].reshape(B, T, VOCAB)

    loss = None
    if targets is not None:
        logp = jax.nn.log_softmax(logits.reshape(BT, VOCAB), axis=-1)
        loss = -jnp.mean(jnp.take_along_axis(
            logp, targets.reshape(BT, 1), axis=-1))
    return logits, loss


# ---------------------------------------------------------------------------
# Deterministic parameter init (synthetic weights) + layer-stacked packing
# ---------------------------------------------------------------------------
def init_params(key):
    keys = iter(jax.random.split(key, 64))

    def w(shape, scale=0.02):
        return (scale * jax.random.normal(next(keys), shape)).astype(jnp.float32)

    ones = lambda n: jnp.ones((1, n), jnp.float32)
    zeros = lambda n: jnp.zeros((1, n), jnp.float32)

    params = {
        'tok': w((VOCAB, N_EMBD)),
        'pos': w((BLOCK_SIZE, N_EMBD)),
        'blocks': [],
        'gf': ones(N_EMBD), 'bf': zeros(N_EMBD),
        'wl': w((N_EMBD, VOCAB)), 'bl': zeros(VOCAB),
    }
    for _ in range(N_LAYER):
        params['blocks'].append(dict(
            g1=ones(N_EMBD), b1=zeros(N_EMBD),
            wq=w((N_EMBD, N_EMBD)), wk=w((N_EMBD, N_EMBD)), wv=w((N_EMBD, N_EMBD)),
            wo=w((N_EMBD, N_EMBD)), bo=zeros(N_EMBD),
            g2=ones(N_EMBD), b2=zeros(N_EMBD),
            w1=w((N_EMBD, 4 * N_EMBD)), bf1=zeros(4 * N_EMBD),
            w2=w((4 * N_EMBD, N_EMBD)), bf2=zeros(N_EMBD),
        ))
    params['packed'] = pack_params(params)
    return params


def pack_params(params):
    """Stack per-layer weights along a leading layer axis; fuse Wq/Wk/Wv;
    zero-pad tok rows and lm_head lanes to 128 (pad bias lanes get PAD_BIAS)."""
    bl = params['blocks']
    st = lambda k: jnp.stack([b[k] for b in bl], axis=0)
    return {
        'tok': jnp.pad(params['tok'], ((0, VOCAB_PAD - VOCAB), (0, 0))),   # (128, C)
        'pos': params['pos'],                                              # (BLOCK, C)
        'g1': st('g1'), 'b1': st('b1'),
        'wqkv': jnp.stack([jnp.concatenate([b['wq'], b['wk'], b['wv']], axis=1)
                           for b in bl], axis=0),                          # (L, C, 3C)
        'wo': st('wo'), 'bo': st('bo'),
        'g2': st('g2'), 'b2': st('b2'),
        'w1': st('w1'), 'bf1': st('bf1'),
        'w2': st('w2'), 'bf2': st('bf2'),
        'gf': params['gf'], 'bf': params['bf'],
        'wl': jnp.pad(params['wl'], ((0, 0), (0, VOCAB_PAD - VOCAB))),     # (C, 128)
        'bl': jnp.pad(params['bl'], ((0, 0), (0, VOCAB_PAD - VOCAB)),
                      constant_values=PAD_BIAS),                           # (1, 128)
    }


# ---------------------------------------------------------------------------
# Pure-JAX reference (for correctness check)
# ---------------------------------------------------------------------------
def ref_forward(idx, params):
    def ln(z, g, b):
        mu = z.mean(-1, keepdims=True)
        var = ((z - mu) ** 2).mean(-1, keepdims=True)
        return (z - mu) / jnp.sqrt(var + EPS) * g + b

    T = idx.shape[1]
    x = params['tok'][idx] + params['pos'][:T]
    mask = jnp.tril(jnp.ones((T, T), bool))
    for bp in params['blocks']:
        h = ln(x, bp['g1'], bp['b1'])
        q, k, v = h @ bp['wq'], h @ bp['wk'], h @ bp['wv']
        outs = []
        for hh in range(N_HEAD):
            sl = slice(hh * HEAD, (hh + 1) * HEAD)
            wei = (q[..., sl] @ jnp.swapaxes(k[..., sl], -1, -2)) * (N_EMBD ** -0.5)
            wei = jnp.where(mask, wei, -jnp.inf)
            wei = jax.nn.softmax(wei, -1)
            outs.append(wei @ v[..., sl])
        att = jnp.concatenate(outs, -1)
        x = x + att @ bp['wo'] + bp['bo']
        h2 = ln(x, bp['g2'], bp['b2'])
        x = x + jax.nn.relu(h2 @ bp['w1'] + bp['bf1']) @ bp['w2'] + bp['bf2']
    x = ln(x, params['gf'], params['bf'])
    return x @ params['wl'] + params['bl']


# TODO(synk): generate() uses torch.multinomial sampling; the autoregressive
# sampling loop is host-side control flow and is not part of this kernel.

if __name__ == "__main__":
    key = jax.random.PRNGKey(0)
    pkey, ikey = jax.random.split(key)
    params = init_params(pkey)

    B, T = 2, BLOCK_SIZE
    idx = jax.random.randint(ikey, (B, T), 0, VOCAB, dtype=jnp.int32)

    logits, loss = gpt_forward(idx, params)          # targets=None -> loss is None
    logits = jax.block_until_ready(logits)

    assert logits.shape == (B, T, VOCAB)
    assert loss is None
    ref = jax.block_until_ready(ref_forward(idx, params))
    # tolerance accommodates the EUP approximate-reciprocal softmax denominator
    np.testing.assert_allclose(np.asarray(logits), np.asarray(ref),
                               rtol=2e-3, atol=2e-3)
    print("KERNEL_OK")
</pallas_src>

<mosaic_0001>
module attributes {stable_mosaic.version = 11 : i64} {
  func.func @kernel(%arg0: memref<32x1xi32, #tpu.memory_space<vmem>>, %arg1: memref<128x32xf32, #tpu.memory_space<vmem>>, %arg2: memref<16x32xf32, #tpu.memory_space<vmem>>, %arg3: memref<2x1x32xf32, #tpu.memory_space<vmem>>, %arg4: memref<2x1x32xf32, #tpu.memory_space<vmem>>, %arg5: memref<2x32x96xf32, #tpu.memory_space<vmem>>, %arg6: memref<2x32x32xf32, #tpu.memory_space<vmem>>, %arg7: memref<2x1x32xf32, #tpu.memory_space<vmem>>, %arg8: memref<2x1x32xf32, #tpu.memory_space<vmem>>, %arg9: memref<2x1x32xf32, #tpu.memory_space<vmem>>, %arg10: memref<2x32x128xf32, #tpu.memory_space<vmem>>, %arg11: memref<2x1x128xf32, #tpu.memory_space<vmem>>, %arg12: memref<2x128x32xf32, #tpu.memory_space<vmem>>, %arg13: memref<2x1x32xf32, #tpu.memory_space<vmem>>, %arg14: memref<1x32xf32, #tpu.memory_space<vmem>>, %arg15: memref<1x32xf32, #tpu.memory_space<vmem>>, %arg16: memref<32x128xf32, #tpu.memory_space<vmem>>, %arg17: memref<1x128xf32, #tpu.memory_space<vmem>>, %arg18: memref<32x128xf32, #tpu.memory_space<vmem>>) attributes {dimension_semantics = [], scalar_prefetch = 0 : i64, scratch_operands = 0 : i64, tpu.core_type = #tpu.core_type<tc>} {
    %c0 = arith.constant 0 : index
    %c0_0 = arith.constant 0 : index
    %0 = vector.load %arg0[%c0, %c0_0] : memref<32x1xi32, #tpu.memory_space<vmem>>, vector<32x1xi32>
    %1 = tpu.iota {dimensions = array<i32: 1>} : vector<32x128xi32>
    %2 = vector.broadcast %0 : vector<32x1xi32> to vector<32x128xi32>
    %3 = arith.cmpi eq, %1, %2 : vector<32x128xi32>
    %4 = arith.extui %3 : vector<32x128xi1> to vector<32x128xi32>
    %5 = arith.sitofp %4 : vector<32x128xi32> to vector<32x128xf32>
    %c0_1 = arith.constant 0 : index
    %c0_2 = arith.constant 0 : index
    %6 = vector.load %arg1[%c0_1, %c0_2] : memref<128x32xf32, #tpu.memory_space<vmem>>, vector<128x32xf32>
    %cst = arith.constant dense<0.000000e+00> : vector<32x32xf32>
    %7 = tpu.matmul %5, %6, %cst {dimension_numbers = #tpu.dot_dimension_numbers<[1], [0], [0], [1], [0, 0, 1, 1], [], []>} : vector<32x128xf32>, vector<128x32xf32>, vector<32x32xf32> -> vector<32x32xf32>
    %c0_3 = arith.constant 0 : index
    %c0_4 = arith.constant 0 : index
    %8 = vector.load %arg2[%c0_3, %c0_4] : memref<16x32xf32, #tpu.memory_space<vmem>>, vector<16x32xf32>
    %9 = tpu.concatenate %8, %8 in 0 : vector<16x32xf32>, vector<16x32xf32> -> vector<32x32xf32>
    %10 = arith.addf %7, %9 : vector<32x32xf32>
    %11 = tpu.iota {dimensions = array<i32: 0>} : vector<16x16xi32>
    %12 = tpu.iota {dimensions = array<i32: 1>} : vector<16x16xi32>
    %13 = arith.cmpi sge, %11, %12 : vector<16x16xi32>
    %cst_5 = arith.constant 0.000000e+00 : f32
    %cst_6 = arith.constant -1.000000e+30 : f32
    %14 = vector.broadcast %cst_5 : f32 to vector<16x16xf32>
    %15 = vector.broadcast %cst_6 : f32 to vector<16x16xf32>
    %16 = arith.select %13, %14, %15 : vector<16x16xi1>, vector<16x16xf32>
    %c0_7 = arith.constant 0 : index
    %c0_8 = arith.constant 0 : index
    %c0_9 = arith.constant 0 : index
    %17 = vector.load %arg3[%c0_7, %c0_8, %c0_9] : memref<2x1x32xf32, #tpu.memory_space<vmem>>, vector<1x1x32xf32>
    %18 = vector.shape_cast %17 : vector<1x1x32xf32> to vector<1x32xf32>
    %c0_10 = arith.constant 0 : index
    %c0_11 = arith.constant 0 : index
    %c0_12 = arith.constant 0 : index
    %19 = vector.load %arg4[%c0_10, %c0_11, %c0_12] : memref<2x1x32xf32, #tpu.memory_space<vmem>>, vector<1x1x32xf32>
    %20 = vector.shape_cast %19 : vector<1x1x32xf32> to vector<1x32xf32>
    %cst_13 = arith.constant dense<0.000000e+00> : vector<32xf32>
    %21 = vector.multi_reduction <add>, %10, %cst_13 [1] : vector<32x32xf32> to vector<32xf32>
    %22 = vector.shape_cast %21 : vector<32xf32> to vector<32x1xf32>
    %cst_14 = arith.constant 3.200000e+01 : f32
    %23 = vector.broadcast %cst_14 : f32 to vector<32x1xf32>
    %24 = arith.divf %22, %23 : vector<32x1xf32>
    %25 = vector.broadcast %24 : vector<32x1xf32> to vector<32x32xf32>
    %26 = arith.subf %10, %25 : vector<32x32xf32>
    %27 = arith.mulf %26, %26 : vector<32x32xf32>
    %cst_15 = arith.constant dense<0.000000e+00> : vector<32xf32>
    %28 = vector.multi_reduction <add>, %27, %cst_15 [1] : vector<32x32xf32> to vector<32xf32>
    %29 = vector.shape_cast %28 : vector<32xf32> to vector<32x1xf32>
    %cst_16 = arith.constant 3.200000e+01 : f32
    %30 = vector.broadcast %cst_16 : f32 to vector<32x1xf32>
    %31 = arith.divf %29, %30 : vector<32x1xf32>
    %32 = vector.broadcast %24 : vector<32x1xf32> to vector<32x32xf32>
    %33 = arith.subf %10, %32 : vector<32x32xf32>
    %cst_17 = arith.constant 9.99999974E-6 : f32
    %34 = vector.broadcast %cst_17 : f32 to vector<32x1xf32>
    %35 = arith.addf %31, %34 : vector<32x1xf32>
    %36 = math.rsqrt %35 : vector<32x1xf32>
    %37 = vector.broadcast %36 : vector<32x1xf32> to vector<32x32xf32>
    %38 = arith.mulf %33, %37 : vector<32x32xf32>
    %39 = vector.broadcast %18 : vector<1x32xf32> to vector<32x32xf32>
    %40 = arith.mulf %38, %39 : vector<32x32xf32>
    %41 = vector.broadcast %20 : vector<1x32xf32> to vector<32x32xf32>
    %42 = arith.addf %40, %41 : vector<32x32xf32>
    %c0_18 = arith.constant 0 : index
    %c0_19 = arith.constant 0 : index
    %c0_20 = arith.constant 0 : index
    %43 = vector.load %arg5[%c0_18, %c0_19, %c0_20] : memref<2x32x96xf32, #tpu.memory_space<vmem>>, vector<1x32x96xf32>
    %44 = vector.shape_cast %43 : vector<1x32x96xf32> to vector<32x96xf32>
    %cst_21 = arith.constant dense<0.000000e+00> : vector<32x96xf32>
    %45 = tpu.matmul %42, %44, %cst_21 {dimension_numbers = #tpu.dot_dimension_numbers<[1], [0], [0], [1], [0, 0, 1, 1], [], []>} : vector<32x32xf32>, vector<32x96xf32>, vector<32x96xf32> -> vector<32x96xf32>
    %46 = vector.extract_strided_slice %45 {offsets = [0, 0], sizes = [32, 32], strides = [1, 1]} : vector<32x96xf32> to vector<32x32xf32>
    %cst_22 = arith.constant 0.176776692 : f32
    %47 = vector.broadcast %cst_22 : f32 to vector<32x32xf32>
    %48 = arith.mulf %46, %47 : vector<32x32xf32>
    %49 = vector.extract_strided_slice %45 {offsets = [0, 32], sizes = [32, 32], strides = [1, 1]} : vector<32x96xf32> to vector<32x32xf32>
    %50 = vector.extract_strided_slice %45 {offsets = [0, 64], sizes = [32, 32], strides = [1, 1]} : vector<32x96xf32> to vector<32x32xf32>
    %51 = vector.extract_strided_slice %48 {offsets = [0, 0], sizes = [16, 32], strides = [1, 1]} : vector<32x32xf32> to vector<16x32xf32>
    %52 = vector.extract_strided_slice %49 {offsets = [0, 0], sizes = [16, 32], strides = [1, 1]} : vector<32x32xf32> to vector<16x32xf32>
    %53 = vector.extract_strided_slice %50 {offsets = [0, 0], sizes = [16, 32], strides = [1, 1]} : vector<32x32xf32> to vector<16x32xf32>
    %54 = vector.extract_strided_slice %51 {offsets = [0, 0], sizes = [16, 8], strides = [1, 1]} : vector<16x32xf32> to vector<16x8xf32>
    %55 = vector.extract_strided_slice %52 {offsets = [0, 0], sizes = [16, 8], strides = [1, 1]} : vector<16x32xf32> to vector<16x8xf32>
    %cst_23 = arith.constant dense<0.000000e+00> : vector<16x16xf32>
    %56 = tpu.matmul %54, %55, %cst_23 {dimension_numbers = #tpu.dot_dimension_numbers<[1], [1], [0], [0], [0, 0, 1, 0], [], []>} : vector<16x8xf32>, vector<16x8xf32>, vector<16x16xf32> -> vector<16x16xf32>
    %57 = arith.addf %56, %16 : vector<16x16xf32>
    %cst_24 = arith.constant dense<0xFF800000> : vector<16xf32>
    %58 = vector.multi_reduction <maximumf>, %57, %cst_24 [1] : vector<16x16xf32> to vector<16xf32>
    %59 = vector.shape_cast %58 : vector<16xf32> to vector<16x1xf32>
    %60 = vector.broadcast %59 : vector<16x1xf32> to vector<16x16xf32>
    %61 = arith.subf %57, %60 : vector<16x16xf32>
    %62 = vector.extract_strided_slice %51 {offsets = [0, 8], sizes = [16, 8], strides = [1, 1]} : vector<16x32xf32> to vector<16x8xf32>
    %63 = vector.extract_strided_slice %52 {offsets = [0, 8], sizes = [16, 8], strides = [1, 1]} : vector<16x32xf32> to vector<16x8xf32>
    %cst_25 = arith.constant dense<0.000000e+00> : vector<16x16xf32>
    %64 = tpu.matmul %62, %63, %cst_25 {dimension_numbers = #tpu.dot_dimension_numbers<[1], [1], [0], [0], [0, 0, 1, 0], [], []>} : vector<16x8xf32>, vector<16x8xf32>, vector<16x16xf32> -> vector<16x16xf32>
    %65 = arith.addf %64, %16 : vector<16x16xf32>
    %cst_26 = arith.constant dense<0xFF800000> : vector<16xf32>
    %66 = vector.multi_reduction <maximumf>, %65, %cst_26 [1] : vector<16x16xf32> to vector<16xf32>
    %67 = vector.shape_cast %66 : vector<16xf32> to vector<16x1xf32>
    %68 = vector.broadcast %67 : vector<16x1xf32> to vector<16x16xf32>
    %69 = arith.subf %65, %68 : vector<16x16xf32>
    %70 = vector.extract_strided_slice %51 {offsets = [0, 16], sizes = [16, 8], strides = [1, 1]} : vector<16x32xf32> to vector<16x8xf32>
    %71 = vector.extract_strided_slice %52 {offsets = [0, 16], sizes = [16, 8], strides = [1, 1]} : vector<16x32xf32> to vector<16x8xf32>
    %cst_27 = arith.constant dense<0.000000e+00> : vector<16x16xf32>
    %72 = tpu.matmul %70, %71, %cst_27 {dimension_numbers = #tpu.dot_dimension_numbers<[1], [1], [0], [0], [0, 0, 1, 0], [], []>} : vector<16x8xf32>, vector<16x8xf32>, vector<16x16xf32> -> vector<16x16xf32>
    %73 = arith.addf %72, %16 : vector<16x16xf32>
    %cst_28 = arith.constant dense<0xFF800000> : vector<16xf32>
    %74 = vector.multi_reduction <maximumf>, %73, %cst_28 [1] : vector<16x16xf32> to vector<16xf32>
    %75 = vector.shape_cast %74 : vector<16xf32> to vector<16x1xf32>
    %76 = vector.broadcast %75 : vector<16x1xf32> to vector<16x16xf32>
    %77 = arith.subf %73, %76 : vector<16x16xf32>
    %78 = vector.extract_strided_slice %51 {offsets = [0, 24], sizes = [16, 8], strides = [1, 1]} : vector<16x32xf32> to vector<16x8xf32>
    %79 = vector.extract_strided_slice %52 {offsets = [0, 24], sizes = [16, 8], strides = [1, 1]} : vector<16x32xf32> to vector<16x8xf32>
    %cst_29 = arith.constant dense<0.000000e+00> : vector<16x16xf32>
    %80 = tpu.matmul %78, %79, %cst_29 {dimension_numbers = #tpu.dot_dimension_numbers<[1], [1], [0], [0], [0, 0, 1, 0], [], []>} : vector<16x8xf32>, vector<16x8xf32>, vector<16x16xf32> -> vector<16x16xf32>
    %81 = arith.addf %80, %16 : vector<16x16xf32>
    %cst_30 = arith.constant dense<0xFF800000> : vector<16xf32>
    %82 = vector.multi_reduction <maximumf>, %81, %cst_30 [1] : vector<16x16xf32> to vector<16xf32>
    %83 = vector.shape_cast %82 : vector<16xf32> to vector<16x1xf32>
    %84 = vector.broadcast %83 : vector<16x1xf32> to vector<16x16xf32>
    %85 = arith.subf %81, %84 : vector<16x16xf32>
    %86 = tpu.concatenate %61, %69, %77, %85 in 1 : vector<16x16xf32>, vector<16x16xf32>, vector<16x16xf32>, vector<16x16xf32> -> vector<16x64xf32>
    %87 = math.exp %86 : vector<16x64xf32>
    %88 = vector.extract_strided_slice %87 {offsets = [0, 0], sizes = [16, 16], strides = [1, 1]} : vector<16x64xf32> to vector<16x16xf32>
    %cst_31 = arith.constant dense<0.000000e+00> : vector<16xf32>
    %89 = vector.multi_reduction <add>, %88, %cst_31 [1] : vector<16x16xf32> to vector<16xf32>
    %90 = vector.shape_cast %89 : vector<16xf32> to vector<16x1xf32>
    %91 = tpu.reciprocal %90 {approx = true} : vector<16x1xf32> -> vector<16x1xf32>
    %92 = vector.broadcast %91 : vector<16x1xf32> to vector<16x16xf32>
    %93 = arith.mulf %88, %92 : vector<16x16xf32>
    %94 = vector.extract_strided_slice %53 {offsets = [0, 0], sizes = [16, 8], strides = [1, 1]} : vector<16x32xf32> to vector<16x8xf32>
    %cst_32 = arith.constant dense<0.000000e+00> : vector<16x8xf32>
    %95 = tpu.matmul %93, %94, %cst_32 {dimension_numbers = #tpu.dot_dimension_numbers<[1], [0], [0], [1], [0, 0, 1, 1], [], []>} : vector<16x16xf32>, vector<16x8xf32>, vector<16x8xf32> -> vector<16x8xf32>
    %96 = vector.extract_strided_slice %87 {offsets = [0, 16], sizes = [16, 16], strides = [1, 1]} : vector<16x64xf32> to vector<16x16xf32>
    %cst_33 = arith.constant dense<0.000000e+00> : vector<16xf32>
    %97 = vector.multi_reduction <add>, %96, %cst_33 [1] : vector<16x16xf32> to vector<16xf32>
    %98 = vector.shape_cast %97 : vector<16xf32> to vector<16x1xf32>
    %99 = tpu.reciprocal %98 {approx = true} : vector<16x1xf32> -> vector<16x1xf32>
    %100 = vector.broadcast %99 : vector<16x1xf32> to vector<16x16xf32>
    %101 = arith.mulf %96, %100 : vector<16x16xf32>
    %102 = vector.extract_strided_slice %53 {offsets = [0, 8], sizes = [16, 8], strides = [1, 1]} : vector<16x32xf32> to vector<16x8xf32>
    %cst_34 = arith.constant dense<0.000000e+00> : vector<16x8xf32>
    %103 = tpu.matmul %101, %102, %cst_34 {dimension_numbers = #tpu.dot_dimension_numbers<[1], [0], [0], [1], [0, 0, 1, 1], [], []>} : vector<16x16xf32>, vector<16x8xf32>, vector<16x8xf32> -> vector<16x8xf32>
    %104 = vector.extract_strided_slice %87 {offsets = [0, 32], sizes = [16, 16], strides = [1, 1]} : vector<16x64xf32> to vector<16x16xf32>
    %cst_35 = arith.constant dense<0.000000e+00> : vector<16xf32>
    %105 = vector.multi_reduction <add>, %104, %cst_35 [1] : vector<16x16xf32> to vector<16xf32>
    %106 = vector.shape_cast %105 : vector<16xf32> to vector<16x1xf32>
    %107 = tpu.reciprocal %106 {approx = true} : vector<16x1xf32> -> vector<16x1xf32>
    %108 = vector.broadcast %107 : vector<16x1xf32> to vector<16x16xf32>
    %109 = arith.mulf %104, %108 : vector<16x16xf32>
    %110 = vector.extract_strided_slice %53 {offsets = [0, 16], sizes = [16, 8], strides = [1, 1]} : vector<16x32xf32> to vector<16x8xf32>
    %cst_36 = arith.constant dense<0.000000e+00> : vector<16x8xf32>
    %111 = tpu.matmul %109, %110, %cst_36 {dimension_numbers = #tpu.dot_dimension_numbers<[1], [0], [0], [1], [0, 0, 1, 1], [], []>} : vector<16x16xf32>, vector<16x8xf32>, vector<16x8xf32> -> vector<16x8xf32>
    %112 = vector.extract_strided_slice %87 {offsets = [0, 48], sizes = [16, 16], strides = [1, 1]} : vector<16x64xf32> to vector<16x16xf32>
    %cst_37 = arith.constant dense<0.000000e+00> : vector<16xf32>
    %113 = vector.multi_reduction <add>, %112, %cst_37 [1] : vector<16x16xf32> to vector<16xf32>
    %114 = vector.shape_cast %113 : vector<16xf32> to vector<16x1xf32>
    %115 = tpu.reciprocal %114 {approx = true} : vector<16x1xf32> -> vector<16x1xf32>
    %116 = vector.broadcast %115 : vector<16x1xf32> to vector<16x16xf32>
    %117 = arith.mulf %112, %116 : vector<16x16xf32>
    %118 = vector.extract_strided_slice %53 {offsets = [0, 24], sizes = [16, 8], strides = [1, 1]} : vector<16x32xf32> to vector<16x8xf32>
    %cst_38 = arith.constant dense<0.000000e+00> : vector<16x8xf32>
    %119 = tpu.matmul %117, %118, %cst_38 {dimension_numbers = #tpu.dot_dimension_numbers<[1], [0], [0], [1], [0, 0, 1, 1], [], []>} : vector<16x16xf32>, vector<16x8xf32>, vector<16x8xf32> -> vector<16x8xf32>
    %120 = tpu.concatenate %95, %103, %111, %119 in 1 : vector<16x8xf32>, vector<16x8xf32>, vector<16x8xf32>, vector<16x8xf32> -> vector<16x32xf32>
    %121 = vector.extract_strided_slice %48 {offsets = [16, 0], sizes = [16, 32], strides = [1, 1]} : vector<32x32xf32> to vector<16x32xf32>
    %122 = vector.extract_strided_slice %49 {offsets = [16, 0], sizes = [16, 32], strides = [1, 1]} : vector<32x32xf32> to vector<16x32xf32>
    %123 = vector.extract_strided_slice %50 {offsets = [16, 0], sizes = [16, 32], strides = [1, 1]} : vector<32x32xf32> to vector<16x32xf32>
    %124 = vector.extract_strided_slice %121 {offsets = [0, 0], sizes = [16, 8], strides = [1, 1]} : vector<16x32xf32> to vector<16x8xf32>
    %125 = vector.extract_strided_slice %122 {offsets = [0, 0], sizes = [16, 8], strides = [1, 1]} : vector<16x32xf32> to vector<16x8xf32>
    %cst_39 = arith.constant dense<0.000000e+00> : vector<16x16xf32>
    %126 = tpu.matmul %124, %125, %cst_39 {dimension_numbers = #tpu.dot_dimension_numbers<[1], [1], [0], [0], [0, 0, 1, 0], [], []>} : vector<16x8xf32>, vector<16x8xf32>, vector<16x16xf32> -> vector<16x16xf32>
    %127 = arith.addf %126, %16 : vector<16x16xf32>
    %cst_40 = arith.constant dense<0xFF800000> : vector<16xf32>
    %128 = vector.multi_reduction <maximumf>, %127, %cst_40 [1] : vector<16x16xf32> to vector<16xf32>
    %129 = vector.shape_cast %128 : vector<16xf32> to vector<16x1xf32>
    %130 = vector.broadcast %129 : vector<16x1xf32> to vector<16x16xf32>
    %131 = arith.subf %127, %130 : vector<16x16xf32>
    %132 = vector.extract_strided_slice %121 {offsets = [0, 8], sizes = [16, 8], strides = [1, 1]} : vector<16x32xf32> to vector<16x8xf32>
    %133 = vector.extract_strided_slice %122 {offsets = [0, 8], sizes = [16, 8], strides = [1, 1]} : vector<16x32xf32> to vector<16x8xf32>
    %cst_41 = arith.constant dense<0.000000e+00> : vector<16x16xf32>
    %134 = tpu.matmul %132, %133, %cst_41 {dimension_numbers = #tpu.dot_dimension_numbers<[1], [1], [0], [0], [0, 0, 1, 0], [], []>} : vector<16x8xf32>, vector<16x8xf32>, vector<16x16xf32> -> vector<16x16xf32>
    %135 = arith.addf %134, %16 : vector<16x16xf32>
    %cst_42 = arith.constant dense<0xFF800000> : vector<16xf32>
    %136 = vector.multi_reduction <maximumf>, %135, %cst_42 [1] : vector<16x16xf32> to vector<16xf32>
    %137 = vector.shape_cast %136 : vector<16xf32> to vector<16x1xf32>
    %138 = vector.broadcast %137 : vector<16x1xf32> to vector<16x16xf32>
    %139 = arith.subf %135, %138 : vector<16x16xf32>
    %140 = vector.extract_strided_slice %121 {offsets = [0, 16], sizes = [16, 8], strides = [1, 1]} : vector<16x32xf32> to vector<16x8xf32>
    %141 = vector.extract_strided_slice %122 {offsets = [0, 16], sizes = [16, 8], strides = [1, 1]} : vector<16x32xf32> to vector<16x8xf32>
    %cst_43 = arith.constant dense<0.000000e+00> : vector<16x16xf32>
    %142 = tpu.matmul %140, %141, %cst_43 {dimension_numbers = #tpu.dot_dimension_numbers<[1], [1], [0], [0], [0, 0, 1, 0], [], []>} : vector<16x8xf32>, vector<16x8xf32>, vector<16x16xf32> -> vector<16x16xf32>
    %143 = arith.addf %142, %16 : vector<16x16xf32>
    %cst_44 = arith.constant dense<0xFF800000> : vector<16xf32>
    %144 = vector.multi_reduction <maximumf>, %143, %cst_44 [1] : vector<16x16xf32> to vector<16xf32>
    %145 = vector.shape_cast %144 : vector<16xf32> to vector<16x1xf32>
    %146 = vector.broadcast %145 : vector<16x1xf32> to vector<16x16xf32>
    %147 = arith.subf %143, %146 : vector<16x16xf32>
    %148 = vector.extract_strided_slice %121 {offsets = [0, 24], sizes = [16, 8], strides = [1, 1]} : vector<16x32xf32> to vector<16x8xf32>
    %149 = vector.extract_strided_slice %122 {offsets = [0, 24], sizes = [16, 8], strides = [1, 1]} : vector<16x32xf32> to vector<16x8xf32>
    %cst_45 = arith.constant dense<0.000000e+00> : vector<16x16xf32>
    %150 = tpu.matmul %148, %149, %cst_45 {dimension_numbers = #tpu.dot_dimension_numbers<[1], [1], [0], [0], [0, 0, 1, 0], [], []>} : vector<16x8xf32>, vector<16x8xf32>, vector<16x16xf32> -> vector<16x16xf32>
    %151 = arith.addf %150, %16 : vector<16x16xf32>
    %cst_46 = arith.constant dense<0xFF800000> : vector<16xf32>
    %152 = vector.multi_reduction <maximumf>, %151, %cst_46 [1] : vector<16x16xf32> to vector<16xf32>
    %153 = vector.shape_cast %152 : vector<16xf32> to vector<16x1xf32>
    %154 = vector.broadcast %153 : vector<16x1xf32> to vector<16x16xf32>
    %155 = arith.subf %151, %154 : vector<16x16xf32>
    %156 = tpu.concatenate %131, %139, %147, %155 in 1 : vector<16x16xf32>, vector<16x16xf32>, vector<16x16xf32>, vector<16x16xf32> -> vector<16x64xf32>
    %157 = math.exp %156 : vector<16x64xf32>
    %158 = vector.extract_strided_slice %157 {offsets = [0, 0], sizes = [16, 16], strides = [1, 1]} : vector<16x64xf32> to vector<16x16xf32>
    %cst_47 = arith.constant dense<0.000000e+00> : vector<16xf32>
    %159 = vector.multi_reduction <add>, %158, %cst_47 [1] : vector<16x16xf32> to vector<16xf32>
    %160 = vector.shape_cast %159 : vector<16xf32> to vector<16x1xf32>
    %161 = tpu.reciprocal %160 {approx = true} : vector<16x1xf32> -> vector<16x1xf32>
    %162 = vector.broadcast %161 : vector<16x1xf32> to vector<16x16xf32>
    %163 = arith.mulf %158, %162 : vector<16x16xf32>
    %164 = vector.extract_strided_slice %123 {offsets = [0, 0], sizes = [16, 8], strides = [1, 1]} : vector<16x32xf32> to vector<16x8xf32>
    %cst_48 = arith.constant dense<0.000000e+00> : vector<16x8xf32>
    %165 = tpu.matmul %163, %164, %cst_48 {dimension_numbers = #tpu.dot_dimension_numbers<[1], [0], [0], [1], [0, 0, 1, 1], [], []>} : vector<16x16xf32>, vector<16x8xf32>, vector<16x8xf32> -> vector<16x8xf32>
    %166 = vector.extract_strided_slice %157 {offsets = [0, 16], sizes = [16, 16], strides = [1, 1]} : vector<16x64xf32> to vector<16x16xf32>
    %cst_49 = arith.constant dense<0.000000e+00> : vector<16xf32>
    %167 = vector.multi_reduction <add>, %166, %cst_49 [1] : vector<16x16xf32> to vector<16xf32>
    %168 = vector.shape_cast %167 : vector<16xf32> to vector<16x1xf32>
    %169 = tpu.reciprocal %168 {approx = true} : vector<16x1xf32> -> vector<16x1xf32>
    %170 = vector.broadcast %169 : vector<16x1xf32> to vector<16x16xf32>
    %171 = arith.mulf %166, %170 : vector<16x16xf32>
    %172 = vector.extract_strided_slice %123 {offsets = [0, 8], sizes = [16, 8], strides = [1, 1]} : vector<16x32xf32> to vector<16x8xf32>
    %cst_50 = arith.constant dense<0.000000e+00> : vector<16x8xf32>
    %173 = tpu.matmul %171, %172, %cst_50 {dimension_numbers = #tpu.dot_dimension_numbers<[1], [0], [0], [1], [0, 0, 1, 1], [], []>} : vector<16x16xf32>, vector<16x8xf32>, vector<16x8xf32> -> vector<16x8xf32>
    %174 = vector.extract_strided_slice %157 {offsets = [0, 32], sizes = [16, 16], strides = [1, 1]} : vector<16x64xf32> to vector<16x16xf32>
    %cst_51 = arith.constant dense<0.000000e+00> : vector<16xf32>
    %175 = vector.multi_reduction <add>, %174, %cst_51 [1] : vector<16x16xf32> to vector<16xf32>
    %176 = vector.shape_cast %175 : vector<16xf32> to vector<16x1xf32>
    %177 = tpu.reciprocal %176 {approx = true} : vector<16x1xf32> -> vector<16x1xf32>
    %178 = vector.broadcast %177 : vector<16x1xf32> to vector<16x16xf32>
    %179 = arith.mulf %174, %178 : vector<16x16xf32>
    %180 = vector.extract_strided_slice %123 {offsets = [0, 16], sizes = [16, 8], strides = [1, 1]} : vector<16x32xf32> to vector<16x8xf32>
    %cst_52 = arith.constant dense<0.000000e+00> : vector<16x8xf32>
    %181 = tpu.matmul %179, %180, %cst_52 {dimension_numbers = #tpu.dot_dimension_numbers<[1], [0], [0], [1], [0, 0, 1, 1], [], []>} : vector<16x16xf32>, vector<16x8xf32>, vector<16x8xf32> -> vector<16x8xf32>
    %182 = vector.extract_strided_slice %157 {offsets = [0, 48], sizes = [16, 16], strides = [1, 1]} : vector<16x64xf32> to vector<16x16xf32>
    %cst_53 = arith.constant dense<0.000000e+00> : vector<16xf32>
    %183 = vector.multi_reduction <add>, %182, %cst_53 [1] : vector<16x16xf32> to vector<16xf32>
    %184 = vector.shape_cast %183 : vector<16xf32> to vector<16x1xf32>
    %185 = tpu.reciprocal %184 {approx = true} : vector<16x1xf32> -> vector<16x1xf32>
    %186 = vector.broadcast %185 : vector<16x1xf32> to vector<16x16xf32>
    %187 = arith.mulf %182, %186 : vector<16x16xf32>
    %188 = vector.extract_strided_slice %123 {offsets = [0, 24], sizes = [16, 8], strides = [1, 1]} : vector<16x32xf32> to vector<16x8xf32>
    %cst_54 = arith.constant dense<0.000000e+00> : vector<16x8xf32>
    %189 = tpu.matmul %187, %188, %cst_54 {dimension_numbers = #tpu.dot_dimension_numbers<[1], [0], [0], [1], [0, 0, 1, 1], [], []>} : vector<16x16xf32>, vector<16x8xf32>, vector<16x8xf32> -> vector<16x8xf32>
    %190 = tpu.concatenate %165, %173, %181, %189 in 1 : vector<16x8xf32>, vector<16x8xf32>, vector<16x8xf32>, vector<16x8xf32> -> vector<16x32xf32>
    %191 = tpu.concatenate %120, %190 in 0 : vector<16x32xf32>, vector<16x32xf32> -> vector<32x32xf32>
    %c0_55 = arith.constant 0 : index
    %c0_56 = arith.constant 0 : index
    %c0_57 = arith.constant 0 : index
    %192 = vector.load %arg6[%c0_55, %c0_56, %c0_57] : memref<2x32x32xf32, #tpu.memory_space<vmem>>, vector<1x32x32xf32>
    %193 = vector.shape_cast %192 : vector<1x32x32xf32> to vector<32x32xf32>
    %cst_58 = arith.constant dense<0.000000e+00> : vector<32x32xf32>
    %194 = tpu.matmul %191, %193, %cst_58 {dimension_numbers = #tpu.dot_dimension_numbers<[1], [0], [0], [1], [0, 0, 1, 1], [], []>} : vector<32x32xf32>, vector<32x32xf32>, vector<32x32xf32> -> vector<32x32xf32>
    %195 = arith.addf %10, %194 : vector<32x32xf32>
    %c0_59 = arith.constant 0 : index
    %c0_60 = arith.constant 0 : index
    %c0_61 = arith.constant 0 : index
    %196 = vector.load %arg7[%c0_59, %c0_60, %c0_61] : memref<2x1x32xf32, #tpu.memory_space<vmem>>, vector<1x1x32xf32>
    %197 = vector.shape_cast %196 : vector<1x1x32xf32> to vector<1x32xf32>
    %198 = vector.broadcast %197 : vector<1x32xf32> to vector<32x32xf32>
    %199 = arith.addf %195, %198 : vector<32x32xf32>
    %c0_62 = arith.constant 0 : index
    %c0_63 = arith.constant 0 : index
    %c0_64 = arith.constant 0 : index
    %200 = vector.load %arg8[%c0_62, %c0_63, %c0_64] : memref<2x1x32xf32, #tpu.memory_space<vmem>>, vector<1x1x32xf32>
    %201 = vector.shape_cast %200 : vector<1x1x32xf32> to vector<1x32xf32>
    %c0_65 = arith.constant 0 : index
    %c0_66 = arith.constant 0 : index
    %c0_67 = arith.constant 0 : index
    %202 = vector.load %arg9[%c0_65, %c0_66, %c0_67] : memref<2x1x32xf32, #tpu.memory_space<vmem>>, vector<1x1x32xf32>
    %203 = vector.shape_cast %202 : vector<1x1x32xf32> to vector<1x32xf32>
    %cst_68 = arith.constant dense<0.000000e+00> : vector<32xf32>
    %204 = vector.multi_reduction <add>, %199, %cst_68 [1] : vector<32x32xf32> to vector<32xf32>
    %205 = vector.shape_cast %204 : vector<32xf32> to vector<32x1xf32>
    %cst_69 = arith.constant 3.200000e+01 : f32
    %206 = vector.broadcast %cst_69 : f32 to vector<32x1xf32>
    %207 = arith.divf %205, %206 : vector<32x1xf32>
    %208 = vector.broadcast %207 : vector<32x1xf32> to vector<32x32xf32>
    %209 = arith.subf %199, %208 : vector<32x32xf32>
    %210 = arith.mulf %209, %209 : vector<32x32xf32>
    %cst_70 = arith.constant dense<0.000000e+00> : vector<32xf32>
    %211 = vector.multi_reduction <add>, %210, %cst_70 [1] : vector<32x32xf32> to vector<32xf32>
    %212 = vector.shape_cast %211 : vector<32xf32> to vector<32x1xf32>
    %cst_71 = arith.constant 3.200000e+01 : f32
    %213 = vector.broadcast %cst_71 : f32 to vector<32x1xf32>
    %214 = arith.divf %212, %213 : vector<32x1xf32>
    %215 = vector.broadcast %207 : vector<32x1xf32> to vector<32x32xf32>
    %216 = arith.subf %199, %215 : vector<32x32xf32>
    %cst_72 = arith.constant 9.99999974E-6 : f32
    %217 = vector.broadcast %cst_72 : f32 to vector<32x1xf32>
    %218 = arith.addf %214, %217 : vector<32x1xf32>
    %219 = math.rsqrt %218 : vector<32x1xf32>
    %220 = vector.broadcast %219 : vector<32x1xf32> to vector<32x32xf32>
    %221 = arith.mulf %216, %220 : vector<32x32xf32>
    %222 = vector.broadcast %201 : vector<1x32xf32> to vector<32x32xf32>
    %223 = arith.mulf %221, %222 : vector<32x32xf32>
    %224 = vector.broadcast %203 : vector<1x32xf32> to vector<32x32xf32>
    %225 = arith.addf %223, %224 : vector<32x32xf32>
    %c0_73 = arith.constant 0 : index
    %c0_74 = arith.constant 0 : index
    %c0_75 = arith.constant 0 : index
    %226 = vector.load %arg10[%c0_73, %c0_74, %c0_75] : memref<2x32x128xf32, #tpu.memory_space<vmem>>, vector<1x32x128xf32>
    %227 = vector.shape_cast %226 : vector<1x32x128xf32> to vector<32x128xf32>
    %cst_76 = arith.constant dense<0.000000e+00> : vector<32x128xf32>
    %228 = tpu.matmul %225, %227, %cst_76 {dimension_numbers = #tpu.dot_dimension_numbers<[1], [0], [0], [1], [0, 0, 1, 1], [], []>} : vector<32x32xf32>, vector<32x128xf32>, vector<32x128xf32> -> vector<32x128xf32>
    %c0_77 = arith.constant 0 : index
    %c0_78 = arith.constant 0 : index
    %c0_79 = arith.constant 0 : index
    %229 = vector.load %arg11[%c0_77, %c0_78, %c0_79] : memref<2x1x128xf32, #tpu.memory_space<vmem>>, vector<1x1x128xf32>
    %230 = vector.shape_cast %229 : vector<1x1x128xf32> to vector<1x128xf32>
    %231 = vector.broadcast %230 : vector<1x128xf32> to vector<32x128xf32>
    %232 = arith.addf %228, %231 : vector<32x128xf32>
    %cst_80 = arith.constant 0.000000e+00 : f32
    %233 = vector.broadcast %cst_80 : f32 to vector<32x128xf32>
    %234 = arith.maximumf %232, %233 : vector<32x128xf32>
    %c0_81 = arith.constant 0 : index
    %c0_82 = arith.constant 0 : index
    %c0_83 = arith.constant 0 : index
    %235 = vector.load %arg12[%c0_81, %c0_82, %c0_83] : memref<2x128x32xf32, #tpu.memory_space<vmem>>, vector<1x128x32xf32>
    %236 = vector.shape_cast %235 : vector<1x128x32xf32> to vector<128x32xf32>
    %cst_84 = arith.constant dense<0.000000e+00> : vector<32x32xf32>
    %237 = tpu.matmul %234, %236, %cst_84 {dimension_numbers = #tpu.dot_dimension_numbers<[1], [0], [0], [1], [0, 0, 1, 1], [], []>} : vector<32x128xf32>, vector<128x32xf32>, vector<32x32xf32> -> vector<32x32xf32>
    %238 = arith.addf %199, %237 : vector<32x32xf32>
    %c0_85 = arith.constant 0 : index
    %c0_86 = arith.constant 0 : index
    %c0_87 = arith.constant 0 : index
    %239 = vector.load %arg13[%c0_85, %c0_86, %c0_87] : memref<2x1x32xf32, #tpu.memory_space<vmem>>, vector<1x1x32xf32>
    %240 = vector.shape_cast %239 : vector<1x1x32xf32> to vector<1x32xf32>
    %241 = vector.broadcast %240 : vector<1x32xf32> to vector<32x32xf32>
    %242 = arith.addf %238, %241 : vector<32x32xf32>
    %c1 = arith.constant 1 : index
    %c0_88 = arith.constant 0 : index
    %c0_89 = arith.constant 0 : index
    %243 = vector.load %arg3[%c1, %c0_88, %c0_89] : memref<2x1x32xf32, #tpu.memory_space<vmem>>, vector<1x1x32xf32>
    %244 = vector.shape_cast %243 : vector<1x1x32xf32> to vector<1x32xf32>
    %c1_90 = arith.constant 1 : index
    %c0_91 = arith.constant 0 : index
    %c0_92 = arith.constant 0 : index
    %245 = vector.load %arg4[%c1_90, %c0_91, %c0_92] : memref<2x1x32xf32, #tpu.memory_space<vmem>>, vector<1x1x32xf32>
    %246 = vector.shape_cast %245 : vector<1x1x32xf32> to vector<1x32xf32>
    %cst_93 = arith.constant dense<0.000000e+00> : vector<32xf32>
    %247 = vector.multi_reduction <add>, %242, %cst_93 [1] : vector<32x32xf32> to vector<32xf32>
    %248 = vector.shape_cast %247 : vector<32xf32> to vector<32x1xf32>
    %cst_94 = arith.constant 3.200000e+01 : f32
    %249 = vector.broadcast %cst_94 : f32 to vector<32x1xf32>
    %250 = arith.divf %248, %249 : vector<32x1xf32>
    %251 = vector.broadcast %250 : vector<32x1xf32> to vector<32x32xf32>
    %252 = arith.subf %242, %251 : vector<32x32xf32>
    %253 = arith.mulf %252, %252 : vector<32x32xf32>
    %cst_95 = arith.constant dense<0.000000e+00> : vector<32xf32>
    %254 = vector.multi_reduction <add>, %253, %cst_95 [1] : vector<32x32xf32> to vector<32xf32>
    %255 = vector.shape_cast %254 : vector<32xf32> to vector<32x1xf32>
    %cst_96 = arith.constant 3.200000e+01 : f32
    %256 = vector.broadcast %cst_96 : f32 to vector<32x1xf32>
    %257 = arith.divf %255, %256 : vector<32x1xf32>
    %258 = vector.broadcast %250 : vector<32x1xf32> to vector<32x32xf32>
    %259 = arith.subf %242, %258 : vector<32x32xf32>
    %cst_97 = arith.constant 9.99999974E-6 : f32
    %260 = vector.broadcast %cst_97 : f32 to vector<32x1xf32>
    %261 = arith.addf %257, %260 : vector<32x1xf32>
    %262 = math.rsqrt %261 : vector<32x1xf32>
    %263 = vector.broadcast %262 : vector<32x1xf32> to vector<32x32xf32>
    %264 = arith.mulf %259, %263 : vector<32x32xf32>
    %265 = vector.broadcast %244 : vector<1x32xf32> to vector<32x32xf32>
    %266 = arith.mulf %264, %265 : vector<32x32xf32>
    %267 = vector.broadcast %246 : vector<1x32xf32> to vector<32x32xf32>
    %268 = arith.addf %266, %267 : vector<32x32xf32>
    %c1_98 = arith.constant 1 : index
    %c0_99 = arith.constant 0 : index
    %c0_100 = arith.constant 0 : index
    %269 = vector.load %arg5[%c1_98, %c0_99, %c0_100] : memref<2x32x96xf32, #tpu.memory_space<vmem>>, vector<1x32x96xf32>
    %270 = vector.shape_cast %269 : vector<1x32x96xf32> to vector<32x96xf32>
    %cst_101 = arith.constant dense<0.000000e+00> : vector<32x96xf32>
    %271 = tpu.matmul %268, %270, %cst_101 {dimension_numbers = #tpu.dot_dimension_numbers<[1], [0], [0], [1], [0, 0, 1, 1], [], []>} : vector<32x32xf32>, vector<32x96xf32>, vector<32x96xf32> -> vector<32x96xf32>
    %272 = vector.extract_strided_slice %271 {offsets = [0, 0], sizes = [32, 32], strides = [1, 1]} : vector<32x96xf32> to vector<32x32xf32>
    %cst_102 = arith.constant 0.176776692 : f32
    %273 = vector.broadcast %cst_102 : f32 to vector<32x32xf32>
    %274 = arith.mulf %272, %273 : vector<32x32xf32>
    %275 = vector.extract_strided_slice %271 {offsets = [0, 32], sizes = [32, 32], strides = [1, 1]} : vector<32x96xf32> to vector<32x32xf32>
    %276 = vector.extract_strided_slice %271 {offsets = [0, 64], sizes = [32, 32], strides = [1, 1]} : vector<32x96xf32> to vector<32x32xf32>
    %277 = vector.extract_strided_slice %274 {offsets = [0, 0], sizes = [16, 32], strides = [1, 1]} : vector<32x32xf32> to vector<16x32xf32>
    %278 = vector.extract_strided_slice %275 {offsets = [0, 0], sizes = [16, 32], strides = [1, 1]} : vector<32x32xf32> to vector<16x32xf32>
    %279 = vector.extract_strided_slice %276 {offsets = [0, 0], sizes = [16, 32], strides = [1, 1]} : vector<32x32xf32> to vector<16x32xf32>
    %280 = vector.extract_strided_slice %277 {offsets = [0, 0], sizes = [16, 8], strides = [1, 1]} : vector<16x32xf32> to vector<16x8xf32>
    %281 = vector.extract_strided_slice %278 {offsets = [0, 0], sizes = [16, 8], strides = [1, 1]} : vector<16x32xf32> to vector<16x8xf32>
    %cst_103 = arith.constant dense<0.000000e+00> : vector<16x16xf32>
    %282 = tpu.matmul %280, %281, %cst_103 {dimension_numbers = #tpu.dot_dimension_numbers<[1], [1], [0], [0], [0, 0, 1, 0], [], []>} : vector<16x8xf32>, vector<16x8xf32>, vector<16x16xf32> -> vector<16x16xf32>
    %283 = arith.addf %282, %16 : vector<16x16xf32>
    %cst_104 = arith.constant dense<0xFF800000> : vector<16xf32>
    %284 = vector.multi_reduction <maximumf>, %283, %cst_104 [1] : vector<16x16xf32> to vector<16xf32>
    %285 = vector.shape_cast %284 : vector<16xf32> to vector<16x1xf32>
    %286 = vector.broadcast %285 : vector<16x1xf32> to vector<16x16xf32>
    %287 = arith.subf %283, %286 : vector<16x16xf32>
    %288 = vector.extract_strided_slice %277 {offsets = [0, 8], sizes = [16, 8], strides = [1, 1]} : vector<16x32xf32> to vector<16x8xf32>
    %289 = vector.extract_strided_slice %278 {offsets = [0, 8], sizes = [16, 8], strides = [1, 1]} : vector<16x32xf32> to vector<16x8xf32>
    %cst_105 = arith.constant dense<0.000000e+00> : vector<16x16xf32>
    %290 = tpu.matmul %288, %289, %cst_105 {dimension_numbers = #tpu.dot_dimension_numbers<[1], [1], [0], [0], [0, 0, 1, 0], [], []>} : vector<16x8xf32>, vector<16x8xf32>, vector<16x16xf32> -> vector<16x16xf32>
    %291 = arith.addf %290, %16 : vector<16x16xf32>
    %cst_106 = arith.constant dense<0xFF800000> : vector<16xf32>
    %292 = vector.multi_reduction <maximumf>, %291, %cst_106 [1] : vector<16x16xf32> to vector<16xf32>
    %293 = vector.shape_cast %292 : vector<16xf32> to vector<16x1xf32>
    %294 = vector.broadcast %293 : vector<16x1xf32> to vector<16x16xf32>
    %295 = arith.subf %291, %294 : vector<16x16xf32>
    %296 = vector.extract_strided_slice %277 {offsets = [0, 16], sizes = [16, 8], strides = [1, 1]} : vector<16x32xf32> to vector<16x8xf32>
    %297 = vector.extract_strided_slice %278 {offsets = [0, 16], sizes = [16, 8], strides = [1, 1]} : vector<16x32xf32> to vector<16x8xf32>
    %cst_107 = arith.constant dense<0.000000e+00> : vector<16x16xf32>
    %298 = tpu.matmul %296, %297, %cst_107 {dimension_numbers = #tpu.dot_dimension_numbers<[1], [1], [0], [0], [0, 0, 1, 0], [], []>} : vector<16x8xf32>, vector<16x8xf32>, vector<16x16xf32> -> vector<16x16xf32>
    %299 = arith.addf %298, %16 : vector<16x16xf32>
    %cst_108 = arith.constant dense<0xFF800000> : vector<16xf32>
    %300 = vector.multi_reduction <maximumf>, %299, %cst_108 [1] : vector<16x16xf32> to vector<16xf32>
    %301 = vector.shape_cast %300 : vector<16xf32> to vector<16x1xf32>
    %302 = vector.broadcast %301 : vector<16x1xf32> to vector<16x16xf32>
    %303 = arith.subf %299, %302 : vector<16x16xf32>
    %304 = vector.extract_strided_slice %277 {offsets = [0, 24], sizes = [16, 8], strides = [1, 1]} : vector<16x32xf32> to vector<16x8xf32>
    %305 = vector.extract_strided_slice %278 {offsets = [0, 24], sizes = [16, 8], strides = [1, 1]} : vector<16x32xf32> to vector<16x8xf32>
    %cst_109 = arith.constant dense<0.000000e+00> : vector<16x16xf32>
    %306 = tpu.matmul %304, %305, %cst_109 {dimension_numbers = #tpu.dot_dimension_numbers<[1], [1], [0], [0], [0, 0, 1, 0], [], []>} : vector<16x8xf32>, vector<16x8xf32>, vector<16x16xf32> -> vector<16x16xf32>
    %307 = arith.addf %306, %16 : vector<16x16xf32>
    %cst_110 = arith.constant dense<0xFF800000> : vector<16xf32>
    %308 = vector.multi_reduction <maximumf>, %307, %cst_110 [1] : vector<16x16xf32> to vector<16xf32>
    %309 = vector.shape_cast %308 : vector<16xf32> to vector<16x1xf32>
    %310 = vector.broadcast %309 : vector<16x1xf32> to vector<16x16xf32>
    %311 = arith.subf %307, %310 : vector<16x16xf32>
    %312 = tpu.concatenate %287, %295, %303, %311 in 1 : vector<16x16xf32>, vector<16x16xf32>, vector<16x16xf32>, vector<16x16xf32> -> vector<16x64xf32>
    %313 = math.exp %312 : vector<16x64xf32>
    %314 = vector.extract_strided_slice %313 {offsets = [0, 0], sizes = [16, 16], strides = [1, 1]} : vector<16x64xf32> to vector<16x16xf32>
    %cst_111 = arith.constant dense<0.000000e+00> : vector<16xf32>
    %315 = vector.multi_reduction <add>, %314, %cst_111 [1] : vector<16x16xf32> to vector<16xf32>
    %316 = vector.shape_cast %315 : vector<16xf32> to vector<16x1xf32>
    %317 = tpu.reciprocal %316 {approx = true} : vector<16x1xf32> -> vector<16x1xf32>
    %318 = vector.broadcast %317 : vector<16x1xf32> to vector<16x16xf32>
    %319 = arith.mulf %314, %318 : vector<16x16xf32>
    %320 = vector.extract_strided_slice %279 {offsets = [0, 0], sizes = [16, 8], strides = [1, 1]} : vector<16x32xf32> to vector<16x8xf32>
    %cst_112 = arith.constant dense<0.000000e+00> : vector<16x8xf32>
    %321 = tpu.matmul %319, %320, %cst_112 {dimension_numbers = #tpu.dot_dimension_numbers<[1], [0], [0], [1], [0, 0, 1, 1], [], []>} : vector<16x16xf32>, vector<16x8xf32>, vector<16x8xf32> -> vector<16x8xf32>
    %322 = vector.extract_strided_slice %313 {offsets = [0, 16], sizes = [16, 16], strides = [1, 1]} : vector<16x64xf32> to vector<16x16xf32>
    %cst_113 = arith.constant dense<0.000000e+00> : vector<16xf32>
    %323 = vector.multi_reduction <add>, %322, %cst_113 [1] : vector<16x16xf32> to vector<16xf32>
    %324 = vector.shape_cast %323 : vector<16xf32> to vector<16x1xf32>
    %325 = tpu.reciprocal %324 {approx = true} : vector<16x1xf32> -> vector<16x1xf32>
    %326 = vector.broadcast %325 : vector<16x1xf32> to vector<16x16xf32>
    %327 = arith.mulf %322, %326 : vector<16x16xf32>
    %328 = vector.extract_strided_slice %279 {offsets = [0, 8], sizes = [16, 8], strides = [1, 1]} : vector<16x32xf32> to vector<16x8xf32>
    %cst_114 = arith.constant dense<0.000000e+00> : vector<16x8xf32>
    %329 = tpu.matmul %327, %328, %cst_114 {dimension_numbers = #tpu.dot_dimension_numbers<[1], [0], [0], [1], [0, 0, 1, 1], [], []>} : vector<16x16xf32>, vector<16x8xf32>, vector<16x8xf32> -> vector<16x8xf32>
    %330 = vector.extract_strided_slice %313 {offsets = [0, 32], sizes = [16, 16], strides = [1, 1]} : vector<16x64xf32> to vector<16x16xf32>
    %cst_115 = arith.constant dense<0.000000e+00> : vector<16xf32>
    %331 = vector.multi_reduction <add>, %330, %cst_115 [1] : vector<16x16xf32> to vector<16xf32>
    %332 = vector.shape_cast %331 : vector<16xf32> to vector<16x1xf32>
    %333 = tpu.reciprocal %332 {approx = true} : vector<16x1xf32> -> vector<16x1xf32>
    %334 = vector.broadcast %333 : vector<16x1xf32> to vector<16x16xf32>
    %335 = arith.mulf %330, %334 : vector<16x16xf32>
    %336 = vector.extract_strided_slice %279 {offsets = [0, 16], sizes = [16, 8], strides = [1, 1]} : vector<16x32xf32> to vector<16x8xf32>
    %cst_116 = arith.constant dense<0.000000e+00> : vector<16x8xf32>
    %337 = tpu.matmul %335, %336, %cst_116 {dimension_numbers = #tpu.dot_dimension_numbers<[1], [0], [0], [1], [0, 0, 1, 1], [], []>} : vector<16x16xf32>, vector<16x8xf32>, vector<16x8xf32> -> vector<16x8xf32>
    %338 = vector.extract_strided_slice %313 {offsets = [0, 48], sizes = [16, 16], strides = [1, 1]} : vector<16x64xf32> to vector<16x16xf32>
    %cst_117 = arith.constant dense<0.000000e+00> : vector<16xf32>
    %339 = vector.multi_reduction <add>, %338, %cst_117 [1] : vector<16x16xf32> to vector<16xf32>
    %340 = vector.shape_cast %339 : vector<16xf32> to vector<16x1xf32>
    %341 = tpu.reciprocal %340 {approx = true} : vector<16x1xf32> -> vector<16x1xf32>
    %342 = vector.broadcast %341 : vector<16x1xf32> to vector<16x16xf32>
    %343 = arith.mulf %338, %342 : vector<16x16xf32>
    %344 = vector.extract_strided_slice %279 {offsets = [0, 24], sizes = [16, 8], strides = [1, 1]} : vector<16x32xf32> to vector<16x8xf32>
    %cst_118 = arith.constant dense<0.000000e+00> : vector<16x8xf32>
    %345 = tpu.matmul %343, %344, %cst_118 {dimension_numbers = #tpu.dot_dimension_numbers<[1], [0], [0], [1], [0, 0, 1, 1], [], []>} : vector<16x16xf32>, vector<16x8xf32>, vector<16x8xf32> -> vector<16x8xf32>
    %346 = tpu.concatenate %321, %329, %337, %345 in 1 : vector<16x8xf32>, vector<16x8xf32>, vector<16x8xf32>, vector<16x8xf32> -> vector<16x32xf32>
    %347 = vector.extract_strided_slice %274 {offsets = [16, 0], sizes = [16, 32], strides = [1, 1]} : vector<32x32xf32> to vector<16x32xf32>
    %348 = vector.extract_strided_slice %275 {offsets = [16, 0], sizes = [16, 32], strides = [1, 1]} : vector<32x32xf32> to vector<16x32xf32>
    %349 = vector.extract_strided_slice %276 {offsets = [16, 0], sizes = [16, 32], strides = [1, 1]} : vector<32x32xf32> to vector<16x32xf32>
    %350 = vector.extract_strided_slice %347 {offsets = [0, 0], sizes = [16, 8], strides = [1, 1]} : vector<16x32xf32> to vector<16x8xf32>
    %351 = vector.extract_strided_slice %348 {offsets = [0, 0], sizes = [16, 8], strides = [1, 1]} : vector<16x32xf32> to vector<16x8xf32>
    %cst_119 = arith.constant dense<0.000000e+00> : vector<16x16xf32>
    %352 = tpu.matmul %350, %351, %cst_119 {dimension_numbers = #tpu.dot_dimension_numbers<[1], [1], [0], [0], [0, 0, 1, 0], [], []>} : vector<16x8xf32>, vector<16x8xf32>, vector<16x16xf32> -> vector<16x16xf32>
    %353 = arith.addf %352, %16 : vector<16x16xf32>
    %cst_120 = arith.constant dense<0xFF800000> : vector<16xf32>
    %354 = vector.multi_reduction <maximumf>, %353, %cst_120 [1] : vector<16x16xf32> to vector<16xf32>
    %355 = vector.shape_cast %354 : vector<16xf32> to vector<16x1xf32>
    %356 = vector.broadcast %355 : vector<16x1xf32> to vector<16x16xf32>
    %357 = arith.subf %353, %356 : vector<16x16xf32>
    %358 = vector.extract_strided_slice %347 {offsets = [0, 8], sizes = [16, 8], strides = [1, 1]} : vector<16x32xf32> to vector<16x8xf32>
    %359 = vector.extract_strided_slice %348 {offsets = [0, 8], sizes = [16, 8], strides = [1, 1]} : vector<16x32xf32> to vector<16x8xf32>
    %cst_121 = arith.constant dense<0.000000e+00> : vector<16x16xf32>
    %360 = tpu.matmul %358, %359, %cst_121 {dimension_numbers = #tpu.dot_dimension_numbers<[1], [1], [0], [0], [0, 0, 1, 0], [], []>} : vector<16x8xf32>, vector<16x8xf32>, vector<16x16xf32> -> vector<16x16xf32>
    %361 = arith.addf %360, %16 : vector<16x16xf32>
    %cst_122 = arith.constant dense<0xFF800000> : vector<16xf32>
    %362 = vector.multi_reduction <maximumf>, %361, %cst_122 [1] : vector<16x16xf32> to vector<16xf32>
    %363 = vector.shape_cast %362 : vector<16xf32> to vector<16x1xf32>
    %364 = vector.broadcast %363 : vector<16x1xf32> to vector<16x16xf32>
    %365 = arith.subf %361, %364 : vector<16x16xf32>
    %366 = vector.extract_strided_slice %347 {offsets = [0, 16], sizes = [16, 8], strides = [1, 1]} : vector<16x32xf32> to vector<16x8xf32>
    %367 = vector.extract_strided_slice %348 {offsets = [0, 16], sizes = [16, 8], strides = [1, 1]} : vector<16x32xf32> to vector<16x8xf32>
    %cst_123 = arith.constant dense<0.000000e+00> : vector<16x16xf32>
    %368 = tpu.matmul %366, %367, %cst_123 {dimension_numbers = #tpu.dot_dimension_numbers<[1], [1], [0], [0], [0, 0, 1, 0], [], []>} : vector<16x8xf32>, vector<16x8xf32>, vector<16x16xf32> -> vector<16x16xf32>
    %369 = arith.addf %368, %16 : vector<16x16xf32>
    %cst_124 = arith.constant dense<0xFF800000> : vector<16xf32>
    %370 = vector.multi_reduction <maximumf>, %369, %cst_124 [1] : vector<16x16xf32> to vector<16xf32>
    %371 = vector.shape_cast %370 : vector<16xf32> to vector<16x1xf32>
    %372 = vector.broadcast %371 : vector<16x1xf32> to vector<16x16xf32>
    %373 = arith.subf %369, %372 : vector<16x16xf32>
    %374 = vector.extract_strided_slice %347 {offsets = [0, 24], sizes = [16, 8], strides = [1, 1]} : vector<16x32xf32> to vector<16x8xf32>
    %375 = vector.extract_strided_slice %348 {offsets = [0, 24], sizes = [16, 8], strides = [1, 1]} : vector<16x32xf32> to vector<16x8xf32>
    %cst_125 = arith.constant dense<0.000000e+00> : vector<16x16xf32>
    %376 = tpu.matmul %374, %375, %cst_125 {dimension_numbers = #tpu.dot_dimension_numbers<[1], [1], [0], [0], [0, 0, 1, 0], [], []>} : vector<16x8xf32>, vector<16x8xf32>, vector<16x16xf32> -> vector<16x16xf32>
    %377 = arith.addf %376, %16 : vector<16x16xf32>
    %cst_126 = arith.constant dense<0xFF800000> : vector<16xf32>
    %378 = vector.multi_reduction <maximumf>, %377, %cst_126 [1] : vector<16x16xf32> to vector<16xf32>
    %379 = vector.shape_cast %378 : vector<16xf32> to vector<16x1xf32>
    %380 = vector.broadcast %379 : vector<16x1xf32> to vector<16x16xf32>
    %381 = arith.subf %377, %380 : vector<16x16xf32>
    %382 = tpu.concatenate %357, %365, %373, %381 in 1 : vector<16x16xf32>, vector<16x16xf32>, vector<16x16xf32>, vector<16x16xf32> -> vector<16x64xf32>
    %383 = math.exp %382 : vector<16x64xf32>
    %384 = vector.extract_strided_slice %383 {offsets = [0, 0], sizes = [16, 16], strides = [1, 1]} : vector<16x64xf32> to vector<16x16xf32>
    %cst_127 = arith.constant dense<0.000000e+00> : vector<16xf32>
    %385 = vector.multi_reduction <add>, %384, %cst_127 [1] : vector<16x16xf32> to vector<16xf32>
    %386 = vector.shape_cast %385 : vector<16xf32> to vector<16x1xf32>
    %387 = tpu.reciprocal %386 {approx = true} : vector<16x1xf32> -> vector<16x1xf32>
    %388 = vector.broadcast %387 : vector<16x1xf32> to vector<16x16xf32>
    %389 = arith.mulf %384, %388 : vector<16x16xf32>
    %390 = vector.extract_strided_slice %349 {offsets = [0, 0], sizes = [16, 8], strides = [1, 1]} : vector<16x32xf32> to vector<16x8xf32>
    %cst_128 = arith.constant dense<0.000000e+00> : vector<16x8xf32>
    %391 = tpu.matmul %389, %390, %cst_128 {dimension_numbers = #tpu.dot_dimension_numbers<[1], [0], [0], [1], [0, 0, 1, 1], [], []>} : vector<16x16xf32>, vector<16x8xf32>, vector<16x8xf32> -> vector<16x8xf32>
    %392 = vector.extract_strided_slice %383 {offsets = [0, 16], sizes = [16, 16], strides = [1, 1]} : vector<16x64xf32> to vector<16x16xf32>
    %cst_129 = arith.constant dense<0.000000e+00> : vector<16xf32>
    %393 = vector.multi_reduction <add>, %392, %cst_129 [1] : vector<16x16xf32> to vector<16xf32>
    %394 = vector.shape_cast %393 : vector<16xf32> to vector<16x1xf32>
    %395 = tpu.reciprocal %394 {approx = true} : vector<16x1xf32> -> vector<16x1xf32>
    %396 = vector.broadcast %395 : vector<16x1xf32> to vector<16x16xf32>
    %397 = arith.mulf %392, %396 : vector<16x16xf32>
    %398 = vector.extract_strided_slice %349 {offsets = [0, 8], sizes = [16, 8], strides = [1, 1]} : vector<16x32xf32> to vector<16x8xf32>
    %cst_130 = arith.constant dense<0.000000e+00> : vector<16x8xf32>
    %399 = tpu.matmul %397, %398, %cst_130 {dimension_numbers = #tpu.dot_dimension_numbers<[1], [0], [0], [1], [0, 0, 1, 1], [], []>} : vector<16x16xf32>, vector<16x8xf32>, vector<16x8xf32> -> vector<16x8xf32>
    %400 = vector.extract_strided_slice %383 {offsets = [0, 32], sizes = [16, 16], strides = [1, 1]} : vector<16x64xf32> to vector<16x16xf32>
    %cst_131 = arith.constant dense<0.000000e+00> : vector<16xf32>
    %401 = vector.multi_reduction <add>, %400, %cst_131 [1] : vector<16x16xf32> to vector<16xf32>
    %402 = vector.shape_cast %401 : vector<16xf32> to vector<16x1xf32>
    %403 = tpu.reciprocal %402 {approx = true} : vector<16x1xf32> -> vector<16x1xf32>
    %404 = vector.broadcast %403 : vector<16x1xf32> to vector<16x16xf32>
    %405 = arith.mulf %400, %404 : vector<16x16xf32>
    %406 = vector.extract_strided_slice %349 {offsets = [0, 16], sizes = [16, 8], strides = [1, 1]} : vector<16x32xf32> to vector<16x8xf32>
    %cst_132 = arith.constant dense<0.000000e+00> : vector<16x8xf32>
    %407 = tpu.matmul %405, %406, %cst_132 {dimension_numbers = #tpu.dot_dimension_numbers<[1], [0], [0], [1], [0, 0, 1, 1], [], []>} : vector<16x16xf32>, vector<16x8xf32>, vector<16x8xf32> -> vector<16x8xf32>
    %408 = vector.extract_strided_slice %383 {offsets = [0, 48], sizes = [16, 16], strides = [1, 1]} : vector<16x64xf32> to vector<16x16xf32>
    %cst_133 = arith.constant dense<0.000000e+00> : vector<16xf32>
    %409 = vector.multi_reduction <add>, %408, %cst_133 [1] : vector<16x16xf32> to vector<16xf32>
    %410 = vector.shape_cast %409 : vector<16xf32> to vector<16x1xf32>
    %411 = tpu.reciprocal %410 {approx = true} : vector<16x1xf32> -> vector<16x1xf32>
    %412 = vector.broadcast %411 : vector<16x1xf32> to vector<16x16xf32>
    %413 = arith.mulf %408, %412 : vector<16x16xf32>
    %414 = vector.extract_strided_slice %349 {offsets = [0, 24], sizes = [16, 8], strides = [1, 1]} : vector<16x32xf32> to vector<16x8xf32>
    %cst_134 = arith.constant dense<0.000000e+00> : vector<16x8xf32>
    %415 = tpu.matmul %413, %414, %cst_134 {dimension_numbers = #tpu.dot_dimension_numbers<[1], [0], [0], [1], [0, 0, 1, 1], [], []>} : vector<16x16xf32>, vector<16x8xf32>, vector<16x8xf32> -> vector<16x8xf32>
    %416 = tpu.concatenate %391, %399, %407, %415 in 1 : vector<16x8xf32>, vector<16x8xf32>, vector<16x8xf32>, vector<16x8xf32> -> vector<16x32xf32>
    %417 = tpu.concatenate %346, %416 in 0 : vector<16x32xf32>, vector<16x32xf32> -> vector<32x32xf32>
    %c1_135 = arith.constant 1 : index
    %c0_136 = arith.constant 0 : index
    %c0_137 = arith.constant 0 : index
    %418 = vector.load %arg6[%c1_135, %c0_136, %c0_137] : memref<2x32x32xf32, #tpu.memory_space<vmem>>, vector<1x32x32xf32>
    %419 = vector.shape_cast %418 : vector<1x32x32xf32> to vector<32x32xf32>
    %cst_138 = arith.constant dense<0.000000e+00> : vector<32x32xf32>
    %420 = tpu.matmul %417, %419, %cst_138 {dimension_numbers = #tpu.dot_dimension_numbers<[1], [0], [0], [1], [0, 0, 1, 1], [], []>} : vector<32x32xf32>, vector<32x32xf32>, vector<32x32xf32> -> vector<32x32xf32>
    %421 = arith.addf %242, %420 : vector<32x32xf32>
    %c1_139 = arith.constant 1 : index
    %c0_140 = arith.constant 0 : index
    %c0_141 = arith.constant 0 : index
    %422 = vector.load %arg7[%c1_139, %c0_140, %c0_141] : memref<2x1x32xf32, #tpu.memory_space<vmem>>, vector<1x1x32xf32>
    %423 = vector.shape_cast %422 : vector<1x1x32xf32> to vector<1x32xf32>
    %424 = vector.broadcast %423 : vector<1x32xf32> to vector<32x32xf32>
    %425 = arith.addf %421, %424 : vector<32x32xf32>
    %c1_142 = arith.constant 1 : index
    %c0_143 = arith.constant 0 : index
    %c0_144 = arith.constant 0 : index
    %426 = vector.load %arg8[%c1_142, %c0_143, %c0_144] : memref<2x1x32xf32, #tpu.memory_space<vmem>>, vector<1x1x32xf32>
    %427 = vector.shape_cast %426 : vector<1x1x32xf32> to vector<1x32xf32>
    %c1_145 = arith.constant 1 : index
    %c0_146 = arith.constant 0 : index
    %c0_147 = arith.constant 0 : index
    %428 = vector.load %arg9[%c1_145, %c0_146, %c0_147] : memref<2x1x32xf32, #tpu.memory_space<vmem>>, vector<1x1x32xf32>
    %429 = vector.shape_cast %428 : vector<1x1x32xf32> to vector<1x32xf32>
    %cst_148 = arith.constant dense<0.000000e+00> : vector<32xf32>
    %430 = vector.multi_reduction <add>, %425, %cst_148 [1] : vector<32x32xf32> to vector<32xf32>
    %431 = vector.shape_cast %430 : vector<32xf32> to vector<32x1xf32>
    %cst_149 = arith.constant 3.200000e+01 : f32
    %432 = vector.broadcast %cst_149 : f32 to vector<32x1xf32>
    %433 = arith.divf %431, %432 : vector<32x1xf32>
    %434 = vector.broadcast %433 : vector<32x1xf32> to vector<32x32xf32>
    %435 = arith.subf %425, %434 : vector<32x32xf32>
    %436 = arith.mulf %435, %435 : vector<32x32xf32>
    %cst_150 = arith.constant dense<0.000000e+00> : vector<32xf32>
    %437 = vector.multi_reduction <add>, %436, %cst_150 [1] : vector<32x32xf32> to vector<32xf32>
    %438 = vector.shape_cast %437 : vector<32xf32> to vector<32x1xf32>
    %cst_151 = arith.constant 3.200000e+01 : f32
    %439 = vector.broadcast %cst_151 : f32 to vector<32x1xf32>
    %440 = arith.divf %438, %439 : vector<32x1xf32>
    %441 = vector.broadcast %433 : vector<32x1xf32> to vector<32x32xf32>
    %442 = arith.subf %425, %441 : vector<32x32xf32>
    %cst_152 = arith.constant 9.99999974E-6 : f32
    %443 = vector.broadcast %cst_152 : f32 to vector<32x1xf32>
    %444 = arith.addf %440, %443 : vector<32x1xf32>
    %445 = math.rsqrt %444 : vector<32x1xf32>
    %446 = vector.broadcast %445 : vector<32x1xf32> to vector<32x32xf32>
    %447 = arith.mulf %442, %446 : vector<32x32xf32>
    %448 = vector.broadcast %427 : vector<1x32xf32> to vector<32x32xf32>
    %449 = arith.mulf %447, %448 : vector<32x32xf32>
    %450 = vector.broadcast %429 : vector<1x32xf32> to vector<32x32xf32>
    %451 = arith.addf %449, %450 : vector<32x32xf32>
    %c1_153 = arith.constant 1 : index
    %c0_154 = arith.constant 0 : index
    %c0_155 = arith.constant 0 : index
    %452 = vector.load %arg10[%c1_153, %c0_154, %c0_155] : memref<2x32x128xf32, #tpu.memory_space<vmem>>, vector<1x32x128xf32>
    %453 = vector.shape_cast %452 : vector<1x32x128xf32> to vector<32x128xf32>
    %cst_156 = arith.constant dense<0.000000e+00> : vector<32x128xf32>
    %454 = tpu.matmul %451, %453, %cst_156 {dimension_numbers = #tpu.dot_dimension_numbers<[1], [0], [0], [1], [0, 0, 1, 1], [], []>} : vector<32x32xf32>, vector<32x128xf32>, vector<32x128xf32> -> vector<32x128xf32>
    %c1_157 = arith.constant 1 : index
    %c0_158 = arith.constant 0 : index
    %c0_159 = arith.constant 0 : index
    %455 = vector.load %arg11[%c1_157, %c0_158, %c0_159] : memref<2x1x128xf32, #tpu.memory_space<vmem>>, vector<1x1x128xf32>
    %456 = vector.shape_cast %455 : vector<1x1x128xf32> to vector<1x128xf32>
    %457 = vector.broadcast %456 : vector<1x128xf32> to vector<32x128xf32>
    %458 = arith.addf %454, %457 : vector<32x128xf32>
    %cst_160 = arith.constant 0.000000e+00 : f32
    %459 = vector.broadcast %cst_160 : f32 to vector<32x128xf32>
    %460 = arith.maximumf %458, %459 : vector<32x128xf32>
    %c1_161 = arith.constant 1 : index
    %c0_162 = arith.constant 0 : index
    %c0_163 = arith.constant 0 : index
    %461 = vector.load %arg12[%c1_161, %c0_162, %c0_163] : memref<2x128x32xf32, #tpu.memory_space<vmem>>, vector<1x128x32xf32>
    %462 = vector.shape_cast %461 : vector<1x128x32xf32> to vector<128x32xf32>
    %cst_164 = arith.constant dense<0.000000e+00> : vector<32x32xf32>
    %463 = tpu.matmul %460, %462, %cst_164 {dimension_numbers = #tpu.dot_dimension_numbers<[1], [0], [0], [1], [0, 0, 1, 1], [], []>} : vector<32x128xf32>, vector<128x32xf32>, vector<32x32xf32> -> vector<32x32xf32>
    %464 = arith.addf %425, %463 : vector<32x32xf32>
    %c1_165 = arith.constant 1 : index
    %c0_166 = arith.constant 0 : index
    %c0_167 = arith.constant 0 : index
    %465 = vector.load %arg13[%c1_165, %c0_166, %c0_167] : memref<2x1x32xf32, #tpu.memory_space<vmem>>, vector<1x1x32xf32>
    %466 = vector.shape_cast %465 : vector<1x1x32xf32> to vector<1x32xf32>
    %467 = vector.broadcast %466 : vector<1x32xf32> to vector<32x32xf32>
    %468 = arith.addf %464, %467 : vector<32x32xf32>
    %c0_168 = arith.constant 0 : index
    %c0_169 = arith.constant 0 : index
    %469 = vector.load %arg14[%c0_168, %c0_169] : memref<1x32xf32, #tpu.memory_space<vmem>>, vector<1x32xf32>
    %c0_170 = arith.constant 0 : index
    %c0_171 = arith.constant 0 : index
    %470 = vector.load %arg15[%c0_170, %c0_171] : memref<1x32xf32, #tpu.memory_space<vmem>>, vector<1x32xf32>
    %cst_172 = arith.constant dense<0.000000e+00> : vector<32xf32>
    %471 = vector.multi_reduction <add>, %468, %cst_172 [1] : vector<32x32xf32> to vector<32xf32>
    %472 = vector.shape_cast %471 : vector<32xf32> to vector<32x1xf32>
    %cst_173 = arith.constant 3.200000e+01 : f32
    %473 = vector.broadcast %cst_173 : f32 to vector<32x1xf32>
    %474 = arith.divf %472, %473 : vector<32x1xf32>
    %475 = vector.broadcast %474 : vector<32x1xf32> to vector<32x32xf32>
    %476 = arith.subf %468, %475 : vector<32x32xf32>
    %477 = arith.mulf %476, %476 : vector<32x32xf32>
    %cst_174 = arith.constant dense<0.000000e+00> : vector<32xf32>
    %478 = vector.multi_reduction <add>, %477, %cst_174 [1] : vector<32x32xf32> to vector<32xf32>
    %479 = vector.shape_cast %478 : vector<32xf32> to vector<32x1xf32>
    %cst_175 = arith.constant 3.200000e+01 : f32
    %480 = vector.broadcast %cst_175 : f32 to vector<32x1xf32>
    %481 = arith.divf %479, %480 : vector<32x1xf32>
    %482 = vector.broadcast %474 : vector<32x1xf32> to vector<32x32xf32>
    %483 = arith.subf %468, %482 : vector<32x32xf32>
    %cst_176 = arith.constant 9.99999974E-6 : f32
    %484 = vector.broadcast %cst_176 : f32 to vector<32x1xf32>
    %485 = arith.addf %481, %484 : vector<32x1xf32>
    %486 = math.rsqrt %485 : vector<32x1xf32>
    %487 = vector.broadcast %486 : vector<32x1xf32> to vector<32x32xf32>
    %488 = arith.mulf %483, %487 : vector<32x32xf32>
    %489 = vector.broadcast %469 : vector<1x32xf32> to vector<32x32xf32>
    %490 = arith.mulf %488, %489 : vector<32x32xf32>
    %491 = vector.broadcast %470 : vector<1x32xf32> to vector<32x32xf32>
    %492 = arith.addf %490, %491 : vector<32x32xf32>
    %c0_177 = arith.constant 0 : index
    %c0_178 = arith.constant 0 : index
    %493 = vector.load %arg16[%c0_177, %c0_178] : memref<32x128xf32, #tpu.memory_space<vmem>>, vector<32x128xf32>
    %cst_179 = arith.constant dense<0.000000e+00> : vector<32x128xf32>
    %494 = tpu.matmul %492, %493, %cst_179 {dimension_numbers = #tpu.dot_dimension_numbers<[1], [0], [0], [1], [0, 0, 1, 1], [], []>} : vector<32x32xf32>, vector<32x128xf32>, vector<32x128xf32> -> vector<32x128xf32>
    %c0_180 = arith.constant 0 : index
    %c0_181 = arith.constant 0 : index
    %495 = vector.load %arg17[%c0_180, %c0_181] : memref<1x128xf32, #tpu.memory_space<vmem>>, vector<1x128xf32>
    %496 = vector.broadcast %495 : vector<1x128xf32> to vector<32x128xf32>
    %497 = arith.addf %494, %496 : vector<32x128xf32>
    %c0_182 = arith.constant 0 : index
    %c0_183 = arith.constant 0 : index
    %498 = vector.load %arg18[%c0_182, %c0_183] : memref<32x128xf32, #tpu.memory_space<vmem>>, vector<32x128xf32>
    tpu.vector_store %arg18[%c0_182, %c0_183], %497 {strides = array<i32>} : memref<32x128xf32, #tpu.memory_space<vmem>>, vector<32x128xf32>,
    return
  }
}

</mosaic_0001>

<llo_original>
// kernel: tpu_custom_call.1
$region0: #{tpu_custom_call.1}
  #allocation0 [shape = 'u32[]', space=smem, size = 0x4, offset = 0x4, fixed_abs, tag = 'smem constant byte address 0x4 - core index']
  #allocation1 [shape = 'u32[144,128]{1,0:T(1,128)}', space=vmem, size = 0x12000, scoped, tag = 'internal scratch']
  %s0 = inlined_call_operand.vmem [shape: s32[32,1], index: 0, kind: input, shape index: {}]
  %s1 = inlined_call_operand.vmem [shape: f32[128,32], index: 1, kind: input, shape index: {}]
  %s2 = inlined_call_operand.vmem [shape: f32[16,32], index: 2, kind: input, shape index: {}]
  %s3 = inlined_call_operand.vmem [shape: f32[2,1,32], index: 3, kind: input, shape index: {}]
  %s4 = inlined_call_operand.vmem [shape: f32[2,1,32], index: 4, kind: input, shape index: {}]
  %s5 = inlined_call_operand.vmem [shape: f32[2,32,96], index: 5, kind: input, shape index: {}]
  %s6 = inlined_call_operand.vmem [shape: f32[2,32,32], index: 6, kind: input, shape index: {}]
  %s7 = inlined_call_operand.vmem [shape: f32[2,1,32], index: 7, kind: input, shape index: {}]
  %s8 = inlined_call_operand.vmem [shape: f32[2,1,32], index: 8, kind: input, shape index: {}]
  %s9 = inlined_call_operand.vmem [shape: f32[2,1,32], index: 9, kind: input, shape index: {}]
  %s10 = inlined_call_operand.vmem [shape: f32[2,32,128], index: 10, kind: input, shape index: {}]
  %s11 = inlined_call_operand.vmem [shape: f32[2,1,128], index: 11, kind: input, shape index: {}]
  %s12 = inlined_call_operand.vmem [shape: f32[2,128,32], index: 12, kind: input, shape index: {}]
  %s13 = inlined_call_operand.vmem [shape: f32[2,1,32], index: 13, kind: input, shape index: {}]
  %s14 = inlined_call_operand.vmem [shape: f32[1,32], index: 14, kind: input, shape index: {}]
  %s15 = inlined_call_operand.vmem [shape: f32[1,32], index: 15, kind: input, shape index: {}]
  %s16 = inlined_call_operand.vmem [shape: f32[32,128], index: 16, kind: input, shape index: {}]
  %s17 = inlined_call_operand.vmem [shape: f32[1,128], index: 17, kind: input, shape index: {}]
  %s18 = inlined_call_operand.hbm [shape: f32[32,128], index: 18, kind: output, shape index: {}]
  %s19 = sld [smem:[#allocation0]]
  $region82: #{tpu_custom_call.1} parent=0
    _
  %s21 = ssub.s32 1, %s19
  %s22 = scalar_select 0, %s21, %s19
  $region1: #{tpu_custom_call.1} parent=0
    #allocation2 [shape = 'u8[16384]{0}', space=vmem, size = 0x4000, scoped, tag = 'output window, operand 0, single buffered']
    #allocation3 [shape = 's32[1]{0}', space=sflag, size = 0x4, scoped, tag = 'scoped memory for tpu_custom_call.1']
    %23 = vsyncpa [#allocation3], 0
    // Predicated region
    $region2: #{tpu_custom_call.1} parent=1 // pred_check
      _
    $region3: #{tpu_custom_call.1} parent=1 // pred_check_branch
      %25 = sbr.rel (0) target = $region5
    $region4: #{tpu_custom_call.1} parent=1 // pred_region
      _
    $region5: #{tpu_custom_call.1} parent=1 // pred_fallthru
      _
    // Predicated region
    $region6: #{tpu_custom_call.1} parent=1 // pred_check
      _
    $region7: #{tpu_custom_call.1} parent=1 // pred_check_branch
      %27 = sbr.rel (0) target = $region9
    $region8: #{tpu_custom_call.1} parent=1 // pred_region
      _
    $region9: #{tpu_custom_call.1} parent=1 // pred_fallthru
      _
    // Predicated region
    $region10: #{tpu_custom_call.1} parent=1 // pred_check
      _
    $region11: #{tpu_custom_call.1} parent=1 // pred_check_branch
      %29 = sbr.rel (0) target = $region13
    $region12: #{tpu_custom_call.1} parent=1 // pred_region
      _
    $region13: #{tpu_custom_call.1} parent=1 // pred_fallthru
      _
    // Predicated region
    $region14: #{tpu_custom_call.1} parent=1 // pred_check
      _
    $region15: #{tpu_custom_call.1} parent=1 // pred_check_branch
      %31 = sbr.rel (0) target = $region17
    $region16: #{tpu_custom_call.1} parent=1 // pred_region
      _
    $region17: #{tpu_custom_call.1} parent=1 // pred_fallthru
      _
    // Predicated region
    $region18: #{tpu_custom_call.1} parent=1 // pred_check
      _
    $region19: #{tpu_custom_call.1} parent=1 // pred_check_branch
      %33 = sbr.rel (0) target = $region21
    $region20: #{tpu_custom_call.1} parent=1 // pred_region
      _
    $region21: #{tpu_custom_call.1} parent=1 // pred_fallthru
      _
    // Predicated region
    $region22: #{tpu_custom_call.1} parent=1 // pred_check
      _
    $region23: #{tpu_custom_call.1} parent=1 // pred_check_branch
      %35 = sbr.rel (0) target = $region25
    $region24: #{tpu_custom_call.1} parent=1 // pred_region
      _
    $region25: #{tpu_custom_call.1} parent=1 // pred_fallthru
      _
    // Predicated region
    $region26: #{tpu_custom_call.1} parent=1 // pred_check
      _
    $region27: #{tpu_custom_call.1} parent=1 // pred_check_branch
      %37 = sbr.rel (0) target = $region29
    $region28: #{tpu_custom_call.1} parent=1 // pred_region
      _
    $region29: #{tpu_custom_call.1} parent=1 // pred_fallthru
      _
    // Predicated region
    $region30: #{tpu_custom_call.1} parent=1 // pred_check
      _
    $region31: #{tpu_custom_call.1} parent=1 // pred_check_branch
      %39 = sbr.rel (0) target = $region33
    $region32: #{tpu_custom_call.1} parent=1 // pred_region
      _
    $region33: #{tpu_custom_call.1} parent=1 // pred_fallthru
      _
    // Predicated region
    $region34: #{tpu_custom_call.1} parent=1 // pred_check
      _
    $region35: #{tpu_custom_call.1} parent=1 // pred_check_branch
      %41 = sbr.rel (0) target = $region37
    $region36: #{tpu_custom_call.1} parent=1 // pred_region
      _
    $region37: #{tpu_custom_call.1} parent=1 // pred_fallthru
      _
    // Predicated region
    $region38: #{tpu_custom_call.1} parent=1 // pred_check
      _
    $region39: #{tpu_custom_call.1} parent=1 // pred_check_branch
      %43 = sbr.rel (0) target = $region41
    $region40: #{tpu_custom_call.1} parent=1 // pred_region
      _
    $region41: #{tpu_custom_call.1} parent=1 // pred_fallthru
      _
    // Predicated region
    $region42: #{tpu_custom_call.1} parent=1 // pred_check
      _
    $region43: #{tpu_custom_call.1} parent=1 // pred_check_branch
      %45 = sbr.rel (0) target = $region45
    $region44: #{tpu_custom_call.1} parent=1 // pred_region
      _
    $region45: #{tpu_custom_call.1} parent=1 // pred_fallthru
      _
    // Predicated region
    $region46: #{tpu_custom_call.1} parent=1 // pred_check
      _
    $region47: #{tpu_custom_call.1} parent=1 // pred_check_branch
      %47 = sbr.rel (0) target = $region49
    $region48: #{tpu_custom_call.1} parent=1 // pred_region
      _
    $region49: #{tpu_custom_call.1} parent=1 // pred_fallthru
      _
    // Predicated region
    $region50: #{tpu_custom_call.1} parent=1 // pred_check
      _
    $region51: #{tpu_custom_call.1} parent=1 // pred_check_branch
      %49 = sbr.rel (0) target = $region53
    $region52: #{tpu_custom_call.1} parent=1 // pred_region
      _
    $region53: #{tpu_custom_call.1} parent=1 // pred_fallthru
      _
    // Predicated region
    $region54: #{tpu_custom_call.1} parent=1 // pred_check
      _
    $region55: #{tpu_custom_call.1} parent=1 // pred_check_branch
      %51 = sbr.rel (0) target = $region57
    $region56: #{tpu_custom_call.1} parent=1 // pred_region
      _
    $region57: #{tpu_custom_call.1} parent=1 // pred_fallthru
      _
    // Predicated region
    $region58: #{tpu_custom_call.1} parent=1 // pred_check
      _
    $region59: #{tpu_custom_call.1} parent=1 // pred_check_branch
      %53 = sbr.rel (0) target = $region61
    $region60: #{tpu_custom_call.1} parent=1 // pred_region
      _
    $region61: #{tpu_custom_call.1} parent=1 // pred_fallthru
      _
    // Predicated region
    $region62: #{tpu_custom_call.1} parent=1 // pred_check
      _
    $region63: #{tpu_custom_call.1} parent=1 // pred_check_branch
      %55 = sbr.rel (0) target = $region65
    $region64: #{tpu_custom_call.1} parent=1 // pred_region
      _
    $region65: #{tpu_custom_call.1} parent=1 // pred_fallthru
      _
    // Predicated region
    $region66: #{tpu_custom_call.1} parent=1 // pred_check
      _
    $region67: #{tpu_custom_call.1} parent=1 // pred_check_branch
      %57 = sbr.rel (0) target = $region69
    $region68: #{tpu_custom_call.1} parent=1 // pred_region
      _
    $region69: #{tpu_custom_call.1} parent=1 // pred_fallthru
      _
    // Predicated region
    $region70: #{tpu_custom_call.1} parent=1 // pred_check
      _
    $region71: #{tpu_custom_call.1} parent=1 // pred_check_branch
      %59 = sbr.rel (0) target = $region73
    $region72: #{tpu_custom_call.1} parent=1 // pred_region
      _
    $region73: #{tpu_custom_call.1} parent=1 // pred_fallthru
      _
    %v60 = vld [vmem:[%s0] sm:$0xff]
    %v61 = vld [vmem:[%s0 + $0x8] sm:$0xff]
    %v62 = vld [vmem:[%s0 + $0x10] sm:$0xff]
    %v63 = vld [vmem:[%s0 + $0x18] sm:$0xff]
    %v64 = vlaneseq
    %v65 = vand.u32 %v64, 127
    %66 = vset.pattern.permute.xlu0 0
    %67 = vperm.xlu0 %66, %v60
    %v68 = vpop.permute.xlu0 %67
    %69 = vset.pattern.permute.xlu0 0
    %70 = vperm.xlu0 %69, %v61
    %v71 = vpop.permute.xlu0 %70
    %72 = vset.pattern.permute.xlu0 0
    %73 = vperm.xlu0 %72, %v62
    %v74 = vpop.permute.xlu0 %73
    %75 = vset.pattern.permute.xlu0 0
    %76 = vperm.xlu0 %75, %v63
    %v77 = vpop.permute.xlu0 %76
    %vm78 = vcmp.eq.s32.totalorder %v65, %v68
    %vm79 = vcmp.eq.s32.totalorder %v65, %v71
    %vm80 = vcmp.eq.s32.totalorder %v65, %v74
    %vm81 = vcmp.eq.s32.totalorder %v65, %v77
    %v82 = vsel %vm78, 1, 0
    %v83 = vsel %vm79, 1, 0
    %v84 = vsel %vm80, 1, 0
    %v85 = vsel %vm81, 1, 0
    %v86 = vcvt.s32.f32 %v82
    %v87 = vcvt.s32.f32 %v83
    %v88 = vcvt.s32.f32 %v84
    %v89 = vcvt.s32.f32 %v85
    %v90 = vld [vmem:[%s1] sm:$0xff]
    %v91 = vld [vmem:[%s1 + $0x8] sm:$0xff]
    %v92 = vld [vmem:[%s1 + $0x10] sm:$0xff]
    %v93 = vld [vmem:[%s1 + $0x18] sm:$0xff]
    %v94 = vld [vmem:[%s1 + $0x20] sm:$0xff]
    %v95 = vld [vmem:[%s1 + $0x28] sm:$0xff]
    %v96 = vld [vmem:[%s1 + $0x30] sm:$0xff]
    %v97 = vld [vmem:[%s1 + $0x38] sm:$0xff]
    %v98 = vld [vmem:[%s1 + $0x40] sm:$0xff]
    %v99 = vld [vmem:[%s1 + $0x48] sm:$0xff]
    %v100 = vld [vmem:[%s1 + $0x50] sm:$0xff]
    %v101 = vld [vmem:[%s1 + $0x58] sm:$0xff]
    %v102 = vld [vmem:[%s1 + $0x60] sm:$0xff]
    %v103 = vld [vmem:[%s1 + $0x68] sm:$0xff]
    %v104 = vld [vmem:[%s1 + $0x70] sm:$0xff]
    %v105 = vld [vmem:[%s1 + $0x78] sm:$0xff]
    %v106 = vld [vmem:[%s2] sm:$0xff]
    %v107 = vld [vmem:[%s2 + $0x8] sm:$0xff]
    %108 = vmatprep.subr.mxu0 0.0
    %109 = vmatpush1.msra.mxu0 %v105
    %110 = vmatprep.subr.mxu0 0.0
    %111 = vmatpush1.msra.mxu0 %v104
    %112 = vmatprep.subr.mxu0 0.0
    %113 = vmatpush1.msra.mxu0 %v103
    %114 = vmatprep.subr.mxu0 0.0
    %115 = vmatpush1.msra.mxu0 %v102
    %116 = vmatprep.subr.mxu0 0.0
    %117 = vmatpush1.msra.mxu0 %v101
    %118 = vmatprep.subr.mxu0 0.0
    %119 = vmatpush1.msra.mxu0 %v100
    %120 = vmatprep.subr.mxu0 0.0
    %121 = vmatpush1.msra.mxu0 %v99
    %122 = vmatprep.subr.mxu0 0.0
    %123 = vmatpush1.msra.mxu0 %v98
    %124 = vmatprep.subr.mxu0 0.0
    %125 = vmatpush1.msra.mxu0 %v97
    %126 = vmatprep.subr.mxu0 0.0
    %127 = vmatpush1.msra.mxu0 %v96
    %128 = vmatprep.subr.mxu0 0.0
    %129 = vmatpush1.msra.mxu0 %v95
    %130 = vmatprep.subr.mxu0 0.0
    %131 = vmatpush1.msra.mxu0 %v94
    %132 = vmatprep.subr.mxu0 0.0
    %133 = vmatpush1.msra.mxu0 %v93
    %134 = vmatprep.subr.mxu0 0.0
    %135 = vmatpush1.msra.mxu0 %v92
    %136 = vmatprep.subr.mxu0 0.0
    %137 = vmatpush1.msra.mxu0 %v91
    %138 = vmatprep.subr.mxu0 0.0
    %139 = vmatpush1.msra.mxu0 %v90
    %140 = vmatprep.subr.mxu0 0.0
    %141 = vmatpush2.msra.mxu0 0.0
    %142 = vmatprep.subr.mxu0 0.0
    %143 = vmatpush2.msra.mxu0 0.0
    %144 = vmatprep.subr.mxu0 0.0
    %145 = vmatpush2.msra.mxu0 0.0
    %146 = vmatprep.subr.mxu0 0.0
    %147 = vmatpush2.msra.mxu0 0.0
    %148 = vmatprep.subr.mxu0 0.0
    %149 = vmatpush2.msra.mxu0 0.0
    %150 = vmatprep.subr.mxu0 0.0
    %151 = vmatpush2.msra.mxu0 0.0
    %152 = vmatprep.subr.mxu0 0.0
    %153 = vmatpush2.msra.mxu0 0.0
    %154 = vmatprep.subr.mxu0 0.0
    %155 = vmatpush2.msra.mxu0 0.0
    %156 = vmatprep.subr.mxu0 0.0
    %157 = vmatpush2.msra.mxu0 0.0
    %158 = vmatprep.subr.mxu0 0.0
    %159 = vmatpush2.msra.mxu0 0.0
    %160 = vmatprep.subr.mxu0 0.0
    %161 = vmatpush2.msra.mxu0 0.0
    %162 = vmatprep.subr.mxu0 0.0
    %163 = vmatpush2.msra.mxu0 0.0
    %164 = vmatprep.subr.mxu0 0.0
    %165 = vmatpush2.msra.mxu0 0.0
    %166 = vmatprep.subr.mxu0 0.0
    %167 = vmatpush2.msra.mxu0 0.0
    %168 = vmatprep.subr.mxu0 0.0
    %169 = vmatpush2.msra.mxu0 0.0
    %170 = vmatprep.subr.mxu0 0.0
    %171 = vmatpush2.msra.mxu0 0.0
    %172 = vmatprep.mubr.f32.mxu0 0.0
    %173 = vmatmul.mubr.f32.gmra.mxu0 %v86
    %v174 = vpop.f32.mrf.mxu0
    %v175 = vadd.f32 %v106, %v174
    %v176 = vpop.f32.mrf.mxu0
    %177 = vmatprep.mubr.f32.mxu0 0.0
    %178 = vmatmul.mubr.f32.gmra.mxu0 %v87
    %v179 = vpop.f32.mrf.mxu0
    %v180 = vadd.f32 %v107, %v179
    %v181 = vpop.f32.mrf.mxu0
    %182 = vmatprep.mubr.f32.mxu0 0.0
    %183 = vmatmul.mubr.f32.gmra.mxu0 %v88
    %v184 = vpop.f32.mrf.mxu0
    %v185 = vadd.f32 %v106, %v184
    %v186 = vpop.f32.mrf.mxu0
    %187 = vmatprep.mubr.f32.mxu0 0.0
    %188 = vmatmul.mubr.f32.gmra.mxu0 %v89
    %v189 = vpop.f32.mrf.mxu0
    %v190 = vadd.f32 %v107, %v189
    %v191 = vpop.f32.mrf.mxu0
    %192 = vdwg.mxu0
    %v193 = vlaneseq
    %v194 = vshrl.u32 %v193, 7
    %v195 = vadd.s32 %v194, 8
    %vm196 = vcmp.ge.s32.totalorder %v194, %v65
    %vm197 = vcmp.ge.s32.totalorder %v195, %v65
    %v198 = vsel %vm196, 0.0, -1e+30
    %v199 = vsel %vm197, 0.0, -1e+30
    %v200 = vld [vmem:[%s3] sm:$0x1]
    %v201 = vld [vmem:[%s4] sm:$0x1]
    %vm202 = vcmask 261120
    %v203 = vsel %vm202, %v175, 0.0
    %204 = vadd.xlane.f32.xlu0 %v203
    %v205 = vpop.xlane.xlu0 %204
    %v206 = vsel %vm202, %v180, 0.0
    %207 = vadd.xlane.f32.xlu0 %v206
    %v208 = vpop.xlane.xlu0 %207
    %v209 = vsel %vm202, %v185, 0.0
    %210 = vadd.xlane.f32.xlu0 %v209
    %v211 = vpop.xlane.xlu0 %210
    %v212 = vsel %vm202, %v190, 0.0
    %213 = vadd.xlane.f32.xlu0 %v212
    %v214 = vpop.xlane.xlu0 %213
    %v215 = vrcp.pop 32.0
    %v216 = vmul.f32 %v205, %v215
    %v217 = vmul.f32 %v208, %v215
    %v218 = vmul.f32 %v211, %v215
    %v219 = vmul.f32 %v214, %v215
    %v220 = vsub.f32 %v175, %v216
    %v221 = vsub.f32 %v180, %v217
    %v222 = vsub.f32 %v185, %v218
    %v223 = vsub.f32 %v190, %v219
    %v224 = vmul.f32 %v220, %v220
    %v225 = vmul.f32 %v221, %v221
    %v226 = vmul.f32 %v222, %v222
    %v227 = vmul.f32 %v223, %v223
    %v228 = vsel %vm202, %v224, 0.0
    %229 = vadd.xlane.f32.xlu0 %v228
    %v230 = vpop.xlane.xlu0 %229
    %v231 = vsel %vm202, %v225, 0.0
    %232 = vadd.xlane.f32.xlu0 %v231
    %v233 = vpop.xlane.xlu0 %232
    %v234 = vsel %vm202, %v226, 0.0
    %235 = vadd.xlane.f32.xlu0 %v234
    %v236 = vpop.xlane.xlu0 %235
    %v237 = vsel %vm202, %v227, 0.0
    %238 = vadd.xlane.f32.xlu0 %v237
    %v239 = vpop.xlane.xlu0 %238
    %v240 = vmul.f32 %v230, %v215
    %v241 = vmul.f32 %v233, %v215
    %v242 = vmul.f32 %v236, %v215
    %v243 = vmul.f32 %v239, %v215
    %v244 = vadd.f32 %v240, 1e-05
    %v245 = vadd.f32 %v241, 1e-05
    %v246 = vadd.f32 %v242, 1e-05
    %v247 = vadd.f32 %v243, 1e-05
    %v248 = vrsqrt.pop %v244
    %v249 = vrsqrt.pop %v245
    %v250 = vrsqrt.pop %v246
    %v251 = vrsqrt.pop %v247
    %v252 = vmul.f32 %v220, %v248
    %v253 = vmul.f32 %v221, %v249
    %v254 = vmul.f32 %v222, %v250
    %v255 = vmul.f32 %v223, %v251
    %v257 = vlaneseq
    %v258 = vshrl.u32 %v257, 7
    %v259 = vsub.s32 0, %v258
    %v260 = vrot.slane %v200, %v259
    %v262 = vmul.f32 %v252, %v260
    %v263 = vmul.f32 %v253, %v260
    %v264 = vmul.f32 %v254, %v260
    %v265 = vmul.f32 %v255, %v260
    %v267 = vlaneseq
    %v268 = vshrl.u32 %v267, 7
    %v269 = vsub.s32 0, %v268
    %v270 = vrot.slane %v201, %v269
    %v272 = vadd.f32 %v262, %v270
    %v273 = vadd.f32 %v263, %v270
    %v274 = vadd.f32 %v264, %v270
    %v275 = vadd.f32 %v265, %v270
    %v276 = vld [vmem:[%s5] sm:$0xff]
    %v277 = vld [vmem:[%s5 + $0x8] sm:$0xff]
    %v278 = vld [vmem:[%s5 + $0x10] sm:$0xff]
    %v279 = vld [vmem:[%s5 + $0x18] sm:$0xff]
    %v281 = vsel %vm202, %v272, 0
    %v284 = vsel %vm202, %v273, 0
    %v287 = vsel %vm202, %v274, 0
    %v290 = vsel %vm202, %v275, 0
    %292 = vmatprep.subr.mxu0 0.0
    %293 = vmatpush1.msra.mxu0 0.0
    %294 = vmatprep.subr.mxu0 0.0
    %295 = vmatpush1.msra.mxu0 0.0
    %296 = vmatprep.subr.mxu0 0.0
    %297 = vmatpush1.msra.mxu0 0.0
    %298 = vmatprep.subr.mxu0 0.0
    %299 = vmatpush1.msra.mxu0 0.0
    %300 = vmatprep.subr.mxu0 0.0
    %301 = vmatpush1.msra.mxu0 0.0
    %302 = vmatprep.subr.mxu0 0.0
    %303 = vmatpush1.msra.mxu0 0.0
    %304 = vmatprep.subr.mxu0 0.0
    %305 = vmatpush1.msra.mxu0 0.0
    %306 = vmatprep.subr.mxu0 0.0
    %307 = vmatpush1.msra.mxu0 0.0
    %308 = vmatprep.subr.mxu0 0.0
    %309 = vmatpush1.msra.mxu0 0.0
    %310 = vmatprep.subr.mxu0 0.0
    %311 = vmatpush1.msra.mxu0 0.0
    %312 = vmatprep.subr.mxu0 0.0
    %313 = vmatpush1.msra.mxu0 0.0
    %314 = vmatprep.subr.mxu0 0.0
    %315 = vmatpush1.msra.mxu0 0.0
    %316 = vmatprep.subr.mxu0 0.0
    %317 = vmatpush1.msra.mxu0 %v279
    %318 = vmatprep.subr.mxu0 0.0
    %319 = vmatpush1.msra.mxu0 %v278
    %320 = vmatprep.subr.mxu0 0.0
    %321 = vmatpush1.msra.mxu0 %v277
    %322 = vmatprep.subr.mxu0 0.0
    %323 = vmatpush1.msra.mxu0 %v276
    %324 = vmatprep.subr.mxu0 0.0
    %325 = vmatpush2.msra.mxu0 0.0
    %326 = vmatprep.subr.mxu0 0.0
    %327 = vmatpush2.msra.mxu0 0.0
    %328 = vmatprep.subr.mxu0 0.0
    %329 = vmatpush2.msra.mxu0 0.0
    %330 = vmatprep.subr.mxu0 0.0
    %331 = vmatpush2.msra.mxu0 0.0
    %332 = vmatprep.subr.mxu0 0.0
    %333 = vmatpush2.msra.mxu0 0.0
    %334 = vmatprep.subr.mxu0 0.0
    %335 = vmatpush2.msra.mxu0 0.0
    %336 = vmatprep.subr.mxu0 0.0
    %337 = vmatpush2.msra.mxu0 0.0
    %338 = vmatprep.subr.mxu0 0.0
    %339 = vmatpush2.msra.mxu0 0.0
    %340 = vmatprep.subr.mxu0 0.0
    %341 = vmatpush2.msra.mxu0 0.0
    %342 = vmatprep.subr.mxu0 0.0
    %343 = vmatpush2.msra.mxu0 0.0
    %344 = vmatprep.subr.mxu0 0.0
    %345 = vmatpush2.msra.mxu0 0.0
    %346 = vmatprep.subr.mxu0 0.0
    %347 = vmatpush2.msra.mxu0 0.0
    %348 = vmatprep.subr.mxu0 0.0
    %349 = vmatpush2.msra.mxu0 0.0
    %350 = vmatprep.subr.mxu0 0.0
    %351 = vmatpush2.msra.mxu0 0.0
    %352 = vmatprep.subr.mxu0 0.0
    %353 = vmatpush2.msra.mxu0 0.0
    %354 = vmatprep.subr.mxu0 0.0
    %355 = vmatpush2.msra.mxu0 0.0
    %356 = vmatprep.mubr.f32.mxu0 0.0
    %357 = vmatmul.mubr.f32.gmra.mxu0 %v281
    %v358 = vpop.f32.mrf.mxu0
    %v359 = vadd.f32 0.0, %v358
    %v360 = vpop.f32.mrf.mxu0
    %361 = vmatprep.mubr.f32.mxu0 0.0
    %362 = vmatmul.mubr.f32.gmra.mxu0 %v284
    %v363 = vpop.f32.mrf.mxu0
    %v364 = vadd.f32 0.0, %v363
    %v365 = vpop.f32.mrf.mxu0
    %366 = vmatprep.mubr.f32.mxu0 0.0
    %367 = vmatmul.mubr.f32.gmra.mxu0 %v287
    %v368 = vpop.f32.mrf.mxu0
    %v369 = vadd.f32 0.0, %v368
    %v370 = vpop.f32.mrf.mxu0
    %371 = vmatprep.mubr.f32.mxu0 0.0
    %372 = vmatmul.mubr.f32.gmra.mxu0 %v290
    %v373 = vpop.f32.mrf.mxu0
    %v374 = vadd.f32 0.0, %v373
    %v375 = vpop.f32.mrf.mxu0
    %376 = vdwg.mxu0
    %v377 = vmul.f32 %v359, 0.17677669
    %v378 = vmul.f32 %v364, 0.17677669
    %v379 = vmul.f32 %v369, 0.17677669
    %v380 = vmul.f32 %v374, 0.17677669
    %383 = vrot.lane.b32.xlu0 %v359, 96
    %v384 = vpop.permute.xlu0 %383
    %385 = vrot.lane.b32.xlu0 %v364, 96
    %v386 = vpop.permute.xlu0 %385
    %vm387 = vcmask 64512
    %v389 = vsel %vm387, %v377, 0
    %v392 = vsel %vm387, %v378, 0
    %v394 = vsel %vm387, %v384, 0
    %v396 = vsel %vm387, %v386, 0
    %398 = vmatprep.subr.mxu0 0.0
    %399 = vmatpush1.xpose.msra.mxu0 0.0
    %400 = vmatprep.subr.mxu0 0.0
    %401 = vmatpush1.xpose.msra.mxu0 0.0
    %402 = vmatprep.subr.mxu0 0.0
    %403 = vmatpush1.xpose.msra.mxu0 0.0
    %404 = vmatprep.subr.mxu0 0.0
    %405 = vmatpush1.xpose.msra.mxu0 0.0
    %406 = vmatprep.subr.mxu0 0.0
    %407 = vmatpush1.xpose.msra.mxu0 0.0
    %408 = vmatprep.subr.mxu0 0.0
    %409 = vmatpush1.xpose.msra.mxu0 0.0
    %410 = vmatprep.subr.mxu0 0.0
    %411 = vmatpush1.xpose.msra.mxu0 0.0
    %412 = vmatprep.subr.mxu0 0.0
    %413 = vmatpush1.xpose.msra.mxu0 0.0
    %414 = vmatprep.subr.mxu0 0.0
    %415 = vmatpush1.xpose.msra.mxu0 0.0
    %416 = vmatprep.subr.mxu0 0.0
    %417 = vmatpush1.xpose.msra.mxu0 0.0
    %418 = vmatprep.subr.mxu0 0.0
    %419 = vmatpush1.xpose.msra.mxu0 0.0
    %420 = vmatprep.subr.mxu0 0.0
    %421 = vmatpush1.xpose.msra.mxu0 0.0
    %422 = vmatprep.subr.mxu0 0.0
    %423 = vmatpush1.xpose.msra.mxu0 0.0
    %424 = vmatprep.subr.mxu0 0.0
    %425 = vmatpush1.xpose.msra.mxu0 0.0
    %426 = vmatprep.subr.mxu0 0.0
    %427 = vmatpush1.xpose.msra.mxu0 %v396
    %428 = vmatprep.subr.mxu0 0.0
    %429 = vmatpush1.xpose.msra.mxu0 %v394
    %430 = vmatprep.subr.mxu0 0.0
    %431 = vmatpush2.xpose.msra.mxu0 0.0
    %432 = vmatprep.subr.mxu0 0.0
    %433 = vmatpush2.xpose.msra.mxu0 0.0
    %434 = vmatprep.subr.mxu0 0.0
    %435 = vmatpush2.xpose.msra.mxu0 0.0
    %436 = vmatprep.subr.mxu0 0.0
    %437 = vmatpush2.xpose.msra.mxu0 0.0
    %438 = vmatprep.subr.mxu0 0.0
    %439 = vmatpush2.xpose.msra.mxu0 0.0
    %440 = vmatprep.subr.mxu0 0.0
    %441 = vmatpush2.xpose.msra.mxu0 0.0
    %442 = vmatprep.subr.mxu0 0.0
    %443 = vmatpush2.xpose.msra.mxu0 0.0
    %444 = vmatprep.subr.mxu0 0.0
    %445 = vmatpush2.xpose.msra.mxu0 0.0
    %446 = vmatprep.subr.mxu0 0.0
    %447 = vmatpush2.xpose.msra.mxu0 0.0
    %448 = vmatprep.subr.mxu0 0.0
    %449 = vmatpush2.xpose.msra.mxu0 0.0
    %450 = vmatprep.subr.mxu0 0.0
    %451 = vmatpush2.xpose.msra.mxu0 0.0
    %452 = vmatprep.subr.mxu0 0.0
    %453 = vmatpush2.xpose.msra.mxu0 0.0
    %454 = vmatprep.subr.mxu0 0.0
    %455 = vmatpush2.xpose.msra.mxu0 0.0
    %456 = vmatprep.subr.mxu0 0.0
    %457 = vmatpush2.xpose.msra.mxu0 0.0
    %458 = vmatprep.subr.mxu0 0.0
    %459 = vmatpush2.xpose.msra.mxu0 0.0
    %460 = vmatprep.subr.mxu0 0.0
    %461 = vmatpush2.xpose.msra.mxu0 0.0
    %462 = vmatprep.mubr.f32.mxu0 0.0
    %463 = vmatmul.mubr.f32.gmra.mxu0 %v389
    %v464 = vpop.f32.mrf.mxu0
    %v465 = vadd.f32 %v198, %v464
    %v466 = vpop.f32.mrf.mxu0
    %467 = vmatprep.mubr.f32.mxu0 0.0
    %468 = vmatmul.mubr.f32.gmra.mxu0 %v392
    %v469 = vpop.f32.mrf.mxu0
    %v470 = vadd.f32 %v199, %v469
    %v471 = vpop.f32.mrf.mxu0
    %472 = vdwg.mxu0
    %vm473 = vcmask 130048
    %v474 = vsel %vm473, %v465, -inf
    %475 = vmax.xlane.f32.xlu0 %v474
    %v476 = vpop.xlane.xlu0 %475
    %v477 = vsel %vm473, %v470, -inf
    %478 = vmax.xlane.f32.xlu0 %v477
    %v479 = vpop.xlane.xlu0 %478
    %v480 = vsub.f32 %v465, %v476
    %v481 = vsub.f32 %v470, %v479
    %482 = vrot.lane.b32.xlu0 %v377, 120
    %v483 = vpop.permute.xlu0 %482
    %484 = vrot.lane.b32.xlu0 %v378, 120
    %v485 = vpop.permute.xlu0 %484
    %486 = vrot.lane.b32.xlu0 %v359, 88
    %v487 = vpop.permute.xlu0 %486
    %488 = vrot.lane.b32.xlu0 %v364, 88
    %v489 = vpop.permute.xlu0 %488
    %v490 = vsel %vm387, %v483, 0
    %v492 = vsel %vm387, %v485, 0
    %v494 = vsel %vm387, %v487, 0
    %v496 = vsel %vm387, %v489, 0
    %498 = vmatprep.subr.mxu0 0.0
    %499 = vmatpush1.xpose.msra.mxu0 0.0
    %500 = vmatprep.subr.mxu0 0.0
    %501 = vmatpush1.xpose.msra.mxu0 0.0
    %502 = vmatprep.subr.mxu0 0.0
    %503 = vmatpush1.xpose.msra.mxu0 0.0
    %504 = vmatprep.subr.mxu0 0.0
    %505 = vmatpush1.xpose.msra.mxu0 0.0
    %506 = vmatprep.subr.mxu0 0.0
    %507 = vmatpush1.xpose.msra.mxu0 0.0
    %508 = vmatprep.subr.mxu0 0.0
    %509 = vmatpush1.xpose.msra.mxu0 0.0
    %510 = vmatprep.subr.mxu0 0.0
    %511 = vmatpush1.xpose.msra.mxu0 0.0
    %512 = vmatprep.subr.mxu0 0.0
    %513 = vmatpush1.xpose.msra.mxu0 0.0
    %514 = vmatprep.subr.mxu0 0.0
    %515 = vmatpush1.xpose.msra.mxu0 0.0
    %516 = vmatprep.subr.mxu0 0.0
    %517 = vmatpush1.xpose.msra.mxu0 0.0
    %518 = vmatprep.subr.mxu0 0.0
    %519 = vmatpush1.xpose.msra.mxu0 0.0
    %520 = vmatprep.subr.mxu0 0.0
    %521 = vmatpush1.xpose.msra.mxu0 0.0
    %522 = vmatprep.subr.mxu0 0.0
    %523 = vmatpush1.xpose.msra.mxu0 0.0
    %524 = vmatprep.subr.mxu0 0.0
    %525 = vmatpush1.xpose.msra.mxu0 0.0
    %526 = vmatprep.subr.mxu0 0.0
    %527 = vmatpush1.xpose.msra.mxu0 %v496
    %528 = vmatprep.subr.mxu0 0.0
    %529 = vmatpush1.xpose.msra.mxu0 %v494
    %530 = vmatprep.subr.mxu0 0.0
    %531 = vmatpush2.xpose.msra.mxu0 0.0
    %532 = vmatprep.subr.mxu0 0.0
    %533 = vmatpush2.xpose.msra.mxu0 0.0
    %534 = vmatprep.subr.mxu0 0.0
    %535 = vmatpush2.xpose.msra.mxu0 0.0
    %536 = vmatprep.subr.mxu0 0.0
    %537 = vmatpush2.xpose.msra.mxu0 0.0
    %538 = vmatprep.subr.mxu0 0.0
    %539 = vmatpush2.xpose.msra.mxu0 0.0
    %540 = vmatprep.subr.mxu0 0.0
    %541 = vmatpush2.xpose.msra.mxu0 0.0
    %542 = vmatprep.subr.mxu0 0.0
    %543 = vmatpush2.xpose.msra.mxu0 0.0
    %544 = vmatprep.subr.mxu0 0.0
    %545 = vmatpush2.xpose.msra.mxu0 0.0
    %546 = vmatprep.subr.mxu0 0.0
    %547 = vmatpush2.xpose.msra.mxu0 0.0
    %548 = vmatprep.subr.mxu0 0.0
    %549 = vmatpush2.xpose.msra.mxu0 0.0
    %550 = vmatprep.subr.mxu0 0.0
    %551 = vmatpush2.xpose.msra.mxu0 0.0
    %552 = vmatprep.subr.mxu0 0.0
    %553 = vmatpush2.xpose.msra.mxu0 0.0
    %554 = vmatprep.subr.mxu0 0.0
    %555 = vmatpush2.xpose.msra.mxu0 0.0
    %556 = vmatprep.subr.mxu0 0.0
    %557 = vmatpush2.xpose.msra.mxu0 0.0
    %558 = vmatprep.subr.mxu0 0.0
    %559 = vmatpush2.xpose.msra.mxu0 0.0
    %560 = vmatprep.subr.mxu0 0.0
    %561 = vmatpush2.xpose.msra.mxu0 0.0
    %562 = vmatprep.mubr.f32.mxu0 0.0
    %563 = vmatmul.mubr.f32.gmra.mxu0 %v490
    %v564 = vpop.f32.mrf.mxu0
    %v565 = vadd.f32 %v198, %v564
    %v566 = vpop.f32.mrf.mxu0
    %567 = vmatprep.mubr.f32.mxu0 0.0
    %568 = vmatmul.mubr.f32.gmra.mxu0 %v492
    %v569 = vpop.f32.mrf.mxu0
    %v570 = vadd.f32 %v199, %v569
    %v571 = vpop.f32.mrf.mxu0
    %572 = vdwg.mxu0
    %v573 = vsel %vm473, %v565, -inf
    %574 = vmax.xlane.f32.xlu0 %v573
    %v575 = vpop.xlane.xlu0 %574
    %v576 = vsel %vm473, %v570, -inf
    %577 = vmax.xlane.f32.xlu0 %v576
    %v578 = vpop.xlane.xlu0 %577
    %v579 = vsub.f32 %v565, %v575
    %v580 = vsub.f32 %v570, %v578
    %581 = vrot.lane.b32.xlu0 %v377, 112
    %v582 = vpop.permute.xlu0 %581
    %583 = vrot.lane.b32.xlu0 %v378, 112
    %v584 = vpop.permute.xlu0 %583
    %585 = vrot.lane.b32.xlu0 %v359, 80
    %v586 = vpop.permute.xlu0 %585
    %587 = vrot.lane.b32.xlu0 %v364, 80
    %v588 = vpop.permute.xlu0 %587
    %v589 = vsel %vm387, %v582, 0
    %v591 = vsel %vm387, %v584, 0
    %v593 = vsel %vm387, %v586, 0
    %v595 = vsel %vm387, %v588, 0
    %597 = vmatprep.subr.mxu0 0.0
    %598 = vmatpush1.xpose.msra.mxu0 0.0
    %599 = vmatprep.subr.mxu0 0.0
    %600 = vmatpush1.xpose.msra.mxu0 0.0
    %601 = vmatprep.subr.mxu0 0.0
    %602 = vmatpush1.xpose.msra.mxu0 0.0
    %603 = vmatprep.subr.mxu0 0.0
    %604 = vmatpush1.xpose.msra.mxu0 0.0
    %605 = vmatprep.subr.mxu0 0.0
    %606 = vmatpush1.xpose.msra.mxu0 0.0
    %607 = vmatprep.subr.mxu0 0.0
    %608 = vmatpush1.xpose.msra.mxu0 0.0
    %609 = vmatprep.subr.mxu0 0.0
    %610 = vmatpush1.xpose.msra.mxu0 0.0
    %611 = vmatprep.subr.mxu0 0.0
    %612 = vmatpush1.xpose.msra.mxu0 0.0
    %613 = vmatprep.subr.mxu0 0.0
    %614 = vmatpush1.xpose.msra.mxu0 0.0
    %615 = vmatprep.subr.mxu0 0.0
    %616 = vmatpush1.xpose.msra.mxu0 0.0
    %617 = vmatprep.subr.mxu0 0.0
    %618 = vmatpush1.xpose.msra.mxu0 0.0
    %619 = vmatprep.subr.mxu0 0.0
    %620 = vmatpush1.xpose.msra.mxu0 0.0
    %621 = vmatprep.subr.mxu0 0.0
    %622 = vmatpush1.xpose.msra.mxu0 0.0
    %623 = vmatprep.subr.mxu0 0.0
    %624 = vmatpush1.xpose.msra.mxu0 0.0
    %625 = vmatprep.subr.mxu0 0.0
    %626 = vmatpush1.xpose.msra.mxu0 %v595
    %627 = vmatprep.subr.mxu0 0.0
    %628 = vmatpush1.xpose.msra.mxu0 %v593
    %629 = vmatprep.subr.mxu0 0.0
    %630 = vmatpush2.xpose.msra.mxu0 0.0
    %631 = vmatprep.subr.mxu0 0.0
    %632 = vmatpush2.xpose.msra.mxu0 0.0
    %633 = vmatprep.subr.mxu0 0.0
    %634 = vmatpush2.xpose.msra.mxu0 0.0
    %635 = vmatprep.subr.mxu0 0.0
    %636 = vmatpush2.xpose.msra.mxu0 0.0
    %637 = vmatprep.subr.mxu0 0.0
    %638 = vmatpush2.xpose.msra.mxu0 0.0
    %639 = vmatprep.subr.mxu0 0.0
    %640 = vmatpush2.xpose.msra.mxu0 0.0
    %641 = vmatprep.subr.mxu0 0.0
    %642 = vmatpush2.xpose.msra.mxu0 0.0
    %643 = vmatprep.subr.mxu0 0.0
    %644 = vmatpush2.xpose.msra.mxu0 0.0
    %645 = vmatprep.subr.mxu0 0.0
    %646 = vmatpush2.xpose.msra.mxu0 0.0
    %647 = vmatprep.subr.mxu0 0.0
    %648 = vmatpush2.xpose.msra.mxu0 0.0
    %649 = vmatprep.subr.mxu0 0.0
    %650 = vmatpush2.xpose.msra.mxu0 0.0
    %651 = vmatprep.subr.mxu0 0.0
    %652 = vmatpush2.xpose.msra.mxu0 0.0
    %653 = vmatprep.subr.mxu0 0.0
    %654 = vmatpush2.xpose.msra.mxu0 0.0
    %655 = vmatprep.subr.mxu0 0.0
    %656 = vmatpush2.xpose.msra.mxu0 0.0
    %657 = vmatprep.subr.mxu0 0.0
    %658 = vmatpush2.xpose.msra.mxu0 0.0
    %659 = vmatprep.subr.mxu0 0.0
    %660 = vmatpush2.xpose.msra.mxu0 0.0
    %661 = vmatprep.mubr.f32.mxu0 0.0
    %662 = vmatmul.mubr.f32.gmra.mxu0 %v589
    %v663 = vpop.f32.mrf.mxu0
    %v664 = vadd.f32 %v198, %v663
    %v665 = vpop.f32.mrf.mxu0
    %666 = vmatprep.mubr.f32.mxu0 0.0
    %667 = vmatmul.mubr.f32.gmra.mxu0 %v591
    %v668 = vpop.f32.mrf.mxu0
    %v669 = vadd.f32 %v199, %v668
    %v670 = vpop.f32.mrf.mxu0
    %671 = vdwg.mxu0
    %v672 = vsel %vm473, %v664, -inf
    %673 = vmax.xlane.f32.xlu0 %v672
    %v674 = vpop.xlane.xlu0 %673
    %v675 = vsel %vm473, %v669, -inf
    %676 = vmax.xlane.f32.xlu0 %v675
    %v677 = vpop.xlane.xlu0 %676
    %v678 = vsub.f32 %v664, %v674
    %v679 = vsub.f32 %v669, %v677
    %680 = vrot.lane.b32.xlu0 %v377, 104
    %v681 = vpop.permute.xlu0 %680
    %682 = vrot.lane.b32.xlu0 %v378, 104
    %v683 = vpop.permute.xlu0 %682
    %684 = vrot.lane.b32.xlu0 %v359, 72
    %v685 = vpop.permute.xlu0 %684
    %686 = vrot.lane.b32.xlu0 %v364, 72
    %v687 = vpop.permute.xlu0 %686
    %v688 = vsel %vm387, %v681, 0
    %v690 = vsel %vm387, %v683, 0
    %v692 = vsel %vm387, %v685, 0
    %v694 = vsel %vm387, %v687, 0
    %696 = vmatprep.subr.mxu0 0.0
    %697 = vmatpush1.xpose.msra.mxu0 0.0
    %698 = vmatprep.subr.mxu0 0.0
    %699 = vmatpush1.xpose.msra.mxu0 0.0
    %700 = vmatprep.subr.mxu0 0.0
    %701 = vmatpush1.xpose.msra.mxu0 0.0
    %702 = vmatprep.subr.mxu0 0.0
    %703 = vmatpush1.xpose.msra.mxu0 0.0
    %704 = vmatprep.subr.mxu0 0.0
    %705 = vmatpush1.xpose.msra.mxu0 0.0
    %706 = vmatprep.subr.mxu0 0.0
    %707 = vmatpush1.xpose.msra.mxu0 0.0
    %708 = vmatprep.subr.mxu0 0.0
    %709 = vmatpush1.xpose.msra.mxu0 0.0
    %710 = vmatprep.subr.mxu0 0.0
    %711 = vmatpush1.xpose.msra.mxu0 0.0
    %712 = vmatprep.subr.mxu0 0.0
    %713 = vmatpush1.xpose.msra.mxu0 0.0
    %714 = vmatprep.subr.mxu0 0.0
    %715 = vmatpush1.xpose.msra.mxu0 0.0
    %716 = vmatprep.subr.mxu0 0.0
    %717 = vmatpush1.xpose.msra.mxu0 0.0
    %718 = vmatprep.subr.mxu0 0.0
    %719 = vmatpush1.xpose.msra.mxu0 0.0
    %720 = vmatprep.subr.mxu0 0.0
    %721 = vmatpush1.xpose.msra.mxu0 0.0
    %722 = vmatprep.subr.mxu0 0.0
    %723 = vmatpush1.xpose.msra.mxu0 0.0
    %724 = vmatprep.subr.mxu0 0.0
    %725 = vmatpush1.xpose.msra.mxu0 %v694
    %726 = vmatprep.subr.mxu0 0.0
    %727 = vmatpush1.xpose.msra.mxu0 %v692
    %728 = vmatprep.subr.mxu0 0.0
    %729 = vmatpush2.xpose.msra.mxu0 0.0
    %730 = vmatprep.subr.mxu0 0.0
    %731 = vmatpush2.xpose.msra.mxu0 0.0
    %732 = vmatprep.subr.mxu0 0.0
    %733 = vmatpush2.xpose.msra.mxu0 0.0
    %734 = vmatprep.subr.mxu0 0.0
    %735 = vmatpush2.xpose.msra.mxu0 0.0
    %736 = vmatprep.subr.mxu0 0.0
    %737 = vmatpush2.xpose.msra.mxu0 0.0
    %738 = vmatprep.subr.mxu0 0.0
    %739 = vmatpush2.xpose.msra.mxu0 0.0
    %740 = vmatprep.subr.mxu0 0.0
    %741 = vmatpush2.xpose.msra.mxu0 0.0
    %742 = vmatprep.subr.mxu0 0.0
    %743 = vmatpush2.xpose.msra.mxu0 0.0
    %744 = vmatprep.subr.mxu0 0.0
    %745 = vmatpush2.xpose.msra.mxu0 0.0
    %746 = vmatprep.subr.mxu0 0.0
    %747 = vmatpush2.xpose.msra.mxu0 0.0
    %748 = vmatprep.subr.mxu0 0.0
    %749 = vmatpush2.xpose.msra.mxu0 0.0
    %750 = vmatprep.subr.mxu0 0.0
    %751 = vmatpush2.xpose.msra.mxu0 0.0
    %752 = vmatprep.subr.mxu0 0.0
    %753 = vmatpush2.xpose.msra.mxu0 0.0
    %754 = vmatprep.subr.mxu0 0.0
    %755 = vmatpush2.xpose.msra.mxu0 0.0
    %756 = vmatprep.subr.mxu0 0.0
    %757 = vmatpush2.xpose.msra.mxu0 0.0
    %758 = vmatprep.subr.mxu0 0.0
    %759 = vmatpush2.xpose.msra.mxu0 0.0
    %760 = vmatprep.mubr.f32.mxu0 0.0
    %761 = vmatmul.mubr.f32.gmra.mxu0 %v688
    %v762 = vpop.f32.mrf.mxu0
    %v763 = vadd.f32 %v198, %v762
    %v764 = vpop.f32.mrf.mxu0
    %765 = vmatprep.mubr.f32.mxu0 0.0
    %766 = vmatmul.mubr.f32.gmra.mxu0 %v690
    %v767 = vpop.f32.mrf.mxu0
    %v768 = vadd.f32 %v199, %v767
    %v769 = vpop.f32.mrf.mxu0
    %770 = vdwg.mxu0
    %v771 = vsel %vm473, %v763, -inf
    %772 = vmax.xlane.f32.xlu0 %v771
    %v773 = vpop.xlane.xlu0 %772
    %v774 = vsel %vm473, %v768, -inf
    %775 = vmax.xlane.f32.xlu0 %v774
    %v776 = vpop.xlane.xlu0 %775
    %v777 = vsub.f32 %v763, %v773
    %v778 = vsub.f32 %v768, %v776
    %781 = vrot.lane.b32.xlu0 %v579, 16
    %v782 = vpop.permute.xlu0 %781
    %783 = vrot.lane.b32.xlu0 %v580, 16
    %v784 = vpop.permute.xlu0 %783
    %789 = vrot.lane.b32.xlu0 %v678, 32
    %v790 = vpop.permute.xlu0 %789
    %791 = vrot.lane.b32.xlu0 %v679, 32
    %v792 = vpop.permute.xlu0 %791
    %797 = vrot.lane.b32.xlu0 %v777, 48
    %v798 = vpop.permute.xlu0 %797
    %799 = vrot.lane.b32.xlu0 %v778, 48
    %v800 = vpop.permute.xlu0 %799
    %v803 = vsel %vm473, %v480, %v782
    %v804 = vsel %vm473, %v481, %v784
    %v805 = vsel %vm202, %v803, %v790
    %v806 = vsel %vm202, %v804, %v792
    %vm807 = vcmask 392192
    %v808 = vsel %vm807, %v805, %v798
    %v809 = vsel %vm807, %v806, %v800
    %v810 = vmul.f32 %v808, 1.442695
    %v811 = vpow.pop %v810
    %v812 = vmul.f32 %v809, 1.442695
    %v813 = vpow.pop %v812
    %v814 = vsel %vm473, %v811, 0.0
    %815 = vadd.xlane.f32.xlu0 %v814
    %v816 = vpop.xlane.xlu0 %815
    %v817 = vsel %vm473, %v813, 0.0
    %818 = vadd.xlane.f32.xlu0 %v817
    %v819 = vpop.xlane.xlu0 %818
    %v820 = vrcp.pop %v816
    %v821 = vrcp.pop %v819
    %v822 = vmul.f32 %v811, %v820
    %v823 = vmul.f32 %v813, %v821
    %824 = vrot.lane.b32.xlu0 %v359, 64
    %v825 = vpop.permute.xlu0 %824
    %826 = vrot.lane.b32.xlu0 %v364, 64
    %v827 = vpop.permute.xlu0 %826
    %v831 = vsel %vm473, %v822, 0
    %v834 = vsel %vm473, %v823, 0
    %836 = vmatprep.subr.mxu0 0.0
    %837 = vmatpush1.msra.mxu0 0.0
    %838 = vmatprep.subr.mxu0 0.0
    %839 = vmatpush1.msra.mxu0 0.0
    %840 = vmatprep.subr.mxu0 0.0
    %841 = vmatpush1.msra.mxu0 0.0
    %842 = vmatprep.subr.mxu0 0.0
    %843 = vmatpush1.msra.mxu0 0.0
    %844 = vmatprep.subr.mxu0 0.0
    %845 = vmatpush1.msra.mxu0 0.0
    %846 = vmatprep.subr.mxu0 0.0
    %847 = vmatpush1.msra.mxu0 0.0
    %848 = vmatprep.subr.mxu0 0.0
    %849 = vmatpush1.msra.mxu0 0.0
    %850 = vmatprep.subr.mxu0 0.0
    %851 = vmatpush1.msra.mxu0 0.0
    %852 = vmatprep.subr.mxu0 0.0
    %853 = vmatpush1.msra.mxu0 0.0
    %854 = vmatprep.subr.mxu0 0.0
    %855 = vmatpush1.msra.mxu0 0.0
    %856 = vmatprep.subr.mxu0 0.0
    %857 = vmatpush1.msra.mxu0 0.0
    %858 = vmatprep.subr.mxu0 0.0
    %859 = vmatpush1.msra.mxu0 0.0
    %860 = vmatprep.subr.mxu0 0.0
    %861 = vmatpush1.msra.mxu0 0.0
    %862 = vmatprep.subr.mxu0 0.0
    %863 = vmatpush1.msra.mxu0 0.0
    %864 = vmatprep.subr.mxu0 0.0
    %865 = vmatpush1.msra.mxu0 %v827
    %866 = vmatprep.subr.mxu0 0.0
    %867 = vmatpush1.msra.mxu0 %v825
    %868 = vmatprep.subr.mxu0 0.0
    %869 = vmatpush2.msra.mxu0 0.0
    %870 = vmatprep.subr.mxu0 0.0
    %871 = vmatpush2.msra.mxu0 0.0
    %872 = vmatprep.subr.mxu0 0.0
    %873 = vmatpush2.msra.mxu0 0.0
    %874 = vmatprep.subr.mxu0 0.0
    %875 = vmatpush2.msra.mxu0 0.0
    %876 = vmatprep.subr.mxu0 0.0
    %877 = vmatpush2.msra.mxu0 0.0
    %878 = vmatprep.subr.mxu0 0.0
    %879 = vmatpush2.msra.mxu0 0.0
    %880 = vmatprep.subr.mxu0 0.0
    %881 = vmatpush2.msra.mxu0 0.0
    %882 = vmatprep.subr.mxu0 0.0
    %883 = vmatpush2.msra.mxu0 0.0
    %884 = vmatprep.subr.mxu0 0.0
    %885 = vmatpush2.msra.mxu0 0.0
    %886 = vmatprep.subr.mxu0 0.0
    %887 = vmatpush2.msra.mxu0 0.0
    %888 = vmatprep.subr.mxu0 0.0
    %889 = vmatpush2.msra.mxu0 0.0
    %890 = vmatprep.subr.mxu0 0.0
    %891 = vmatpush2.msra.mxu0 0.0
    %892 = vmatprep.subr.mxu0 0.0
    %893 = vmatpush2.msra.mxu0 0.0
    %894 = vmatprep.subr.mxu0 0.0
    %895 = vmatpush2.msra.mxu0 0.0
    %896 = vmatprep.subr.mxu0 0.0
    %897 = vmatpush2.msra.mxu0 0.0
    %898 = vmatprep.subr.mxu0 0.0
    %899 = vmatpush2.msra.mxu0 0.0
    %900 = vmatprep.mubr.f32.mxu0 0.0
    %901 = vmatmul.mubr.f32.gmra.mxu0 %v831
    %v902 = vpop.f32.mrf.mxu0
    %v903 = vadd.f32 0.0, %v902
    %v904 = vpop.f32.mrf.mxu0
    %905 = vmatprep.mubr.f32.mxu0 0.0
    %906 = vmatmul.mubr.f32.gmra.mxu0 %v834
    %v907 = vpop.f32.mrf.mxu0
    %v908 = vadd.f32 0.0, %v907
    %v909 = vpop.f32.mrf.mxu0
    %910 = vdwg.mxu0
    %913 = vrot.lane.b32.xlu0 %v811, 112
    %v914 = vpop.permute.xlu0 %913
    %915 = vrot.lane.b32.xlu0 %v813, 112
    %v916 = vpop.permute.xlu0 %915
    %v919 = vsel %vm473, %v914, 0.0
    %920 = vadd.xlane.f32.xlu0 %v919
    %v921 = vpop.xlane.xlu0 %920
    %v922 = vsel %vm473, %v916, 0.0
    %923 = vadd.xlane.f32.xlu0 %v922
    %v924 = vpop.xlane.xlu0 %923
    %v925 = vrcp.pop %v921
    %v926 = vrcp.pop %v924
    %v927 = vmul.f32 %v811, %v925
    %v928 = vmul.f32 %v813, %v926
    %931 = vrot.lane.b32.xlu0 %v927, 112
    %v932 = vpop.permute.xlu0 %931
    %933 = vrot.lane.b32.xlu0 %v928, 112
    %v934 = vpop.permute.xlu0 %933
    %935 = vrot.lane.b32.xlu0 %v359, 56
    %v936 = vpop.permute.xlu0 %935
    %937 = vrot.lane.b32.xlu0 %v364, 56
    %v938 = vpop.permute.xlu0 %937
    %v941 = vsel %vm473, %v932, 0
    %v943 = vsel %vm473, %v934, 0
    %945 = vmatprep.subr.mxu0 0.0
    %946 = vmatpush1.msra.mxu0 0.0
    %947 = vmatprep.subr.mxu0 0.0
    %948 = vmatpush1.msra.mxu0 0.0
    %949 = vmatprep.subr.mxu0 0.0
    %950 = vmatpush1.msra.mxu0 0.0
    %951 = vmatprep.subr.mxu0 0.0
    %952 = vmatpush1.msra.mxu0 0.0
    %953 = vmatprep.subr.mxu0 0.0
    %954 = vmatpush1.msra.mxu0 0.0
    %955 = vmatprep.subr.mxu0 0.0
    %956 = vmatpush1.msra.mxu0 0.0
    %957 = vmatprep.subr.mxu0 0.0
    %958 = vmatpush1.msra.mxu0 0.0
    %959 = vmatprep.subr.mxu0 0.0
    %960 = vmatpush1.msra.mxu0 0.0
    %961 = vmatprep.subr.mxu0 0.0
    %962 = vmatpush1.msra.mxu0 0.0
    %963 = vmatprep.subr.mxu0 0.0
    %964 = vmatpush1.msra.mxu0 0.0
    %965 = vmatprep.subr.mxu0 0.0
    %966 = vmatpush1.msra.mxu0 0.0
    %967 = vmatprep.subr.mxu0 0.0
    %968 = vmatpush1.msra.mxu0 0.0
    %969 = vmatprep.subr.mxu0 0.0
    %970 = vmatpush1.msra.mxu0 0.0
    %971 = vmatprep.subr.mxu0 0.0
    %972 = vmatpush1.msra.mxu0 0.0
    %973 = vmatprep.subr.mxu0 0.0
    %974 = vmatpush1.msra.mxu0 %v938
    %975 = vmatprep.subr.mxu0 0.0
    %976 = vmatpush1.msra.mxu0 %v936
    %977 = vmatprep.subr.mxu0 0.0
    %978 = vmatpush2.msra.mxu0 0.0
    %979 = vmatprep.subr.mxu0 0.0
    %980 = vmatpush2.msra.mxu0 0.0
    %981 = vmatprep.subr.mxu0 0.0
    %982 = vmatpush2.msra.mxu0 0.0
    %983 = vmatprep.subr.mxu0 0.0
    %984 = vmatpush2.msra.mxu0 0.0
    %985 = vmatprep.subr.mxu0 0.0
    %986 = vmatpush2.msra.mxu0 0.0
    %987 = vmatprep.subr.mxu0 0.0
    %988 = vmatpush2.msra.mxu0 0.0
    %989 = vmatprep.subr.mxu0 0.0
    %990 = vmatpush2.msra.mxu0 0.0
    %991 = vmatprep.subr.mxu0 0.0
    %992 = vmatpush2.msra.mxu0 0.0
    %993 = vmatprep.subr.mxu0 0.0
    %994 = vmatpush2.msra.mxu0 0.0
    %995 = vmatprep.subr.mxu0 0.0
    %996 = vmatpush2.msra.mxu0 0.0
    %997 = vmatprep.subr.mxu0 0.0
    %998 = vmatpush2.msra.mxu0 0.0
    %999 = vmatprep.subr.mxu0 0.0
    %1000 = vmatpush2.msra.mxu0 0.0
    %1001 = vmatprep.subr.mxu0 0.0
    %1002 = vmatpush2.msra.mxu0 0.0
    %1003 = vmatprep.subr.mxu0 0.0
    %1004 = vmatpush2.msra.mxu0 0.0
    %1005 = vmatprep.subr.mxu0 0.0
    %1006 = vmatpush2.msra.mxu0 0.0
    %1007 = vmatprep.subr.mxu0 0.0
    %1008 = vmatpush2.msra.mxu0 0.0
    %1009 = vmatprep.mubr.f32.mxu0 0.0
    %1010 = vmatmul.mubr.f32.gmra.mxu0 %v941
    %v1011 = vpop.f32.mrf.mxu0
    %v1012 = vadd.f32 0.0, %v1011
    %v1013 = vpop.f32.mrf.mxu0
    %1014 = vmatprep.mubr.f32.mxu0 0.0
    %1015 = vmatmul.mubr.f32.gmra.mxu0 %v943
    %v1016 = vpop.f32.mrf.mxu0
    %v1017 = vadd.f32 0.0, %v1016
    %v1018 = vpop.f32.mrf.mxu0
    %1019 = vdwg.mxu0
    %1020 = vrot.lane.b32.xlu0 %v811, 96
    %v1021 = vpop.permute.xlu0 %1020
    %1022 = vrot.lane.b32.xlu0 %v813, 96
    %v1023 = vpop.permute.xlu0 %1022
    %v1026 = vsel %vm473, %v1021, 0.0
    %1027 = vadd.xlane.f32.xlu0 %v1026
    %v1028 = vpop.xlane.xlu0 %1027
    %v1029 = vsel %vm473, %v1023, 0.0
    %1030 = vadd.xlane.f32.xlu0 %v1029
    %v1031 = vpop.xlane.xlu0 %1030
    %v1032 = vrcp.pop %v1028
    %v1033 = vrcp.pop %v1031
    %v1034 = vmul.f32 %v811, %v1032
    %v1035 = vmul.f32 %v813, %v1033
    %1038 = vrot.lane.b32.xlu0 %v1034, 96
    %v1039 = vpop.permute.xlu0 %1038
    %1040 = vrot.lane.b32.xlu0 %v1035, 96
    %v1041 = vpop.permute.xlu0 %1040
    %1042 = vrot.lane.b32.xlu0 %v359, 48
    %v1043 = vpop.permute.xlu0 %1042
    %1044 = vrot.lane.b32.xlu0 %v364, 48
    %v1045 = vpop.permute.xlu0 %1044
    %v1048 = vsel %vm473, %v1039, 0
    %v1050 = vsel %vm473, %v1041, 0
    %1052 = vmatprep.subr.mxu0 0.0
    %1053 = vmatpush1.msra.mxu0 0.0
    %1054 = vmatprep.subr.mxu0 0.0
    %1055 = vmatpush1.msra.mxu0 0.0
    %1056 = vmatprep.subr.mxu0 0.0
    %1057 = vmatpush1.msra.mxu0 0.0
    %1058 = vmatprep.subr.mxu0 0.0
    %1059 = vmatpush1.msra.mxu0 0.0
    %1060 = vmatprep.subr.mxu0 0.0
    %1061 = vmatpush1.msra.mxu0 0.0
    %1062 = vmatprep.subr.mxu0 0.0
    %1063 = vmatpush1.msra.mxu0 0.0
    %1064 = vmatprep.subr.mxu0 0.0
    %1065 = vmatpush1.msra.mxu0 0.0
    %1066 = vmatprep.subr.mxu0 0.0
    %1067 = vmatpush1.msra.mxu0 0.0
    %1068 = vmatprep.subr.mxu0 0.0
    %1069 = vmatpush1.msra.mxu0 0.0
    %1070 = vmatprep.subr.mxu0 0.0
    %1071 = vmatpush1.msra.mxu0 0.0
    %1072 = vmatprep.subr.mxu0 0.0
    %1073 = vmatpush1.msra.mxu0 0.0
    %1074 = vmatprep.subr.mxu0 0.0
    %1075 = vmatpush1.msra.mxu0 0.0
    %1076 = vmatprep.subr.mxu0 0.0
    %1077 = vmatpush1.msra.mxu0 0.0
    %1078 = vmatprep.subr.mxu0 0.0
    %1079 = vmatpush1.msra.mxu0 0.0
    %1080 = vmatprep.subr.mxu0 0.0
    %1081 = vmatpush1.msra.mxu0 %v1045
    %1082 = vmatprep.subr.mxu0 0.0
    %1083 = vmatpush1.msra.mxu0 %v1043
    %1084 = vmatprep.subr.mxu0 0.0
    %1085 = vmatpush2.msra.mxu0 0.0
    %1086 = vmatprep.subr.mxu0 0.0
    %1087 = vmatpush2.msra.mxu0 0.0
    %1088 = vmatprep.subr.mxu0 0.0
    %1089 = vmatpush2.msra.mxu0 0.0
    %1090 = vmatprep.subr.mxu0 0.0
    %1091 = vmatpush2.msra.mxu0 0.0
    %1092 = vmatprep.subr.mxu0 0.0
    %1093 = vmatpush2.msra.mxu0 0.0
    %1094 = vmatprep.subr.mxu0 0.0
    %1095 = vmatpush2.msra.mxu0 0.0
    %1096 = vmatprep.subr.mxu0 0.0
    %1097 = vmatpush2.msra.mxu0 0.0
    %1098 = vmatprep.subr.mxu0 0.0
    %1099 = vmatpush2.msra.mxu0 0.0
    %1100 = vmatprep.subr.mxu0 0.0
    %1101 = vmatpush2.msra.mxu0 0.0
    %1102 = vmatprep.subr.mxu0 0.0
    %1103 = vmatpush2.msra.mxu0 0.0
    %1104 = vmatprep.subr.mxu0 0.0
    %1105 = vmatpush2.msra.mxu0 0.0
    %1106 = vmatprep.subr.mxu0 0.0
    %1107 = vmatpush2.msra.mxu0 0.0
    %1108 = vmatprep.subr.mxu0 0.0
    %1109 = vmatpush2.msra.mxu0 0.0
    %1110 = vmatprep.subr.mxu0 0.0
    %1111 = vmatpush2.msra.mxu0 0.0
    %1112 = vmatprep.subr.mxu0 0.0
    %1113 = vmatpush2.msra.mxu0 0.0
    %1114 = vmatprep.subr.mxu0 0.0
    %1115 = vmatpush2.msra.mxu0 0.0
    %1116 = vmatprep.mubr.f32.mxu0 0.0
    %1117 = vmatmul.mubr.f32.gmra.mxu0 %v1048
    %v1118 = vpop.f32.mrf.mxu0
    %v1119 = vadd.f32 0.0, %v1118
    %v1120 = vpop.f32.mrf.mxu0
    %1121 = vmatprep.mubr.f32.mxu0 0.0
    %1122 = vmatmul.mubr.f32.gmra.mxu0 %v1050
    %v1123 = vpop.f32.mrf.mxu0
    %v1124 = vadd.f32 0.0, %v1123
    %v1125 = vpop.f32.mrf.mxu0
    %1126 = vdwg.mxu0
    %1127 = vrot.lane.b32.xlu0 %v811, 80
    %v1128 = vpop.permute.xlu0 %1127
    %1129 = vrot.lane.b32.xlu0 %v813, 80
    %v1130 = vpop.permute.xlu0 %1129
    %v1133 = vsel %vm473, %v1128, 0.0
    %1134 = vadd.xlane.f32.xlu0 %v1133
    %v1135 = vpop.xlane.xlu0 %1134
    %v1136 = vsel %vm473, %v1130, 0.0
    %1137 = vadd.xlane.f32.xlu0 %v1136
    %v1138 = vpop.xlane.xlu0 %1137
    %v1139 = vrcp.pop %v1135
    %v1140 = vrcp.pop %v1138
    %v1141 = vmul.f32 %v811, %v1139
    %v1142 = vmul.f32 %v813, %v1140
    %1145 = vrot.lane.b32.xlu0 %v1141, 80
    %v1146 = vpop.permute.xlu0 %1145
    %1147 = vrot.lane.b32.xlu0 %v1142, 80
    %v1148 = vpop.permute.xlu0 %1147
    %1149 = vrot.lane.b32.xlu0 %v359, 40
    %v1150 = vpop.permute.xlu0 %1149
    %1151 = vrot.lane.b32.xlu0 %v364, 40
    %v1152 = vpop.permute.xlu0 %1151
    %v1155 = vsel %vm473, %v1146, 0
    %v1157 = vsel %vm473, %v1148, 0
    %1159 = vmatprep.subr.mxu0 0.0
    %1160 = vmatpush1.msra.mxu0 0.0
    %1161 = vmatprep.subr.mxu0 0.0
    %1162 = vmatpush1.msra.mxu0 0.0
    %1163 = vmatprep.subr.mxu0 0.0
    %1164 = vmatpush1.msra.mxu0 0.0
    %1165 = vmatprep.subr.mxu0 0.0
    %1166 = vmatpush1.msra.mxu0 0.0
    %1167 = vmatprep.subr.mxu0 0.0
    %1168 = vmatpush1.msra.mxu0 0.0
    %1169 = vmatprep.subr.mxu0 0.0
    %1170 = vmatpush1.msra.mxu0 0.0
    %1171 = vmatprep.subr.mxu0 0.0
    %1172 = vmatpush1.msra.mxu0 0.0
    %1173 = vmatprep.subr.mxu0 0.0
    %1174 = vmatpush1.msra.mxu0 0.0
    %1175 = vmatprep.subr.mxu0 0.0
    %1176 = vmatpush1.msra.mxu0 0.0
    %1177 = vmatprep.subr.mxu0 0.0
    %1178 = vmatpush1.msra.mxu0 0.0
    %1179 = vmatprep.subr.mxu0 0.0
    %1180 = vmatpush1.msra.mxu0 0.0
    %1181 = vmatprep.subr.mxu0 0.0
    %1182 = vmatpush1.msra.mxu0 0.0
    %1183 = vmatprep.subr.mxu0 0.0
    %1184 = vmatpush1.msra.mxu0 0.0
    %1185 = vmatprep.subr.mxu0 0.0
    %1186 = vmatpush1.msra.mxu0 0.0
    %1187 = vmatprep.subr.mxu0 0.0
    %1188 = vmatpush1.msra.mxu0 %v1152
    %1189 = vmatprep.subr.mxu0 0.0
    %1190 = vmatpush1.msra.mxu0 %v1150
    %1191 = vmatprep.subr.mxu0 0.0
    %1192 = vmatpush2.msra.mxu0 0.0
    %1193 = vmatprep.subr.mxu0 0.0
    %1194 = vmatpush2.msra.mxu0 0.0
    %1195 = vmatprep.subr.mxu0 0.0
    %1196 = vmatpush2.msra.mxu0 0.0
    %1197 = vmatprep.subr.mxu0 0.0
    %1198 = vmatpush2.msra.mxu0 0.0
    %1199 = vmatprep.subr.mxu0 0.0
    %1200 = vmatpush2.msra.mxu0 0.0
    %1201 = vmatprep.subr.mxu0 0.0
    %1202 = vmatpush2.msra.mxu0 0.0
    %1203 = vmatprep.subr.mxu0 0.0
    %1204 = vmatpush2.msra.mxu0 0.0
    %1205 = vmatprep.subr.mxu0 0.0
    %1206 = vmatpush2.msra.mxu0 0.0
    %1207 = vmatprep.subr.mxu0 0.0
    %1208 = vmatpush2.msra.mxu0 0.0
    %1209 = vmatprep.subr.mxu0 0.0
    %1210 = vmatpush2.msra.mxu0 0.0
    %1211 = vmatprep.subr.mxu0 0.0
    %1212 = vmatpush2.msra.mxu0 0.0
    %1213 = vmatprep.subr.mxu0 0.0
    %1214 = vmatpush2.msra.mxu0 0.0
    %1215 = vmatprep.subr.mxu0 0.0
    %1216 = vmatpush2.msra.mxu0 0.0
    %1217 = vmatprep.subr.mxu0 0.0
    %1218 = vmatpush2.msra.mxu0 0.0
    %1219 = vmatprep.subr.mxu0 0.0
    %1220 = vmatpush2.msra.mxu0 0.0
    %1221 = vmatprep.subr.mxu0 0.0
    %1222 = vmatpush2.msra.mxu0 0.0
    %1223 = vmatprep.mubr.f32.mxu0 0.0
    %1224 = vmatmul.mubr.f32.gmra.mxu0 %v1155
    %v1225 = vpop.f32.mrf.mxu0
    %v1226 = vadd.f32 0.0, %v1225
    %v1227 = vpop.f32.mrf.mxu0
    %1228 = vmatprep.mubr.f32.mxu0 0.0
    %1229 = vmatmul.mubr.f32.gmra.mxu0 %v1157
    %v1230 = vpop.f32.mrf.mxu0
    %v1231 = vadd.f32 0.0, %v1230
    %v1232 = vpop.f32.mrf.mxu0
    %1233 = vdwg.mxu0
    %1236 = vrot.lane.b32.xlu0 %v1012, 8
    %v1237 = vpop.permute.xlu0 %1236
    %1238 = vrot.lane.b32.xlu0 %v1017, 8
    %v1239 = vpop.permute.xlu0 %1238
    %1244 = vrot.lane.b32.xlu0 %v1119, 16
    %v1245 = vpop.permute.xlu0 %1244
    %1246 = vrot.lane.b32.xlu0 %v1124, 16
    %v1247 = vpop.permute.xlu0 %1246
    %1252 = vrot.lane.b32.xlu0 %v1226, 24
    %v1253 = vpop.permute.xlu0 %1252
    %1254 = vrot.lane.b32.xlu0 %v1231, 24
    %v1255 = vpop.permute.xlu0 %1254
    %v1258 = vsel %vm387, %v903, %v1237
    %v1259 = vsel %vm387, %v908, %v1239
    %v1260 = vsel %vm473, %v1258, %v1245
    %v1261 = vsel %vm473, %v1259, %v1247
    %vm1262 = vcmask 195584
    %v1263 = vsel %vm1262, %v1260, %v1253
    %v1264 = vsel %vm1262, %v1261, %v1255
    %1267 = vrot.lane.b32.xlu0 %v369, 96
    %v1268 = vpop.permute.xlu0 %1267
    %1269 = vrot.lane.b32.xlu0 %v374, 96
    %v1270 = vpop.permute.xlu0 %1269
    %v1272 = vsel %vm387, %v379, 0
    %v1275 = vsel %vm387, %v380, 0
    %v1277 = vsel %vm387, %v1268, 0
    %v1279 = vsel %vm387, %v1270, 0
    %1281 = vmatprep.subr.mxu0 0.0
    %1282 = vmatpush1.xpose.msra.mxu0 0.0
    %1283 = vmatprep.subr.mxu0 0.0
    %1284 = vmatpush1.xpose.msra.mxu0 0.0
    %1285 = vmatprep.subr.mxu0 0.0
    %1286 = vmatpush1.xpose.msra.mxu0 0.0
    %1287 = vmatprep.subr.mxu0 0.0
    %1288 = vmatpush1.xpose.msra.mxu0 0.0
    %1289 = vmatprep.subr.mxu0 0.0
    %1290 = vmatpush1.xpose.msra.mxu0 0.0
    %1291 = vmatprep.subr.mxu0 0.0
    %1292 = vmatpush1.xpose.msra.mxu0 0.0
    %1293 = vmatprep.subr.mxu0 0.0
    %1294 = vmatpush1.xpose.msra.mxu0 0.0
    %1295 = vmatprep.subr.mxu0 0.0
    %1296 = vmatpush1.xpose.msra.mxu0 0.0
    %1297 = vmatprep.subr.mxu0 0.0
    %1298 = vmatpush1.xpose.msra.mxu0 0.0
    %1299 = vmatprep.subr.mxu0 0.0
    %1300 = vmatpush1.xpose.msra.mxu0 0.0
    %1301 = vmatprep.subr.mxu0 0.0
    %1302 = vmatpush1.xpose.msra.mxu0 0.0
    %1303 = vmatprep.subr.mxu0 0.0
    %1304 = vmatpush1.xpose.msra.mxu0 0.0
    %1305 = vmatprep.subr.mxu0 0.0
    %1306 = vmatpush1.xpose.msra.mxu0 0.0
    %1307 = vmatprep.subr.mxu0 0.0
    %1308 = vmatpush1.xpose.msra.mxu0 0.0
    %1309 = vmatprep.subr.mxu0 0.0
    %1310 = vmatpush1.xpose.msra.mxu0 %v1279
    %1311 = vmatprep.subr.mxu0 0.0
    %1312 = vmatpush1.xpose.msra.mxu0 %v1277
    %1313 = vmatprep.subr.mxu0 0.0
    %1314 = vmatpush2.xpose.msra.mxu0 0.0
    %1315 = vmatprep.subr.mxu0 0.0
    %1316 = vmatpush2.xpose.msra.mxu0 0.0
    %1317 = vmatprep.subr.mxu0 0.0
    %1318 = vmatpush2.xpose.msra.mxu0 0.0
    %1319 = vmatprep.subr.mxu0 0.0
    %1320 = vmatpush2.xpose.msra.mxu0 0.0
    %1321 = vmatprep.subr.mxu0 0.0
    %1322 = vmatpush2.xpose.msra.mxu0 0.0
    %1323 = vmatprep.subr.mxu0 0.0
    %1324 = vmatpush2.xpose.msra.mxu0 0.0
    %1325 = vmatprep.subr.mxu0 0.0
    %1326 = vmatpush2.xpose.msra.mxu0 0.0
    %1327 = vmatprep.subr.mxu0 0.0
    %1328 = vmatpush2.xpose.msra.mxu0 0.0
    %1329 = vmatprep.subr.mxu0 0.0
    %1330 = vmatpush2.xpose.msra.mxu0 0.0
    %1331 = vmatprep.subr.mxu0 0.0
    %1332 = vmatpush2.xpose.msra.mxu0 0.0
    %1333 = vmatprep.subr.mxu0 0.0
    %1334 = vmatpush2.xpose.msra.mxu0 0.0
    %1335 = vmatprep.subr.mxu0 0.0
    %1336 = vmatpush2.xpose.msra.mxu0 0.0
    %1337 = vmatprep.subr.mxu0 0.0
    %1338 = vmatpush2.xpose.msra.mxu0 0.0
    %1339 = vmatprep.subr.mxu0 0.0
    %1340 = vmatpush2.xpose.msra.mxu0 0.0
    %1341 = vmatprep.subr.mxu0 0.0
    %1342 = vmatpush2.xpose.msra.mxu0 0.0
    %1343 = vmatprep.subr.mxu0 0.0
    %1344 = vmatpush2.xpose.msra.mxu0 0.0
    %1345 = vmatprep.mubr.f32.mxu0 0.0
    %1346 = vmatmul.mubr.f32.gmra.mxu0 %v1272
    %v1347 = vpop.f32.mrf.mxu0
    %v1348 = vadd.f32 %v198, %v1347
    %v1349 = vpop.f32.mrf.mxu0
    %1350 = vmatprep.mubr.f32.mxu0 0.0
    %1351 = vmatmul.mubr.f32.gmra.mxu0 %v1275
    %v1352 = vpop.f32.mrf.mxu0
    %v1353 = vadd.f32 %v199, %v1352
    %v1354 = vpop.f32.mrf.mxu0
    %1355 = vdwg.mxu0
    %v1356 = vsel %vm473, %v1348, -inf
    %1357 = vmax.xlane.f32.xlu0 %v1356
    %v1358 = vpop.xlane.xlu0 %1357
    %v1359 = vsel %vm473, %v1353, -inf
    %1360 = vmax.xlane.f32.xlu0 %v1359
    %v1361 = vpop.xlane.xlu0 %1360
    %v1362 = vsub.f32 %v1348, %v1358
    %v1363 = vsub.f32 %v1353, %v1361
    %1364 = vrot.lane.b32.xlu0 %v379, 120
    %v1365 = vpop.permute.xlu0 %1364
    %1366 = vrot.lane.b32.xlu0 %v380, 120
    %v1367 = vpop.permute.xlu0 %1366
    %1368 = vrot.lane.b32.xlu0 %v369, 88
    %v1369 = vpop.permute.xlu0 %1368
    %1370 = vrot.lane.b32.xlu0 %v374, 88
    %v1371 = vpop.permute.xlu0 %1370
    %v1372 = vsel %vm387, %v1365, 0
    %v1374 = vsel %vm387, %v1367, 0
    %v1376 = vsel %vm387, %v1369, 0
    %v1378 = vsel %vm387, %v1371, 0
    %1380 = vmatprep.subr.mxu0 0.0
    %1381 = vmatpush1.xpose.msra.mxu0 0.0
    %1382 = vmatprep.subr.mxu0 0.0
    %1383 = vmatpush1.xpose.msra.mxu0 0.0
    %1384 = vmatprep.subr.mxu0 0.0
    %1385 = vmatpush1.xpose.msra.mxu0 0.0
    %1386 = vmatprep.subr.mxu0 0.0
    %1387 = vmatpush1.xpose.msra.mxu0 0.0
    %1388 = vmatprep.subr.mxu0 0.0
    %1389 = vmatpush1.xpose.msra.mxu0 0.0
    %1390 = vmatprep.subr.mxu0 0.0
    %1391 = vmatpush1.xpose.msra.mxu0 0.0
    %1392 = vmatprep.subr.mxu0 0.0
    %1393 = vmatpush1.xpose.msra.mxu0 0.0
    %1394 = vmatprep.subr.mxu0 0.0
    %1395 = vmatpush1.xpose.msra.mxu0 0.0
    %1396 = vmatprep.subr.mxu0 0.0
    %1397 = vmatpush1.xpose.msra.mxu0 0.0
    %1398 = vmatprep.subr.mxu0 0.0
    %1399 = vmatpush1.xpose.msra.mxu0 0.0
    %1400 = vmatprep.subr.mxu0 0.0
    %1401 = vmatpush1.xpose.msra.mxu0 0.0
    %1402 = vmatprep.subr.mxu0 0.0
    %1403 = vmatpush1.xpose.msra.mxu0 0.0
    %1404 = vmatprep.subr.mxu0 0.0
    %1405 = vmatpush1.xpose.msra.mxu0 0.0
    %1406 = vmatprep.subr.mxu0 0.0
    %1407 = vmatpush1.xpose.msra.mxu0 0.0
    %1408 = vmatprep.subr.mxu0 0.0
    %1409 = vmatpush1.xpose.msra.mxu0 %v1378
    %1410 = vmatprep.subr.mxu0 0.0
    %1411 = vmatpush1.xpose.msra.mxu0 %v1376
    %1412 = vmatprep.subr.mxu0 0.0
    %1413 = vmatpush2.xpose.msra.mxu0 0.0
    %1414 = vmatprep.subr.mxu0 0.0
    %1415 = vmatpush2.xpose.msra.mxu0 0.0
    %1416 = vmatprep.subr.mxu0 0.0
    %1417 = vmatpush2.xpose.msra.mxu0 0.0
    %1418 = vmatprep.subr.mxu0 0.0
    %1419 = vmatpush2.xpose.msra.mxu0 0.0
    %1420 = vmatprep.subr.mxu0 0.0
    %1421 = vmatpush2.xpose.msra.mxu0 0.0
    %1422 = vmatprep.subr.mxu0 0.0
    %1423 = vmatpush2.xpose.msra.mxu0 0.0
    %1424 = vmatprep.subr.mxu0 0.0
    %1425 = vmatpush2.xpose.msra.mxu0 0.0
    %1426 = vmatprep.subr.mxu0 0.0
    %1427 = vmatpush2.xpose.msra.mxu0 0.0
    %1428 = vmatprep.subr.mxu0 0.0
    %1429 = vmatpush2.xpose.msra.mxu0 0.0
    %1430 = vmatprep.subr.mxu0 0.0
    %1431 = vmatpush2.xpose.msra.mxu0 0.0
    %1432 = vmatprep.subr.mxu0 0.0
    %1433 = vmatpush2.xpose.msra.mxu0 0.0
    %1434 = vmatprep.subr.mxu0 0.0
    %1435 = vmatpush2.xpose.msra.mxu0 0.0
    %1436 = vmatprep.subr.mxu0 0.0
    %1437 = vmatpush2.xpose.msra.mxu0 0.0
    %1438 = vmatprep.subr.mxu0 0.0
    %1439 = vmatpush2.xpose.msra.mxu0 0.0
    %1440 = vmatprep.subr.mxu0 0.0
    %1441 = vmatpush2.xpose.msra.mxu0 0.0
    %1442 = vmatprep.subr.mxu0 0.0
    %1443 = vmatpush2.xpose.msra.mxu0 0.0
    %1444 = vmatprep.mubr.f32.mxu0 0.0
    %1445 = vmatmul.mubr.f32.gmra.mxu0 %v1372
    %v1446 = vpop.f32.mrf.mxu0
    %v1447 = vadd.f32 %v198, %v1446
    %v1448 = vpop.f32.mrf.mxu0
    %1449 = vmatprep.mubr.f32.mxu0 0.0
    %1450 = vmatmul.mubr.f32.gmra.mxu0 %v1374
    %v1451 = vpop.f32.mrf.mxu0
    %v1452 = vadd.f32 %v199, %v1451
    %v1453 = vpop.f32.mrf.mxu0
    %1454 = vdwg.mxu0
    %v1455 = vsel %vm473, %v1447, -inf
    %1456 = vmax.xlane.f32.xlu0 %v1455
    %v1457 = vpop.xlane.xlu0 %1456
    %v1458 = vsel %vm473, %v1452, -inf
    %1459 = vmax.xlane.f32.xlu0 %v1458
    %v1460 = vpop.xlane.xlu0 %1459
    %v1461 = vsub.f32 %v1447, %v1457
    %v1462 = vsub.f32 %v1452, %v1460
    %1463 = vrot.lane.b32.xlu0 %v379, 112
    %v1464 = vpop.permute.xlu0 %1463
    %1465 = vrot.lane.b32.xlu0 %v380, 112
    %v1466 = vpop.permute.xlu0 %1465
    %1467 = vrot.lane.b32.xlu0 %v369, 80
    %v1468 = vpop.permute.xlu0 %1467
    %1469 = vrot.lane.b32.xlu0 %v374, 80
    %v1470 = vpop.permute.xlu0 %1469
    %v1471 = vsel %vm387, %v1464, 0
    %v1473 = vsel %vm387, %v1466, 0
    %v1475 = vsel %vm387, %v1468, 0
    %v1477 = vsel %vm387, %v1470, 0
    %1479 = vmatprep.subr.mxu0 0.0
    %1480 = vmatpush1.xpose.msra.mxu0 0.0
    %1481 = vmatprep.subr.mxu0 0.0
    %1482 = vmatpush1.xpose.msra.mxu0 0.0
    %1483 = vmatprep.subr.mxu0 0.0
    %1484 = vmatpush1.xpose.msra.mxu0 0.0
    %1485 = vmatprep.subr.mxu0 0.0
    %1486 = vmatpush1.xpose.msra.mxu0 0.0
    %1487 = vmatprep.subr.mxu0 0.0
    %1488 = vmatpush1.xpose.msra.mxu0 0.0
    %1489 = vmatprep.subr.mxu0 0.0
    %1490 = vmatpush1.xpose.msra.mxu0 0.0
    %1491 = vmatprep.subr.mxu0 0.0
    %1492 = vmatpush1.xpose.msra.mxu0 0.0
    %1493 = vmatprep.subr.mxu0 0.0
    %1494 = vmatpush1.xpose.msra.mxu0 0.0
    %1495 = vmatprep.subr.mxu0 0.0
    %1496 = vmatpush1.xpose.msra.mxu0 0.0
    %1497 = vmatprep.subr.mxu0 0.0
    %1498 = vmatpush1.xpose.msra.mxu0 0.0
    %1499 = vmatprep.subr.mxu0 0.0
    %1500 = vmatpush1.xpose.msra.mxu0 0.0
    %1501 = vmatprep.subr.mxu0 0.0
    %1502 = vmatpush1.xpose.msra.mxu0 0.0
    %1503 = vmatprep.subr.mxu0 0.0
    %1504 = vmatpush1.xpose.msra.mxu0 0.0
    %1505 = vmatprep.subr.mxu0 0.0
    %1506 = vmatpush1.xpose.msra.mxu0 0.0
    %1507 = vmatprep.subr.mxu0 0.0
    %1508 = vmatpush1.xpose.msra.mxu0 %v1477
    %1509 = vmatprep.subr.mxu0 0.0
    %1510 = vmatpush1.xpose.msra.mxu0 %v1475
    %1511 = vmatprep.subr.mxu0 0.0
    %1512 = vmatpush2.xpose.msra.mxu0 0.0
    %1513 = vmatprep.subr.mxu0 0.0
    %1514 = vmatpush2.xpose.msra.mxu0 0.0
    %1515 = vmatprep.subr.mxu0 0.0
    %1516 = vmatpush2.xpose.msra.mxu0 0.0
    %1517 = vmatprep.subr.mxu0 0.0
    %1518 = vmatpush2.xpose.msra.mxu0 0.0
    %1519 = vmatprep.subr.mxu0 0.0
    %1520 = vmatpush2.xpose.msra.mxu0 0.0
    %1521 = vmatprep.subr.mxu0 0.0
    %1522 = vmatpush2.xpose.msra.mxu0 0.0
    %1523 = vmatprep.subr.mxu0 0.0
    %1524 = vmatpush2.xpose.msra.mxu0 0.0
    %1525 = vmatprep.subr.mxu0 0.0
    %1526 = vmatpush2.xpose.msra.mxu0 0.0
    %1527 = vmatprep.subr.mxu0 0.0
    %1528 = vmatpush2.xpose.msra.mxu0 0.0
    %1529 = vmatprep.subr.mxu0 0.0
    %1530 = vmatpush2.xpose.msra.mxu0 0.0
    %1531 = vmatprep.subr.mxu0 0.0
    %1532 = vmatpush2.xpose.msra.mxu0 0.0
    %1533 = vmatprep.subr.mxu0 0.0
    %1534 = vmatpush2.xpose.msra.mxu0 0.0
    %1535 = vmatprep.subr.mxu0 0.0
    %1536 = vmatpush2.xpose.msra.mxu0 0.0
    %1537 = vmatprep.subr.mxu0 0.0
    %1538 = vmatpush2.xpose.msra.mxu0 0.0
    %1539 = vmatprep.subr.mxu0 0.0
    %1540 = vmatpush2.xpose.msra.mxu0 0.0
    %1541 = vmatprep.subr.mxu0 0.0
    %1542 = vmatpush2.xpose.msra.mxu0 0.0
    %1543 = vmatprep.mubr.f32.mxu0 0.0
    %1544 = vmatmul.mubr.f32.gmra.mxu0 %v1471
    %v1545 = vpop.f32.mrf.mxu0
    %v1546 = vadd.f32 %v198, %v1545
    %v1547 = vpop.f32.mrf.mxu0
    %1548 = vmatprep.mubr.f32.mxu0 0.0
    %1549 = vmatmul.mubr.f32.gmra.mxu0 %v1473
    %v1550 = vpop.f32.mrf.mxu0
    %v1551 = vadd.f32 %v199, %v1550
    %v1552 = vpop.f32.mrf.mxu0
    %1553 = vdwg.mxu0
    %v1554 = vsel %vm473, %v1546, -inf
    %1555 = vmax.xlane.f32.xlu0 %v1554
    %v1556 = vpop.xlane.xlu0 %1555
    %v1557 = vsel %vm473, %v1551, -inf
    %1558 = vmax.xlane.f32.xlu0 %v1557
    %v1559 = vpop.xlane.xlu0 %1558
    %v1560 = vsub.f32 %v1546, %v1556
    %v1561 = vsub.f32 %v1551, %v1559
    %1562 = vrot.lane.b32.xlu0 %v379, 104
    %v1563 = vpop.permute.xlu0 %1562
    %1564 = vrot.lane.b32.xlu0 %v380, 104
    %v1565 = vpop.permute.xlu0 %1564
    %1566 = vrot.lane.b32.xlu0 %v369, 72
    %v1567 = vpop.permute.xlu0 %1566
    %1568 = vrot.lane.b32.xlu0 %v374, 72
    %v1569 = vpop.permute.xlu0 %1568
    %v1570 = vsel %vm387, %v1563, 0
    %v1572 = vsel %vm387, %v1565, 0
    %v1574 = vsel %vm387, %v1567, 0
    %v1576 = vsel %vm387, %v1569, 0
    %1578 = vmatprep.subr.mxu0 0.0
    %1579 = vmatpush1.xpose.msra.mxu0 0.0
    %1580 = vmatprep.subr.mxu0 0.0
    %1581 = vmatpush1.xpose.msra.mxu0 0.0
    %1582 = vmatprep.subr.mxu0 0.0
    %1583 = vmatpush1.xpose.msra.mxu0 0.0
    %1584 = vmatprep.subr.mxu0 0.0
    %1585 = vmatpush1.xpose.msra.mxu0 0.0
    %1586 = vmatprep.subr.mxu0 0.0
    %1587 = vmatpush1.xpose.msra.mxu0 0.0
    %1588 = vmatprep.subr.mxu0 0.0
    %1589 = vmatpush1.xpose.msra.mxu0 0.0
    %1590 = vmatprep.subr.mxu0 0.0
    %1591 = vmatpush1.xpose.msra.mxu0 0.0
    %1592 = vmatprep.subr.mxu0 0.0
    %1593 = vmatpush1.xpose.msra.mxu0 0.0
    %1594 = vmatprep.subr.mxu0 0.0
    %1595 = vmatpush1.xpose.msra.mxu0 0.0
    %1596 = vmatprep.subr.mxu0 0.0
    %1597 = vmatpush1.xpose.msra.mxu0 0.0
    %1598 = vmatprep.subr.mxu0 0.0
    %1599 = vmatpush1.xpose.msra.mxu0 0.0
    %1600 = vmatprep.subr.mxu0 0.0
    %1601 = vmatpush1.xpose.msra.mxu0 0.0
    %1602 = vmatprep.subr.mxu0 0.0
    %1603 = vmatpush1.xpose.msra.mxu0 0.0
    %1604 = vmatprep.subr.mxu0 0.0
    %1605 = vmatpush1.xpose.msra.mxu0 0.0
    %1606 = vmatprep.subr.mxu0 0.0
    %1607 = vmatpush1.xpose.msra.mxu0 %v1576
    %1608 = vmatprep.subr.mxu0 0.0
    %1609 = vmatpush1.xpose.msra.mxu0 %v1574
    %1610 = vmatprep.subr.mxu0 0.0
    %1611 = vmatpush2.xpose.msra.mxu0 0.0
    %1612 = vmatprep.subr.mxu0 0.0
    %1613 = vmatpush2.xpose.msra.mxu0 0.0
    %1614 = vmatprep.subr.mxu0 0.0
    %1615 = vmatpush2.xpose.msra.mxu0 0.0
    %1616 = vmatprep.subr.mxu0 0.0
    %1617 = vmatpush2.xpose.msra.mxu0 0.0
    %1618 = vmatprep.subr.mxu0 0.0
    %1619 = vmatpush2.xpose.msra.mxu0 0.0
    %1620 = vmatprep.subr.mxu0 0.0
    %1621 = vmatpush2.xpose.msra.mxu0 0.0
    %1622 = vmatprep.subr.mxu0 0.0
    %1623 = vmatpush2.xpose.msra.mxu0 0.0
    %1624 = vmatprep.subr.mxu0 0.0
    %1625 = vmatpush2.xpose.msra.mxu0 0.0
    %1626 = vmatprep.subr.mxu0 0.0
    %1627 = vmatpush2.xpose.msra.mxu0 0.0
    %1628 = vmatprep.subr.mxu0 0.0
    %1629 = vmatpush2.xpose.msra.mxu0 0.0
    %1630 = vmatprep.subr.mxu0 0.0
    %1631 = vmatpush2.xpose.msra.mxu0 0.0
    %1632 = vmatprep.subr.mxu0 0.0
    %1633 = vmatpush2.xpose.msra.mxu0 0.0
    %1634 = vmatprep.subr.mxu0 0.0
    %1635 = vmatpush2.xpose.msra.mxu0 0.0
    %1636 = vmatprep.subr.mxu0 0.0
    %1637 = vmatpush2.xpose.msra.mxu0 0.0
    %1638 = vmatprep.subr.mxu0 0.0
    %1639 = vmatpush2.xpose.msra.mxu0 0.0
    %1640 = vmatprep.subr.mxu0 0.0
    %1641 = vmatpush2.xpose.msra.mxu0 0.0
    %1642 = vmatprep.mubr.f32.mxu0 0.0
    %1643 = vmatmul.mubr.f32.gmra.mxu0 %v1570
    %v1644 = vpop.f32.mrf.mxu0
    %v1645 = vadd.f32 %v198, %v1644
    %v1646 = vpop.f32.mrf.mxu0
    %1647 = vmatprep.mubr.f32.mxu0 0.0
    %1648 = vmatmul.mubr.f32.gmra.mxu0 %v1572
    %v1649 = vpop.f32.mrf.mxu0
    %v1650 = vadd.f32 %v199, %v1649
    %v1651 = vpop.f32.mrf.mxu0
    %1652 = vdwg.mxu0
    %v1653 = vsel %vm473, %v1645, -inf
    %1654 = vmax.xlane.f32.xlu0 %v1653
    %v1655 = vpop.xlane.xlu0 %1654
    %v1656 = vsel %vm473, %v1650, -inf
    %1657 = vmax.xlane.f32.xlu0 %v1656
    %v1658 = vpop.xlane.xlu0 %1657
    %v1659 = vsub.f32 %v1645, %v1655
    %v1660 = vsub.f32 %v1650, %v1658
    %1663 = vrot.lane.b32.xlu0 %v1461, 16
    %v1664 = vpop.permute.xlu0 %1663
    %1665 = vrot.lane.b32.xlu0 %v1462, 16
    %v1666 = vpop.permute.xlu0 %1665
    %1671 = vrot.lane.b32.xlu0 %v1560, 32
    %v1672 = vpop.permute.xlu0 %1671
    %1673 = vrot.lane.b32.xlu0 %v1561, 32
    %v1674 = vpop.permute.xlu0 %1673
    %1679 = vrot.lane.b32.xlu0 %v1659, 48
    %v1680 = vpop.permute.xlu0 %1679
    %1681 = vrot.lane.b32.xlu0 %v1660, 48
    %v1682 = vpop.permute.xlu0 %1681
    %v1685 = vsel %vm473, %v1362, %v1664
    %v1686 = vsel %vm473, %v1363, %v1666
    %v1687 = vsel %vm202, %v1685, %v1672
    %v1688 = vsel %vm202, %v1686, %v1674
    %v1689 = vsel %vm807, %v1687, %v1680
    %v1690 = vsel %vm807, %v1688, %v1682
    %v1691 = vmul.f32 %v1689, 1.442695
    %v1692 = vpow.pop %v1691
    %v1693 = vmul.f32 %v1690, 1.442695
    %v1694 = vpow.pop %v1693
    %v1695 = vsel %vm473, %v1692, 0.0
    %1696 = vadd.xlane.f32.xlu0 %v1695
    %v1697 = vpop.xlane.xlu0 %1696
    %v1698 = vsel %vm473, %v1694, 0.0
    %1699 = vadd.xlane.f32.xlu0 %v1698
    %v1700 = vpop.xlane.xlu0 %1699
    %v1701 = vrcp.pop %v1697
    %v1702 = vrcp.pop %v1700
    %v1703 = vmul.f32 %v1692, %v1701
    %v1704 = vmul.f32 %v1694, %v1702
    %1705 = vrot.lane.b32.xlu0 %v369, 64
    %v1706 = vpop.permute.xlu0 %1705
    %1707 = vrot.lane.b32.xlu0 %v374, 64
    %v1708 = vpop.permute.xlu0 %1707
    %v1712 = vsel %vm473, %v1703, 0
    %v1715 = vsel %vm473, %v1704, 0
    %1717 = vmatprep.subr.mxu0 0.0
    %1718 = vmatpush1.msra.mxu0 0.0
    %1719 = vmatprep.subr.mxu0 0.0
    %1720 = vmatpush1.msra.mxu0 0.0
    %1721 = vmatprep.subr.mxu0 0.0
    %1722 = vmatpush1.msra.mxu0 0.0
    %1723 = vmatprep.subr.mxu0 0.0
    %1724 = vmatpush1.msra.mxu0 0.0
    %1725 = vmatprep.subr.mxu0 0.0
    %1726 = vmatpush1.msra.mxu0 0.0
    %1727 = vmatprep.subr.mxu0 0.0
    %1728 = vmatpush1.msra.mxu0 0.0
    %1729 = vmatprep.subr.mxu0 0.0
    %1730 = vmatpush1.msra.mxu0 0.0
    %1731 = vmatprep.subr.mxu0 0.0
    %1732 = vmatpush1.msra.mxu0 0.0
    %1733 = vmatprep.subr.mxu0 0.0
    %1734 = vmatpush1.msra.mxu0 0.0
    %1735 = vmatprep.subr.mxu0 0.0
    %1736 = vmatpush1.msra.mxu0 0.0
    %1737 = vmatprep.subr.mxu0 0.0
    %1738 = vmatpush1.msra.mxu0 0.0
    %1739 = vmatprep.subr.mxu0 0.0
    %1740 = vmatpush1.msra.mxu0 0.0
    %1741 = vmatprep.subr.mxu0 0.0
    %1742 = vmatpush1.msra.mxu0 0.0
    %1743 = vmatprep.subr.mxu0 0.0
    %1744 = vmatpush1.msra.mxu0 0.0
    %1745 = vmatprep.subr.mxu0 0.0
    %1746 = vmatpush1.msra.mxu0 %v1708
    %1747 = vmatprep.subr.mxu0 0.0
    %1748 = vmatpush1.msra.mxu0 %v1706
    %1749 = vmatprep.subr.mxu0 0.0
    %1750 = vmatpush2.msra.mxu0 0.0
    %1751 = vmatprep.subr.mxu0 0.0
    %1752 = vmatpush2.msra.mxu0 0.0
    %1753 = vmatprep.subr.mxu0 0.0
    %1754 = vmatpush2.msra.mxu0 0.0
    %1755 = vmatprep.subr.mxu0 0.0
    %1756 = vmatpush2.msra.mxu0 0.0
    %1757 = vmatprep.subr.mxu0 0.0
    %1758 = vmatpush2.msra.mxu0 0.0
    %1759 = vmatprep.subr.mxu0 0.0
    %1760 = vmatpush2.msra.mxu0 0.0
    %1761 = vmatprep.subr.mxu0 0.0
    %1762 = vmatpush2.msra.mxu0 0.0
    %1763 = vmatprep.subr.mxu0 0.0
    %1764 = vmatpush2.msra.mxu0 0.0
    %1765 = vmatprep.subr.mxu0 0.0
    %1766 = vmatpush2.msra.mxu0 0.0
    %1767 = vmatprep.subr.mxu0 0.0
    %1768 = vmatpush2.msra.mxu0 0.0
    %1769 = vmatprep.subr.mxu0 0.0
    %1770 = vmatpush2.msra.mxu0 0.0
    %1771 = vmatprep.subr.mxu0 0.0
    %1772 = vmatpush2.msra.mxu0 0.0
    %1773 = vmatprep.subr.mxu0 0.0
    %1774 = vmatpush2.msra.mxu0 0.0
    %1775 = vmatprep.subr.mxu0 0.0
    %1776 = vmatpush2.msra.mxu0 0.0
    %1777 = vmatprep.subr.mxu0 0.0
    %1778 = vmatpush2.msra.mxu0 0.0
    %1779 = vmatprep.subr.mxu0 0.0
    %1780 = vmatpush2.msra.mxu0 0.0
    %1781 = vmatprep.mubr.f32.mxu0 0.0
    %1782 = vmatmul.mubr.f32.gmra.mxu0 %v1712
    %v1783 = vpop.f32.mrf.mxu0
    %v1784 = vadd.f32 0.0, %v1783
    %v1785 = vpop.f32.mrf.mxu0
    %1786 = vmatprep.mubr.f32.mxu0 0.0
    %1787 = vmatmul.mubr.f32.gmra.mxu0 %v1715
    %v1788 = vpop.f32.mrf.mxu0
    %v1789 = vadd.f32 0.0, %v1788
    %v1790 = vpop.f32.mrf.mxu0
    %1791 = vdwg.mxu0
    %1794 = vrot.lane.b32.xlu0 %v1692, 112
    %v1795 = vpop.permute.xlu0 %1794
    %1796 = vrot.lane.b32.xlu0 %v1694, 112
    %v1797 = vpop.permute.xlu0 %1796
    %v1800 = vsel %vm473, %v1795, 0.0
    %1801 = vadd.xlane.f32.xlu0 %v1800
    %v1802 = vpop.xlane.xlu0 %1801
    %v1803 = vsel %vm473, %v1797, 0.0
    %1804 = vadd.xlane.f32.xlu0 %v1803
    %v1805 = vpop.xlane.xlu0 %1804
    %v1806 = vrcp.pop %v1802
    %v1807 = vrcp.pop %v1805
    %v1808 = vmul.f32 %v1692, %v1806
    %v1809 = vmul.f32 %v1694, %v1807
    %1812 = vrot.lane.b32.xlu0 %v1808, 112
    %v1813 = vpop.permute.xlu0 %1812
    %1814 = vrot.lane.b32.xlu0 %v1809, 112
    %v1815 = vpop.permute.xlu0 %1814
    %1816 = vrot.lane.b32.xlu0 %v369, 56
    %v1817 = vpop.permute.xlu0 %1816
    %1818 = vrot.lane.b32.xlu0 %v374, 56
    %v1819 = vpop.permute.xlu0 %1818
    %v1822 = vsel %vm473, %v1813, 0
    %v1824 = vsel %vm473, %v1815, 0
    %1826 = vmatprep.subr.mxu0 0.0
    %1827 = vmatpush1.msra.mxu0 0.0
    %1828 = vmatprep.subr.mxu0 0.0
    %1829 = vmatpush1.msra.mxu0 0.0
    %1830 = vmatprep.subr.mxu0 0.0
    %1831 = vmatpush1.msra.mxu0 0.0
    %1832 = vmatprep.subr.mxu0 0.0
    %1833 = vmatpush1.msra.mxu0 0.0
    %1834 = vmatprep.subr.mxu0 0.0
    %1835 = vmatpush1.msra.mxu0 0.0
    %1836 = vmatprep.subr.mxu0 0.0
    %1837 = vmatpush1.msra.mxu0 0.0
    %1838 = vmatprep.subr.mxu0 0.0
    %1839 = vmatpush1.msra.mxu0 0.0
    %1840 = vmatprep.subr.mxu0 0.0
    %1841 = vmatpush1.msra.mxu0 0.0
    %1842 = vmatprep.subr.mxu0 0.0
    %1843 = vmatpush1.msra.mxu0 0.0
    %1844 = vmatprep.subr.mxu0 0.0
    %1845 = vmatpush1.msra.mxu0 0.0
    %1846 = vmatprep.subr.mxu0 0.0
    %1847 = vmatpush1.msra.mxu0 0.0
    %1848 = vmatprep.subr.mxu0 0.0
    %1849 = vmatpush1.msra.mxu0 0.0
    %1850 = vmatprep.subr.mxu0 0.0
    %1851 = vmatpush1.msra.mxu0 0.0
    %1852 = vmatprep.subr.mxu0 0.0
    %1853 = vmatpush1.msra.mxu0 0.0
    %1854 = vmatprep.subr.mxu0 0.0
    %1855 = vmatpush1.msra.mxu0 %v1819
    %1856 = vmatprep.subr.mxu0 0.0
    %1857 = vmatpush1.msra.mxu0 %v1817
    %1858 = vmatprep.subr.mxu0 0.0
    %1859 = vmatpush2.msra.mxu0 0.0
    %1860 = vmatprep.subr.mxu0 0.0
    %1861 = vmatpush2.msra.mxu0 0.0
    %1862 = vmatprep.subr.mxu0 0.0
    %1863 = vmatpush2.msra.mxu0 0.0
    %1864 = vmatprep.subr.mxu0 0.0
    %1865 = vmatpush2.msra.mxu0 0.0
    %1866 = vmatprep.subr.mxu0 0.0
    %1867 = vmatpush2.msra.mxu0 0.0
    %1868 = vmatprep.subr.mxu0 0.0
    %1869 = vmatpush2.msra.mxu0 0.0
    %1870 = vmatprep.subr.mxu0 0.0
    %1871 = vmatpush2.msra.mxu0 0.0
    %1872 = vmatprep.subr.mxu0 0.0
    %1873 = vmatpush2.msra.mxu0 0.0
    %1874 = vmatprep.subr.mxu0 0.0
    %1875 = vmatpush2.msra.mxu0 0.0
    %1876 = vmatprep.subr.mxu0 0.0
    %1877 = vmatpush2.msra.mxu0 0.0
    %1878 = vmatprep.subr.mxu0 0.0
    %1879 = vmatpush2.msra.mxu0 0.0
    %1880 = vmatprep.subr.mxu0 0.0
    %1881 = vmatpush2.msra.mxu0 0.0
    %1882 = vmatprep.subr.mxu0 0.0
    %1883 = vmatpush2.msra.mxu0 0.0
    %1884 = vmatprep.subr.mxu0 0.0
    %1885 = vmatpush2.msra.mxu0 0.0
    %1886 = vmatprep.subr.mxu0 0.0
    %1887 = vmatpush2.msra.mxu0 0.0
    %1888 = vmatprep.subr.mxu0 0.0
    %1889 = vmatpush2.msra.mxu0 0.0
    %1890 = vmatprep.mubr.f32.mxu0 0.0
    %1891 = vmatmul.mubr.f32.gmra.mxu0 %v1822
    %v1892 = vpop.f32.mrf.mxu0
    %v1893 = vadd.f32 0.0, %v1892
    %v1894 = vpop.f32.mrf.mxu0
    %1895 = vmatprep.mubr.f32.mxu0 0.0
    %1896 = vmatmul.mubr.f32.gmra.mxu0 %v1824
    %v1897 = vpop.f32.mrf.mxu0
    %v1898 = vadd.f32 0.0, %v1897
    %v1899 = vpop.f32.mrf.mxu0
    %1900 = vdwg.mxu0
    %1901 = vrot.lane.b32.xlu0 %v1692, 96
    %v1902 = vpop.permute.xlu0 %1901
    %1903 = vrot.lane.b32.xlu0 %v1694, 96
    %v1904 = vpop.permute.xlu0 %1903
    %v1907 = vsel %vm473, %v1902, 0.0
    %1908 = vadd.xlane.f32.xlu0 %v1907
    %v1909 = vpop.xlane.xlu0 %1908
    %v1910 = vsel %vm473, %v1904, 0.0
    %1911 = vadd.xlane.f32.xlu0 %v1910
    %v1912 = vpop.xlane.xlu0 %1911
    %v1913 = vrcp.pop %v1909
    %v1914 = vrcp.pop %v1912
    %v1915 = vmul.f32 %v1692, %v1913
    %v1916 = vmul.f32 %v1694, %v1914
    %1919 = vrot.lane.b32.xlu0 %v1915, 96
    %v1920 = vpop.permute.xlu0 %1919
    %1921 = vrot.lane.b32.xlu0 %v1916, 96
    %v1922 = vpop.permute.xlu0 %1921
    %1923 = vrot.lane.b32.xlu0 %v369, 48
    %v1924 = vpop.permute.xlu0 %1923
    %1925 = vrot.lane.b32.xlu0 %v374, 48
    %v1926 = vpop.permute.xlu0 %1925
    %v1929 = vsel %vm473, %v1920, 0
    %v1931 = vsel %vm473, %v1922, 0
    %1933 = vmatprep.subr.mxu0 0.0
    %1934 = vmatpush1.msra.mxu0 0.0
    %1935 = vmatprep.subr.mxu0 0.0
    %1936 = vmatpush1.msra.mxu0 0.0
    %1937 = vmatprep.subr.mxu0 0.0
    %1938 = vmatpush1.msra.mxu0 0.0
    %1939 = vmatprep.subr.mxu0 0.0
    %1940 = vmatpush1.msra.mxu0 0.0
    %1941 = vmatprep.subr.mxu0 0.0
    %1942 = vmatpush1.msra.mxu0 0.0
    %1943 = vmatprep.subr.mxu0 0.0
    %1944 = vmatpush1.msra.mxu0 0.0
    %1945 = vmatprep.subr.mxu0 0.0
    %1946 = vmatpush1.msra.mxu0 0.0
    %1947 = vmatprep.subr.mxu0 0.0
    %1948 = vmatpush1.msra.mxu0 0.0
    %1949 = vmatprep.subr.mxu0 0.0
    %1950 = vmatpush1.msra.mxu0 0.0
    %1951 = vmatprep.subr.mxu0 0.0
    %1952 = vmatpush1.msra.mxu0 0.0
    %1953 = vmatprep.subr.mxu0 0.0
    %1954 = vmatpush1.msra.mxu0 0.0
    %1955 = vmatprep.subr.mxu0 0.0
    %1956 = vmatpush1.msra.mxu0 0.0
    %1957 = vmatprep.subr.mxu0 0.0
    %1958 = vmatpush1.msra.mxu0 0.0
    %1959 = vmatprep.subr.mxu0 0.0
    %1960 = vmatpush1.msra.mxu0 0.0
    %1961 = vmatprep.subr.mxu0 0.0
    %1962 = vmatpush1.msra.mxu0 %v1926
    %1963 = vmatprep.subr.mxu0 0.0
    %1964 = vmatpush1.msra.mxu0 %v1924
    %1965 = vmatprep.subr.mxu0 0.0
    %1966 = vmatpush2.msra.mxu0 0.0
    %1967 = vmatprep.subr.mxu0 0.0
    %1968 = vmatpush2.msra.mxu0 0.0
    %1969 = vmatprep.subr.mxu0 0.0
    %1970 = vmatpush2.msra.mxu0 0.0
    %1971 = vmatprep.subr.mxu0 0.0
    %1972 = vmatpush2.msra.mxu0 0.0
    %1973 = vmatprep.subr.mxu0 0.0
    %1974 = vmatpush2.msra.mxu0 0.0
    %1975 = vmatprep.subr.mxu0 0.0
    %1976 = vmatpush2.msra.mxu0 0.0
    %1977 = vmatprep.subr.mxu0 0.0
    %1978 = vmatpush2.msra.mxu0 0.0
    %1979 = vmatprep.subr.mxu0 0.0
    %1980 = vmatpush2.msra.mxu0 0.0
    %1981 = vmatprep.subr.mxu0 0.0
    %1982 = vmatpush2.msra.mxu0 0.0
    %1983 = vmatprep.subr.mxu0 0.0
    %1984 = vmatpush2.msra.mxu0 0.0
    %1985 = vmatprep.subr.mxu0 0.0
    %1986 = vmatpush2.msra.mxu0 0.0
    %1987 = vmatprep.subr.mxu0 0.0
    %1988 = vmatpush2.msra.mxu0 0.0
    %1989 = vmatprep.subr.mxu0 0.0
    %1990 = vmatpush2.msra.mxu0 0.0
    %1991 = vmatprep.subr.mxu0 0.0
    %1992 = vmatpush2.msra.mxu0 0.0
    %1993 = vmatprep.subr.mxu0 0.0
    %1994 = vmatpush2.msra.mxu0 0.0
    %1995 = vmatprep.subr.mxu0 0.0
    %1996 = vmatpush2.msra.mxu0 0.0
    %1997 = vmatprep.mubr.f32.mxu0 0.0
    %1998 = vmatmul.mubr.f32.gmra.mxu0 %v1929
    %v1999 = vpop.f32.mrf.mxu0
    %v2000 = vadd.f32 0.0, %v1999
    %v2001 = vpop.f32.mrf.mxu0
    %2002 = vmatprep.mubr.f32.mxu0 0.0
    %2003 = vmatmul.mubr.f32.gmra.mxu0 %v1931
    %v2004 = vpop.f32.mrf.mxu0
    %v2005 = vadd.f32 0.0, %v2004
    %v2006 = vpop.f32.mrf.mxu0
    %2007 = vdwg.mxu0
    %2008 = vrot.lane.b32.xlu0 %v1692, 80
    %v2009 = vpop.permute.xlu0 %2008
    %2010 = vrot.lane.b32.xlu0 %v1694, 80
    %v2011 = vpop.permute.xlu0 %2010
    %v2014 = vsel %vm473, %v2009, 0.0
    %2015 = vadd.xlane.f32.xlu0 %v2014
    %v2016 = vpop.xlane.xlu0 %2015
    %v2017 = vsel %vm473, %v2011, 0.0
    %2018 = vadd.xlane.f32.xlu0 %v2017
    %v2019 = vpop.xlane.xlu0 %2018
    %v2020 = vrcp.pop %v2016
    %v2021 = vrcp.pop %v2019
    %v2022 = vmul.f32 %v1692, %v2020
    %v2023 = vmul.f32 %v1694, %v2021
    %2026 = vrot.lane.b32.xlu0 %v2022, 80
    %v2027 = vpop.permute.xlu0 %2026
    %2028 = vrot.lane.b32.xlu0 %v2023, 80
    %v2029 = vpop.permute.xlu0 %2028
    %2030 = vrot.lane.b32.xlu0 %v369, 40
    %v2031 = vpop.permute.xlu0 %2030
    %2032 = vrot.lane.b32.xlu0 %v374, 40
    %v2033 = vpop.permute.xlu0 %2032
    %v2036 = vsel %vm473, %v2027, 0
    %v2038 = vsel %vm473, %v2029, 0
    %2040 = vmatprep.subr.mxu0 0.0
    %2041 = vmatpush1.msra.mxu0 0.0
    %2042 = vmatprep.subr.mxu0 0.0
    %2043 = vmatpush1.msra.mxu0 0.0
    %2044 = vmatprep.subr.mxu0 0.0
    %2045 = vmatpush1.msra.mxu0 0.0
    %2046 = vmatprep.subr.mxu0 0.0
    %2047 = vmatpush1.msra.mxu0 0.0
    %2048 = vmatprep.subr.mxu0 0.0
    %2049 = vmatpush1.msra.mxu0 0.0
    %2050 = vmatprep.subr.mxu0 0.0
    %2051 = vmatpush1.msra.mxu0 0.0
    %2052 = vmatprep.subr.mxu0 0.0
    %2053 = vmatpush1.msra.mxu0 0.0
    %2054 = vmatprep.subr.mxu0 0.0
    %2055 = vmatpush1.msra.mxu0 0.0
    %2056 = vmatprep.subr.mxu0 0.0
    %2057 = vmatpush1.msra.mxu0 0.0
    %2058 = vmatprep.subr.mxu0 0.0
    %2059 = vmatpush1.msra.mxu0 0.0
    %2060 = vmatprep.subr.mxu0 0.0
    %2061 = vmatpush1.msra.mxu0 0.0
    %2062 = vmatprep.subr.mxu0 0.0
    %2063 = vmatpush1.msra.mxu0 0.0
    %2064 = vmatprep.subr.mxu0 0.0
    %2065 = vmatpush1.msra.mxu0 0.0
    %2066 = vmatprep.subr.mxu0 0.0
    %2067 = vmatpush1.msra.mxu0 0.0
    %2068 = vmatprep.subr.mxu0 0.0
    %2069 = vmatpush1.msra.mxu0 %v2033
    %2070 = vmatprep.subr.mxu0 0.0
    %2071 = vmatpush1.msra.mxu0 %v2031
    %2072 = vmatprep.subr.mxu0 0.0
    %2073 = vmatpush2.msra.mxu0 0.0
    %2074 = vmatprep.subr.mxu0 0.0
    %2075 = vmatpush2.msra.mxu0 0.0
    %2076 = vmatprep.subr.mxu0 0.0
    %2077 = vmatpush2.msra.mxu0 0.0
    %2078 = vmatprep.subr.mxu0 0.0
    %2079 = vmatpush2.msra.mxu0 0.0
    %2080 = vmatprep.subr.mxu0 0.0
    %2081 = vmatpush2.msra.mxu0 0.0
    %2082 = vmatprep.subr.mxu0 0.0
    %2083 = vmatpush2.msra.mxu0 0.0
    %2084 = vmatprep.subr.mxu0 0.0
    %2085 = vmatpush2.msra.mxu0 0.0
    %2086 = vmatprep.subr.mxu0 0.0
    %2087 = vmatpush2.msra.mxu0 0.0
    %2088 = vmatprep.subr.mxu0 0.0
    %2089 = vmatpush2.msra.mxu0 0.0
    %2090 = vmatprep.subr.mxu0 0.0
    %2091 = vmatpush2.msra.mxu0 0.0
    %2092 = vmatprep.subr.mxu0 0.0
    %2093 = vmatpush2.msra.mxu0 0.0
    %2094 = vmatprep.subr.mxu0 0.0
    %2095 = vmatpush2.msra.mxu0 0.0
    %2096 = vmatprep.subr.mxu0 0.0
    %2097 = vmatpush2.msra.mxu0 0.0
    %2098 = vmatprep.subr.mxu0 0.0
    %2099 = vmatpush2.msra.mxu0 0.0
    %2100 = vmatprep.subr.mxu0 0.0
    %2101 = vmatpush2.msra.mxu0 0.0
    %2102 = vmatprep.subr.mxu0 0.0
    %2103 = vmatpush2.msra.mxu0 0.0
    %2104 = vmatprep.mubr.f32.mxu0 0.0
    %2105 = vmatmul.mubr.f32.gmra.mxu0 %v2036
    %v2106 = vpop.f32.mrf.mxu0
    %v2107 = vadd.f32 0.0, %v2106
    %v2108 = vpop.f32.mrf.mxu0
    %2109 = vmatprep.mubr.f32.mxu0 0.0
    %2110 = vmatmul.mubr.f32.gmra.mxu0 %v2038
    %v2111 = vpop.f32.mrf.mxu0
    %v2112 = vadd.f32 0.0, %v2111
    %v2113 = vpop.f32.mrf.mxu0
    %2114 = vdwg.mxu0
    %2117 = vrot.lane.b32.xlu0 %v1893, 8
    %v2118 = vpop.permute.xlu0 %2117
    %2119 = vrot.lane.b32.xlu0 %v1898, 8
    %v2120 = vpop.permute.xlu0 %2119
    %2125 = vrot.lane.b32.xlu0 %v2000, 16
    %v2126 = vpop.permute.xlu0 %2125
    %2127 = vrot.lane.b32.xlu0 %v2005, 16
    %v2128 = vpop.permute.xlu0 %2127
    %2133 = vrot.lane.b32.xlu0 %v2107, 24
    %v2134 = vpop.permute.xlu0 %2133
    %2135 = vrot.lane.b32.xlu0 %v2112, 24
    %v2136 = vpop.permute.xlu0 %2135
    %v2139 = vsel %vm387, %v1784, %v2118
    %v2140 = vsel %vm387, %v1789, %v2120
    %v2141 = vsel %vm473, %v2139, %v2126
    %v2142 = vsel %vm473, %v2140, %v2128
    %v2143 = vsel %vm1262, %v2141, %v2134
    %v2144 = vsel %vm1262, %v2142, %v2136
    %v2145 = vld [vmem:[%s6] sm:$0xff]
    %v2146 = vld [vmem:[%s6 + $0x8] sm:$0xff]
    %v2147 = vld [vmem:[%s6 + $0x10] sm:$0xff]
    %v2148 = vld [vmem:[%s6 + $0x18] sm:$0xff]
    %v2150 = vsel %vm202, %v1263, 0
    %v2153 = vsel %vm202, %v1264, 0
    %v2156 = vsel %vm202, %v2143, 0
    %v2159 = vsel %vm202, %v2144, 0
    %2161 = vmatprep.subr.mxu0 0.0
    %2162 = vmatpush1.msra.mxu0 0.0
    %2163 = vmatprep.subr.mxu0 0.0
    %2164 = vmatpush1.msra.mxu0 0.0
    %2165 = vmatprep.subr.mxu0 0.0
    %2166 = vmatpush1.msra.mxu0 0.0
    %2167 = vmatprep.subr.mxu0 0.0
    %2168 = vmatpush1.msra.mxu0 0.0
    %2169 = vmatprep.subr.mxu0 0.0
    %2170 = vmatpush1.msra.mxu0 0.0
    %2171 = vmatprep.subr.mxu0 0.0
    %2172 = vmatpush1.msra.mxu0 0.0
    %2173 = vmatprep.subr.mxu0 0.0
    %2174 = vmatpush1.msra.mxu0 0.0
    %2175 = vmatprep.subr.mxu0 0.0
    %2176 = vmatpush1.msra.mxu0 0.0
    %2177 = vmatprep.subr.mxu0 0.0
    %2178 = vmatpush1.msra.mxu0 0.0
    %2179 = vmatprep.subr.mxu0 0.0
    %2180 = vmatpush1.msra.mxu0 0.0
    %2181 = vmatprep.subr.mxu0 0.0
    %2182 = vmatpush1.msra.mxu0 0.0
    %2183 = vmatprep.subr.mxu0 0.0
    %2184 = vmatpush1.msra.mxu0 0.0
    %2185 = vmatprep.subr.mxu0 0.0
    %2186 = vmatpush1.msra.mxu0 %v2148
    %2187 = vmatprep.subr.mxu0 0.0
    %2188 = vmatpush1.msra.mxu0 %v2147
    %2189 = vmatprep.subr.mxu0 0.0
    %2190 = vmatpush1.msra.mxu0 %v2146
    %2191 = vmatprep.subr.mxu0 0.0
    %2192 = vmatpush1.msra.mxu0 %v2145
    %2193 = vmatprep.subr.mxu0 0.0
    %2194 = vmatpush2.msra.mxu0 0.0
    %2195 = vmatprep.subr.mxu0 0.0
    %2196 = vmatpush2.msra.mxu0 0.0
    %2197 = vmatprep.subr.mxu0 0.0
    %2198 = vmatpush2.msra.mxu0 0.0
    %2199 = vmatprep.subr.mxu0 0.0
    %2200 = vmatpush2.msra.mxu0 0.0
    %2201 = vmatprep.subr.mxu0 0.0
    %2202 = vmatpush2.msra.mxu0 0.0
    %2203 = vmatprep.subr.mxu0 0.0
    %2204 = vmatpush2.msra.mxu0 0.0
    %2205 = vmatprep.subr.mxu0 0.0
    %2206 = vmatpush2.msra.mxu0 0.0
    %2207 = vmatprep.subr.mxu0 0.0
    %2208 = vmatpush2.msra.mxu0 0.0
    %2209 = vmatprep.subr.mxu0 0.0
    %2210 = vmatpush2.msra.mxu0 0.0
    %2211 = vmatprep.subr.mxu0 0.0
    %2212 = vmatpush2.msra.mxu0 0.0
    %2213 = vmatprep.subr.mxu0 0.0
    %2214 = vmatpush2.msra.mxu0 0.0
    %2215 = vmatprep.subr.mxu0 0.0
    %2216 = vmatpush2.msra.mxu0 0.0
    %2217 = vmatprep.subr.mxu0 0.0
    %2218 = vmatpush2.msra.mxu0 0.0
    %2219 = vmatprep.subr.mxu0 0.0
    %2220 = vmatpush2.msra.mxu0 0.0
    %2221 = vmatprep.subr.mxu0 0.0
    %2222 = vmatpush2.msra.mxu0 0.0
    %2223 = vmatprep.subr.mxu0 0.0
    %2224 = vmatpush2.msra.mxu0 0.0
    %2225 = vmatprep.mubr.f32.mxu0 0.0
    %2226 = vmatmul.mubr.f32.gmra.mxu0 %v2150
    %v2227 = vpop.f32.mrf.mxu0
    %v2228 = vadd.f32 0.0, %v2227
    %v2229 = vpop.f32.mrf.mxu0
    %2230 = vmatprep.mubr.f32.mxu0 0.0
    %2231 = vmatmul.mubr.f32.gmra.mxu0 %v2153
    %v2232 = vpop.f32.mrf.mxu0
    %v2233 = vadd.f32 0.0, %v2232
    %v2234 = vpop.f32.mrf.mxu0
    %2235 = vmatprep.mubr.f32.mxu0 0.0
    %2236 = vmatmul.mubr.f32.gmra.mxu0 %v2156
    %v2237 = vpop.f32.mrf.mxu0
    %v2238 = vadd.f32 0.0, %v2237
    %v2239 = vpop.f32.mrf.mxu0
    %2240 = vmatprep.mubr.f32.mxu0 0.0
    %2241 = vmatmul.mubr.f32.gmra.mxu0 %v2159
    %v2242 = vpop.f32.mrf.mxu0
    %v2243 = vadd.f32 0.0, %v2242
    %v2244 = vpop.f32.mrf.mxu0
    %2245 = vdwg.mxu0
    %v2246 = vadd.f32 %v175, %v2228
    %v2247 = vadd.f32 %v180, %v2233
    %v2248 = vadd.f32 %v185, %v2238
    %v2249 = vadd.f32 %v190, %v2243
    %v2250 = vld [vmem:[%s7] sm:$0x1]
    %v2252 = vlaneseq
    %v2253 = vshrl.u32 %v2252, 7
    %v2254 = vsub.s32 0, %v2253
    %v2255 = vrot.slane %v2250, %v2254
    %v2257 = vadd.f32 %v2246, %v2255
    %v2258 = vadd.f32 %v2247, %v2255
    %v2259 = vadd.f32 %v2248, %v2255
    %v2260 = vadd.f32 %v2249, %v2255
    %v2261 = vld [vmem:[%s8] sm:$0x1]
    %v2262 = vld [vmem:[%s9] sm:$0x1]
    %v2263 = vsel %vm202, %v2257, 0.0
    %2264 = vadd.xlane.f32.xlu0 %v2263
    %v2265 = vpop.xlane.xlu0 %2264
    %v2266 = vsel %vm202, %v2258, 0.0
    %2267 = vadd.xlane.f32.xlu0 %v2266
    %v2268 = vpop.xlane.xlu0 %2267
    %v2269 = vsel %vm202, %v2259, 0.0
    %2270 = vadd.xlane.f32.xlu0 %v2269
    %v2271 = vpop.xlane.xlu0 %2270
    %v2272 = vsel %vm202, %v2260, 0.0
    %2273 = vadd.xlane.f32.xlu0 %v2272
    %v2274 = vpop.xlane.xlu0 %2273
    %v2275 = vmul.f32 %v2265, %v215
    %v2276 = vmul.f32 %v2268, %v215
    %v2277 = vmul.f32 %v2271, %v215
    %v2278 = vmul.f32 %v2274, %v215
    %v2279 = vsub.f32 %v2257, %v2275
    %v2280 = vsub.f32 %v2258, %v2276
    %v2281 = vsub.f32 %v2259, %v2277
    %v2282 = vsub.f32 %v2260, %v2278
    %v2283 = vmul.f32 %v2279, %v2279
    %v2284 = vmul.f32 %v2280, %v2280
    %v2285 = vmul.f32 %v2281, %v2281
    %v2286 = vmul.f32 %v2282, %v2282
    %v2287 = vsel %vm202, %v2283, 0.0
    %2288 = vadd.xlane.f32.xlu0 %v2287
    %v2289 = vpop.xlane.xlu0 %2288
    %v2290 = vsel %vm202, %v2284, 0.0
    %2291 = vadd.xlane.f32.xlu0 %v2290
    %v2292 = vpop.xlane.xlu0 %2291
    %v2293 = vsel %vm202, %v2285, 0.0
    %2294 = vadd.xlane.f32.xlu0 %v2293
    %v2295 = vpop.xlane.xlu0 %2294
    %v2296 = vsel %vm202, %v2286, 0.0
    %2297 = vadd.xlane.f32.xlu0 %v2296
    %v2298 = vpop.xlane.xlu0 %2297
    %v2299 = vmul.f32 %v2289, %v215
    %v2300 = vmul.f32 %v2292, %v215
    %v2301 = vmul.f32 %v2295, %v215
    %v2302 = vmul.f32 %v2298, %v215
    %v2303 = vadd.f32 %v2299, 1e-05
    %v2304 = vadd.f32 %v2300, 1e-05
    %v2305 = vadd.f32 %v2301, 1e-05
    %v2306 = vadd.f32 %v2302, 1e-05
    %v2307 = vrsqrt.pop %v2303
    %v2308 = vrsqrt.pop %v2304
    %v2309 = vrsqrt.pop %v2305
    %v2310 = vrsqrt.pop %v2306
    %v2311 = vmul.f32 %v2279, %v2307
    %v2312 = vmul.f32 %v2280, %v2308
    %v2313 = vmul.f32 %v2281, %v2309
    %v2314 = vmul.f32 %v2282, %v2310
    %v2316 = vlaneseq
    %v2317 = vshrl.u32 %v2316, 7
    %v2318 = vsub.s32 0, %v2317
    %v2319 = vrot.slane %v2261, %v2318
    %v2321 = vmul.f32 %v2311, %v2319
    %v2322 = vmul.f32 %v2312, %v2319
    %v2323 = vmul.f32 %v2313, %v2319
    %v2324 = vmul.f32 %v2314, %v2319
    %v2326 = vlaneseq
    %v2327 = vshrl.u32 %v2326, 7
    %v2328 = vsub.s32 0, %v2327
    %v2329 = vrot.slane %v2262, %v2328
    %v2331 = vadd.f32 %v2321, %v2329
    %v2332 = vadd.f32 %v2322, %v2329
    %v2333 = vadd.f32 %v2323, %v2329
    %v2334 = vadd.f32 %v2324, %v2329
    %v2335 = vld [vmem:[%s10] sm:$0xff]
    %v2336 = vld [vmem:[%s10 + $0x8] sm:$0xff]
    %v2337 = vld [vmem:[%s10 + $0x10] sm:$0xff]
    %v2338 = vld [vmem:[%s10 + $0x18] sm:$0xff]
    %v2339 = vld [vmem:[%s11] sm:$0x1]
    %v2341 = vlaneseq
    %v2342 = vshrl.u32 %v2341, 7
    %v2343 = vsub.s32 0, %v2342
    %v2344 = vrot.slane %v2339, %v2343
    %v2347 = vsel %vm202, %v2331, 0
    %v2350 = vsel %vm202, %v2332, 0
    %v2353 = vsel %vm202, %v2333, 0
    %v2356 = vsel %vm202, %v2334, 0
    %2358 = vmatprep.subr.mxu0 0.0
    %2359 = vmatpush1.msra.mxu0 0.0
    %2360 = vmatprep.subr.mxu0 0.0
    %2361 = vmatpush1.msra.mxu0 0.0
    %2362 = vmatprep.subr.mxu0 0.0
    %2363 = vmatpush1.msra.mxu0 0.0
    %2364 = vmatprep.subr.mxu0 0.0
    %2365 = vmatpush1.msra.mxu0 0.0
    %2366 = vmatprep.subr.mxu0 0.0
    %2367 = vmatpush1.msra.mxu0 0.0
    %2368 = vmatprep.subr.mxu0 0.0
    %2369 = vmatpush1.msra.mxu0 0.0
    %2370 = vmatprep.subr.mxu0 0.0
    %2371 = vmatpush1.msra.mxu0 0.0
    %2372 = vmatprep.subr.mxu0 0.0
    %2373 = vmatpush1.msra.mxu0 0.0
    %2374 = vmatprep.subr.mxu0 0.0
    %2375 = vmatpush1.msra.mxu0 0.0
    %2376 = vmatprep.subr.mxu0 0.0
    %2377 = vmatpush1.msra.mxu0 0.0
    %2378 = vmatprep.subr.mxu0 0.0
    %2379 = vmatpush1.msra.mxu0 0.0
    %2380 = vmatprep.subr.mxu0 0.0
    %2381 = vmatpush1.msra.mxu0 0.0
    %2382 = vmatprep.subr.mxu0 0.0
    %2383 = vmatpush1.msra.mxu0 %v2338
    %2384 = vmatprep.subr.mxu0 0.0
    %2385 = vmatpush1.msra.mxu0 %v2337
    %2386 = vmatprep.subr.mxu0 0.0
    %2387 = vmatpush1.msra.mxu0 %v2336
    %2388 = vmatprep.subr.mxu0 0.0
    %2389 = vmatpush1.msra.mxu0 %v2335
    %2390 = vmatprep.subr.mxu0 0.0
    %2391 = vmatpush2.msra.mxu0 0.0
    %2392 = vmatprep.subr.mxu0 0.0
    %2393 = vmatpush2.msra.mxu0 0.0
    %2394 = vmatprep.subr.mxu0 0.0
    %2395 = vmatpush2.msra.mxu0 0.0
    %2396 = vmatprep.subr.mxu0 0.0
    %2397 = vmatpush2.msra.mxu0 0.0
    %2398 = vmatprep.subr.mxu0 0.0
    %2399 = vmatpush2.msra.mxu0 0.0
    %2400 = vmatprep.subr.mxu0 0.0
    %2401 = vmatpush2.msra.mxu0 0.0
    %2402 = vmatprep.subr.mxu0 0.0
    %2403 = vmatpush2.msra.mxu0 0.0
    %2404 = vmatprep.subr.mxu0 0.0
    %2405 = vmatpush2.msra.mxu0 0.0
    %2406 = vmatprep.subr.mxu0 0.0
    %2407 = vmatpush2.msra.mxu0 0.0
    %2408 = vmatprep.subr.mxu0 0.0
    %2409 = vmatpush2.msra.mxu0 0.0
    %2410 = vmatprep.subr.mxu0 0.0
    %2411 = vmatpush2.msra.mxu0 0.0
    %2412 = vmatprep.subr.mxu0 0.0
    %2413 = vmatpush2.msra.mxu0 0.0
    %2414 = vmatprep.subr.mxu0 0.0
    %2415 = vmatpush2.msra.mxu0 0.0
    %2416 = vmatprep.subr.mxu0 0.0
    %2417 = vmatpush2.msra.mxu0 0.0
    %2418 = vmatprep.subr.mxu0 0.0
    %2419 = vmatpush2.msra.mxu0 0.0
    %2420 = vmatprep.subr.mxu0 0.0
    %2421 = vmatpush2.msra.mxu0 0.0
    %2422 = vmatprep.mubr.f32.mxu0 0.0
    %2423 = vmatmul.mubr.f32.gmra.mxu0 %v2347
    %v2424 = vpop.f32.mrf.mxu0
    %v2425 = vadd.f32 %v2344, %v2424
    %v2426 = vpop.f32.mrf.mxu0
    %2427 = vmatprep.mubr.f32.mxu0 0.0
    %2428 = vmatmul.mubr.f32.gmra.mxu0 %v2350
    %v2429 = vpop.f32.mrf.mxu0
    %v2430 = vadd.f32 %v2344, %v2429
    %v2431 = vpop.f32.mrf.mxu0
    %2432 = vmatprep.mubr.f32.mxu0 0.0
    %2433 = vmatmul.mubr.f32.gmra.mxu0 %v2353
    %v2434 = vpop.f32.mrf.mxu0
    %v2435 = vadd.f32 %v2344, %v2434
    %v2436 = vpop.f32.mrf.mxu0
    %2437 = vmatprep.mubr.f32.mxu0 0.0
    %2438 = vmatmul.mubr.f32.gmra.mxu0 %v2356
    %v2439 = vpop.f32.mrf.mxu0
    %v2440 = vadd.f32 %v2344, %v2439
    %v2441 = vpop.f32.mrf.mxu0
    %2442 = vdwg.mxu0
    %v2443 = vmax.f32 %v2425, 0.0
    %v2444 = vmax.f32 %v2430, 0.0
    %v2445 = vmax.f32 %v2435, 0.0
    %v2446 = vmax.f32 %v2440, 0.0
    %v2447 = vld [vmem:[%s12] sm:$0xff]
    %v2448 = vld [vmem:[%s12 + $0x8] sm:$0xff]
    %v2449 = vld [vmem:[%s12 + $0x10] sm:$0xff]
    %v2450 = vld [vmem:[%s12 + $0x18] sm:$0xff]
    %v2451 = vld [vmem:[%s12 + $0x20] sm:$0xff]
    %v2452 = vld [vmem:[%s12 + $0x28] sm:$0xff]
    %v2453 = vld [vmem:[%s12 + $0x30] sm:$0xff]
    %v2454 = vld [vmem:[%s12 + $0x38] sm:$0xff]
    %v2455 = vld [vmem:[%s12 + $0x40] sm:$0xff]
    %v2456 = vld [vmem:[%s12 + $0x48] sm:$0xff]
    %v2457 = vld [vmem:[%s12 + $0x50] sm:$0xff]
    %v2458 = vld [vmem:[%s12 + $0x58] sm:$0xff]
    %v2459 = vld [vmem:[%s12 + $0x60] sm:$0xff]
    %v2460 = vld [vmem:[%s12 + $0x68] sm:$0xff]
    %v2461 = vld [vmem:[%s12 + $0x70] sm:$0xff]
    %v2462 = vld [vmem:[%s12 + $0x78] sm:$0xff]
    %2463 = vmatprep.subr.mxu0 0.0
    %2464 = vmatpush1.msra.mxu0 %v2462
    %2465 = vmatprep.subr.mxu0 0.0
    %2466 = vmatpush1.msra.mxu0 %v2461
    %2467 = vmatprep.subr.mxu0 0.0
    %2468 = vmatpush1.msra.mxu0 %v2460
    %2469 = vmatprep.subr.mxu0 0.0
    %2470 = vmatpush1.msra.mxu0 %v2459
    %2471 = vmatprep.subr.mxu0 0.0
    %2472 = vmatpush1.msra.mxu0 %v2458
    %2473 = vmatprep.subr.mxu0 0.0
    %2474 = vmatpush1.msra.mxu0 %v2457
    %2475 = vmatprep.subr.mxu0 0.0
    %2476 = vmatpush1.msra.mxu0 %v2456
    %2477 = vmatprep.subr.mxu0 0.0
    %2478 = vmatpush1.msra.mxu0 %v2455
    %2479 = vmatprep.subr.mxu0 0.0
    %2480 = vmatpush1.msra.mxu0 %v2454
    %2481 = vmatprep.subr.mxu0 0.0
    %2482 = vmatpush1.msra.mxu0 %v2453
    %2483 = vmatprep.subr.mxu0 0.0
    %2484 = vmatpush1.msra.mxu0 %v2452
    %2485 = vmatprep.subr.mxu0 0.0
    %2486 = vmatpush1.msra.mxu0 %v2451
    %2487 = vmatprep.subr.mxu0 0.0
    %2488 = vmatpush1.msra.mxu0 %v2450
    %2489 = vmatprep.subr.mxu0 0.0
    %2490 = vmatpush1.msra.mxu0 %v2449
    %2491 = vmatprep.subr.mxu0 0.0
    %2492 = vmatpush1.msra.mxu0 %v2448
    %2493 = vmatprep.subr.mxu0 0.0
    %2494 = vmatpush1.msra.mxu0 %v2447
    %2495 = vmatprep.subr.mxu0 0.0
    %2496 = vmatpush2.msra.mxu0 0.0
    %2497 = vmatprep.subr.mxu0 0.0
    %2498 = vmatpush2.msra.mxu0 0.0
    %2499 = vmatprep.subr.mxu0 0.0
    %2500 = vmatpush2.msra.mxu0 0.0
    %2501 = vmatprep.subr.mxu0 0.0
    %2502 = vmatpush2.msra.mxu0 0.0
    %2503 = vmatprep.subr.mxu0 0.0
    %2504 = vmatpush2.msra.mxu0 0.0
    %2505 = vmatprep.subr.mxu0 0.0
    %2506 = vmatpush2.msra.mxu0 0.0
    %2507 = vmatprep.subr.mxu0 0.0
    %2508 = vmatpush2.msra.mxu0 0.0
    %2509 = vmatprep.subr.mxu0 0.0
    %2510 = vmatpush2.msra.mxu0 0.0
    %2511 = vmatprep.subr.mxu0 0.0
    %2512 = vmatpush2.msra.mxu0 0.0
    %2513 = vmatprep.subr.mxu0 0.0
    %2514 = vmatpush2.msra.mxu0 0.0
    %2515 = vmatprep.subr.mxu0 0.0
    %2516 = vmatpush2.msra.mxu0 0.0
    %2517 = vmatprep.subr.mxu0 0.0
    %2518 = vmatpush2.msra.mxu0 0.0
    %2519 = vmatprep.subr.mxu0 0.0
    %2520 = vmatpush2.msra.mxu0 0.0
    %2521 = vmatprep.subr.mxu0 0.0
    %2522 = vmatpush2.msra.mxu0 0.0
    %2523 = vmatprep.subr.mxu0 0.0
    %2524 = vmatpush2.msra.mxu0 0.0
    %2525 = vmatprep.subr.mxu0 0.0
    %2526 = vmatpush2.msra.mxu0 0.0
    %2527 = vmatprep.mubr.f32.mxu0 0.0
    %2528 = vmatmul.mubr.f32.gmra.mxu0 %v2443
    %v2529 = vpop.f32.mrf.mxu0
    %v2530 = vadd.f32 0.0, %v2529
    %v2531 = vpop.f32.mrf.mxu0
    %2532 = vmatprep.mubr.f32.mxu0 0.0
    %2533 = vmatmul.mubr.f32.gmra.mxu0 %v2444
    %v2534 = vpop.f32.mrf.mxu0
    %v2535 = vadd.f32 0.0, %v2534
    %v2536 = vpop.f32.mrf.mxu0
    %2537 = vmatprep.mubr.f32.mxu0 0.0
    %2538 = vmatmul.mubr.f32.gmra.mxu0 %v2445
    %v2539 = vpop.f32.mrf.mxu0
    %v2540 = vadd.f32 0.0, %v2539
    %v2541 = vpop.f32.mrf.mxu0
    %2542 = vmatprep.mubr.f32.mxu0 0.0
    %2543 = vmatmul.mubr.f32.gmra.mxu0 %v2446
    %v2544 = vpop.f32.mrf.mxu0
    %v2545 = vadd.f32 0.0, %v2544
    %v2546 = vpop.f32.mrf.mxu0
    %2547 = vdwg.mxu0
    %v2548 = vadd.f32 %v2257, %v2530
    %v2549 = vadd.f32 %v2258, %v2535
    %v2550 = vadd.f32 %v2259, %v2540
    %v2551 = vadd.f32 %v2260, %v2545
    %v2552 = vld [vmem:[%s13] sm:$0x1]
    %v2554 = vlaneseq
    %v2555 = vshrl.u32 %v2554, 7
    %v2556 = vsub.s32 0, %v2555
    %v2557 = vrot.slane %v2552, %v2556
    %v2559 = vadd.f32 %v2548, %v2557
    %v2560 = vadd.f32 %v2549, %v2557
    %v2561 = vadd.f32 %v2550, %v2557
    %v2562 = vadd.f32 %v2551, %v2557
    %s2563 = scalar_lea.vmem %s3, 1
    %v2564 = vld [vmem:[%s2563] sm:$0x1]
    %s2565 = scalar_lea.vmem %s4, 1
    %v2566 = vld [vmem:[%s2565] sm:$0x1]
    %v2567 = vsel %vm202, %v2559, 0.0
    %2568 = vadd.xlane.f32.xlu0 %v2567
    %v2569 = vpop.xlane.xlu0 %2568
    %v2570 = vsel %vm202, %v2560, 0.0
    %2571 = vadd.xlane.f32.xlu0 %v2570
    %v2572 = vpop.xlane.xlu0 %2571
    %v2573 = vsel %vm202, %v2561, 0.0
    %2574 = vadd.xlane.f32.xlu0 %v2573
    %v2575 = vpop.xlane.xlu0 %2574
    %v2576 = vsel %vm202, %v2562, 0.0
    %2577 = vadd.xlane.f32.xlu0 %v2576
    %v2578 = vpop.xlane.xlu0 %2577
    %v2579 = vmul.f32 %v2569, %v215
    %v2580 = vmul.f32 %v2572, %v215
    %v2581 = vmul.f32 %v2575, %v215
    %v2582 = vmul.f32 %v2578, %v215
    %v2583 = vsub.f32 %v2559, %v2579
    %v2584 = vsub.f32 %v2560, %v2580
    %v2585 = vsub.f32 %v2561, %v2581
    %v2586 = vsub.f32 %v2562, %v2582
    %v2587 = vmul.f32 %v2583, %v2583
    %v2588 = vmul.f32 %v2584, %v2584
    %v2589 = vmul.f32 %v2585, %v2585
    %v2590 = vmul.f32 %v2586, %v2586
    %v2591 = vsel %vm202, %v2587, 0.0
    %2592 = vadd.xlane.f32.xlu0 %v2591
    %v2593 = vpop.xlane.xlu0 %2592
    %v2594 = vsel %vm202, %v2588, 0.0
    %2595 = vadd.xlane.f32.xlu0 %v2594
    %v2596 = vpop.xlane.xlu0 %2595
    %v2597 = vsel %vm202, %v2589, 0.0
    %2598 = vadd.xlane.f32.xlu0 %v2597
    %v2599 = vpop.xlane.xlu0 %2598
    %v2600 = vsel %vm202, %v2590, 0.0
    %2601 = vadd.xlane.f32.xlu0 %v2600
    %v2602 = vpop.xlane.xlu0 %2601
    %v2603 = vmul.f32 %v2593, %v215
    %v2604 = vmul.f32 %v2596, %v215
    %v2605 = vmul.f32 %v2599, %v215
    %v2606 = vmul.f32 %v2602, %v215
    %v2607 = vadd.f32 %v2603, 1e-05
    %v2608 = vadd.f32 %v2604, 1e-05
    %v2609 = vadd.f32 %v2605, 1e-05
    %v2610 = vadd.f32 %v2606, 1e-05
    %v2611 = vrsqrt.pop %v2607
    %v2612 = vrsqrt.pop %v2608
    %v2613 = vrsqrt.pop %v2609
    %v2614 = vrsqrt.pop %v2610
    %v2615 = vmul.f32 %v2583, %v2611
    %v2616 = vmul.f32 %v2584, %v2612
    %v2617 = vmul.f32 %v2585, %v2613
    %v2618 = vmul.f32 %v2586, %v2614
    %v2620 = vlaneseq
    %v2621 = vshrl.u32 %v2620, 7
    %v2622 = vsub.s32 0, %v2621
    %v2623 = vrot.slane %v2564, %v2622
    %v2625 = vmul.f32 %v2615, %v2623
    %v2626 = vmul.f32 %v2616, %v2623
    %v2627 = vmul.f32 %v2617, %v2623
    %v2628 = vmul.f32 %v2618, %v2623
    %v2630 = vlaneseq
    %v2631 = vshrl.u32 %v2630, 7
    %v2632 = vsub.s32 0, %v2631
    %v2633 = vrot.slane %v2566, %v2632
    %v2635 = vadd.f32 %v2625, %v2633
    %v2636 = vadd.f32 %v2626, %v2633
    %v2637 = vadd.f32 %v2627, %v2633
    %v2638 = vadd.f32 %v2628, %v2633
    %s2639 = scalar_lea.vmem %s5, 32
    %v2640 = vld [vmem:[%s2639] sm:$0xff]
    %v2641 = vld [vmem:[%s2639 + $0x8] sm:$0xff]
    %v2642 = vld [vmem:[%s2639 + $0x10] sm:$0xff]
    %v2643 = vld [vmem:[%s2639 + $0x18] sm:$0xff]
    %v2645 = vsel %vm202, %v2635, 0
    %v2648 = vsel %vm202, %v2636, 0
    %v2651 = vsel %vm202, %v2637, 0
    %v2654 = vsel %vm202, %v2638, 0
    %2656 = vmatprep.subr.mxu0 0.0
    %2657 = vmatpush1.msra.mxu0 0.0
    %2658 = vmatprep.subr.mxu0 0.0
    %2659 = vmatpush1.msra.mxu0 0.0
    %2660 = vmatprep.subr.mxu0 0.0
    %2661 = vmatpush1.msra.mxu0 0.0
    %2662 = vmatprep.subr.mxu0 0.0
    %2663 = vmatpush1.msra.mxu0 0.0
    %2664 = vmatprep.subr.mxu0 0.0
    %2665 = vmatpush1.msra.mxu0 0.0
    %2666 = vmatprep.subr.mxu0 0.0
    %2667 = vmatpush1.msra.mxu0 0.0
    %2668 = vmatprep.subr.mxu0 0.0
    %2669 = vmatpush1.msra.mxu0 0.0
    %2670 = vmatprep.subr.mxu0 0.0
    %2671 = vmatpush1.msra.mxu0 0.0
    %2672 = vmatprep.subr.mxu0 0.0
    %2673 = vmatpush1.msra.mxu0 0.0
    %2674 = vmatprep.subr.mxu0 0.0
    %2675 = vmatpush1.msra.mxu0 0.0
    %2676 = vmatprep.subr.mxu0 0.0
    %2677 = vmatpush1.msra.mxu0 0.0
    %2678 = vmatprep.subr.mxu0 0.0
    %2679 = vmatpush1.msra.mxu0 0.0
    %2680 = vmatprep.subr.mxu0 0.0
    %2681 = vmatpush1.msra.mxu0 %v2643
    %2682 = vmatprep.subr.mxu0 0.0
    %2683 = vmatpush1.msra.mxu0 %v2642
    %2684 = vmatprep.subr.mxu0 0.0
    %2685 = vmatpush1.msra.mxu0 %v2641
    %2686 = vmatprep.subr.mxu0 0.0
    %2687 = vmatpush1.msra.mxu0 %v2640
    %2688 = vmatprep.subr.mxu0 0.0
    %2689 = vmatpush2.msra.mxu0 0.0
    %2690 = vmatprep.subr.mxu0 0.0
    %2691 = vmatpush2.msra.mxu0 0.0
    %2692 = vmatprep.subr.mxu0 0.0
    %2693 = vmatpush2.msra.mxu0 0.0
    %2694 = vmatprep.subr.mxu0 0.0
    %2695 = vmatpush2.msra.mxu0 0.0
    %2696 = vmatprep.subr.mxu0 0.0
    %2697 = vmatpush2.msra.mxu0 0.0
    %2698 = vmatprep.subr.mxu0 0.0
    %2699 = vmatpush2.msra.mxu0 0.0
    %2700 = vmatprep.subr.mxu0 0.0
    %2701 = vmatpush2.msra.mxu0 0.0
    %2702 = vmatprep.subr.mxu0 0.0
    %2703 = vmatpush2.msra.mxu0 0.0
    %2704 = vmatprep.subr.mxu0 0.0
    %2705 = vmatpush2.msra.mxu0 0.0
    %2706 = vmatprep.subr.mxu0 0.0
    %2707 = vmatpush2.msra.mxu0 0.0
    %2708 = vmatprep.subr.mxu0 0.0
    %2709 = vmatpush2.msra.mxu0 0.0
    %2710 = vmatprep.subr.mxu0 0.0
    %2711 = vmatpush2.msra.mxu0 0.0
    %2712 = vmatprep.subr.mxu0 0.0
    %2713 = vmatpush2.msra.mxu0 0.0
    %2714 = vmatprep.subr.mxu0 0.0
    %2715 = vmatpush2.msra.mxu0 0.0
    %2716 = vmatprep.subr.mxu0 0.0
    %2717 = vmatpush2.msra.mxu0 0.0
    %2718 = vmatprep.subr.mxu0 0.0
    %2719 = vmatpush2.msra.mxu0 0.0
    %2720 = vmatprep.mubr.f32.mxu0 0.0
    %2721 = vmatmul.mubr.f32.gmra.mxu0 %v2645
    %v2722 = vpop.f32.mrf.mxu0
    %v2723 = vadd.f32 0.0, %v2722
    %v2724 = vpop.f32.mrf.mxu0
    %2725 = vmatprep.mubr.f32.mxu0 0.0
    %2726 = vmatmul.mubr.f32.gmra.mxu0 %v2648
    %v2727 = vpop.f32.mrf.mxu0
    %v2728 = vadd.f32 0.0, %v2727
    %v2729 = vpop.f32.mrf.mxu0
    %2730 = vmatprep.mubr.f32.mxu0 0.0
    %2731 = vmatmul.mubr.f32.gmra.mxu0 %v2651
    %v2732 = vpop.f32.mrf.mxu0
    %v2733 = vadd.f32 0.0, %v2732
    %v2734 = vpop.f32.mrf.mxu0
    %2735 = vmatprep.mubr.f32.mxu0 0.0
    %2736 = vmatmul.mubr.f32.gmra.mxu0 %v2654
    %v2737 = vpop.f32.mrf.mxu0
    %v2738 = vadd.f32 0.0, %v2737
    %v2739 = vpop.f32.mrf.mxu0
    %2740 = vdwg.mxu0
    %v2741 = vmul.f32 %v2723, 0.17677669
    %v2742 = vmul.f32 %v2728, 0.17677669
    %v2743 = vmul.f32 %v2733, 0.17677669
    %v2744 = vmul.f32 %v2738, 0.17677669
    %2747 = vrot.lane.b32.xlu0 %v2723, 96
    %v2748 = vpop.permute.xlu0 %2747
    %2749 = vrot.lane.b32.xlu0 %v2728, 96
    %v2750 = vpop.permute.xlu0 %2749
    %v2752 = vsel %vm387, %v2741, 0
    %v2755 = vsel %vm387, %v2742, 0
    %v2757 = vsel %vm387, %v2748, 0
    %v2759 = vsel %vm387, %v2750, 0
    %2761 = vmatprep.subr.mxu0 0.0
    %2762 = vmatpush1.xpose.msra.mxu0 0.0
    %2763 = vmatprep.subr.mxu0 0.0
    %2764 = vmatpush1.xpose.msra.mxu0 0.0
    %2765 = vmatprep.subr.mxu0 0.0
    %2766 = vmatpush1.xpose.msra.mxu0 0.0
    %2767 = vmatprep.subr.mxu0 0.0
    %2768 = vmatpush1.xpose.msra.mxu0 0.0
    %2769 = vmatprep.subr.mxu0 0.0
    %2770 = vmatpush1.xpose.msra.mxu0 0.0
    %2771 = vmatprep.subr.mxu0 0.0
    %2772 = vmatpush1.xpose.msra.mxu0 0.0
    %2773 = vmatprep.subr.mxu0 0.0
    %2774 = vmatpush1.xpose.msra.mxu0 0.0
    %2775 = vmatprep.subr.mxu0 0.0
    %2776 = vmatpush1.xpose.msra.mxu0 0.0
    %2777 = vmatprep.subr.mxu0 0.0
    %2778 = vmatpush1.xpose.msra.mxu0 0.0
    %2779 = vmatprep.subr.mxu0 0.0
    %2780 = vmatpush1.xpose.msra.mxu0 0.0
    %2781 = vmatprep.subr.mxu0 0.0
    %2782 = vmatpush1.xpose.msra.mxu0 0.0
    %2783 = vmatprep.subr.mxu0 0.0
    %2784 = vmatpush1.xpose.msra.mxu0 0.0
    %2785 = vmatprep.subr.mxu0 0.0
    %2786 = vmatpush1.xpose.msra.mxu0 0.0
    %2787 = vmatprep.subr.mxu0 0.0
    %2788 = vmatpush1.xpose.msra.mxu0 0.0
    %2789 = vmatprep.subr.mxu0 0.0
    %2790 = vmatpush1.xpose.msra.mxu0 %v2759
    %2791 = vmatprep.subr.mxu0 0.0
    %2792 = vmatpush1.xpose.msra.mxu0 %v2757
    %2793 = vmatprep.subr.mxu0 0.0
    %2794 = vmatpush2.xpose.msra.mxu0 0.0
    %2795 = vmatprep.subr.mxu0 0.0
    %2796 = vmatpush2.xpose.msra.mxu0 0.0
    %2797 = vmatprep.subr.mxu0 0.0
    %2798 = vmatpush2.xpose.msra.mxu0 0.0
    %2799 = vmatprep.subr.mxu0 0.0
    %2800 = vmatpush2.xpose.msra.mxu0 0.0
    %2801 = vmatprep.subr.mxu0 0.0
    %2802 = vmatpush2.xpose.msra.mxu0 0.0
    %2803 = vmatprep.subr.mxu0 0.0
    %2804 = vmatpush2.xpose.msra.mxu0 0.0
    %2805 = vmatprep.subr.mxu0 0.0
    %2806 = vmatpush2.xpose.msra.mxu0 0.0
    %2807 = vmatprep.subr.mxu0 0.0
    %2808 = vmatpush2.xpose.msra.mxu0 0.0
    %2809 = vmatprep.subr.mxu0 0.0
    %2810 = vmatpush2.xpose.msra.mxu0 0.0
    %2811 = vmatprep.subr.mxu0 0.0
    %2812 = vmatpush2.xpose.msra.mxu0 0.0
    %2813 = vmatprep.subr.mxu0 0.0
    %2814 = vmatpush2.xpose.msra.mxu0 0.0
    %2815 = vmatprep.subr.mxu0 0.0
    %2816 = vmatpush2.xpose.msra.mxu0 0.0
    %2817 = vmatprep.subr.mxu0 0.0
    %2818 = vmatpush2.xpose.msra.mxu0 0.0
    %2819 = vmatprep.subr.mxu0 0.0
    %2820 = vmatpush2.xpose.msra.mxu0 0.0
    %2821 = vmatprep.subr.mxu0 0.0
    %2822 = vmatpush2.xpose.msra.mxu0 0.0
    %2823 = vmatprep.subr.mxu0 0.0
    %2824 = vmatpush2.xpose.msra.mxu0 0.0
    %2825 = vmatprep.mubr.f32.mxu0 0.0
    %2826 = vmatmul.mubr.f32.gmra.mxu0 %v2752
    %v2827 = vpop.f32.mrf.mxu0
    %v2828 = vadd.f32 %v198, %v2827
    %v2829 = vpop.f32.mrf.mxu0
    %2830 = vmatprep.mubr.f32.mxu0 0.0
    %2831 = vmatmul.mubr.f32.gmra.mxu0 %v2755
    %v2832 = vpop.f32.mrf.mxu0
    %v2833 = vadd.f32 %v199, %v2832
    %v2834 = vpop.f32.mrf.mxu0
    %2835 = vdwg.mxu0
    %v2836 = vsel %vm473, %v2828, -inf
    %2837 = vmax.xlane.f32.xlu0 %v2836
    %v2838 = vpop.xlane.xlu0 %2837
    %v2839 = vsel %vm473, %v2833, -inf
    %2840 = vmax.xlane.f32.xlu0 %v2839
    %v2841 = vpop.xlane.xlu0 %2840
    %v2842 = vsub.f32 %v2828, %v2838
    %v2843 = vsub.f32 %v2833, %v2841
    %2844 = vrot.lane.b32.xlu0 %v2741, 120
    %v2845 = vpop.permute.xlu0 %2844
    %2846 = vrot.lane.b32.xlu0 %v2742, 120
    %v2847 = vpop.permute.xlu0 %2846
    %2848 = vrot.lane.b32.xlu0 %v2723, 88
    %v2849 = vpop.permute.xlu0 %2848
    %2850 = vrot.lane.b32.xlu0 %v2728, 88
    %v2851 = vpop.permute.xlu0 %2850
    %v2852 = vsel %vm387, %v2845, 0
    %v2854 = vsel %vm387, %v2847, 0
    %v2856 = vsel %vm387, %v2849, 0
    %v2858 = vsel %vm387, %v2851, 0
    %2860 = vmatprep.subr.mxu0 0.0
    %2861 = vmatpush1.xpose.msra.mxu0 0.0
    %2862 = vmatprep.subr.mxu0 0.0
    %2863 = vmatpush1.xpose.msra.mxu0 0.0
    %2864 = vmatprep.subr.mxu0 0.0
    %2865 = vmatpush1.xpose.msra.mxu0 0.0
    %2866 = vmatprep.subr.mxu0 0.0
    %2867 = vmatpush1.xpose.msra.mxu0 0.0
    %2868 = vmatprep.subr.mxu0 0.0
    %2869 = vmatpush1.xpose.msra.mxu0 0.0
    %2870 = vmatprep.subr.mxu0 0.0
    %2871 = vmatpush1.xpose.msra.mxu0 0.0
    %2872 = vmatprep.subr.mxu0 0.0
    %2873 = vmatpush1.xpose.msra.mxu0 0.0
    %2874 = vmatprep.subr.mxu0 0.0
    %2875 = vmatpush1.xpose.msra.mxu0 0.0
    %2876 = vmatprep.subr.mxu0 0.0
    %2877 = vmatpush1.xpose.msra.mxu0 0.0
    %2878 = vmatprep.subr.mxu0 0.0
    %2879 = vmatpush1.xpose.msra.mxu0 0.0
    %2880 = vmatprep.subr.mxu0 0.0
    %2881 = vmatpush1.xpose.msra.mxu0 0.0
    %2882 = vmatprep.subr.mxu0 0.0
    %2883 = vmatpush1.xpose.msra.mxu0 0.0
    %2884 = vmatprep.subr.mxu0 0.0
    %2885 = vmatpush1.xpose.msra.mxu0 0.0
    %2886 = vmatprep.subr.mxu0 0.0
    %2887 = vmatpush1.xpose.msra.mxu0 0.0
    %2888 = vmatprep.subr.mxu0 0.0
    %2889 = vmatpush1.xpose.msra.mxu0 %v2858
    %2890 = vmatprep.subr.mxu0 0.0
    %2891 = vmatpush1.xpose.msra.mxu0 %v2856
    %2892 = vmatprep.subr.mxu0 0.0
    %2893 = vmatpush2.xpose.msra.mxu0 0.0
    %2894 = vmatprep.subr.mxu0 0.0
    %2895 = vmatpush2.xpose.msra.mxu0 0.0
    %2896 = vmatprep.subr.mxu0 0.0
    %2897 = vmatpush2.xpose.msra.mxu0 0.0
    %2898 = vmatprep.subr.mxu0 0.0
    %2899 = vmatpush2.xpose.msra.mxu0 0.0
    %2900 = vmatprep.subr.mxu0 0.0
    %2901 = vmatpush2.xpose.msra.mxu0 0.0
    %2902 = vmatprep.subr.mxu0 0.0
    %2903 = vmatpush2.xpose.msra.mxu0 0.0
    %2904 = vmatprep.subr.mxu0 0.0
    %2905 = vmatpush2.xpose.msra.mxu0 0.0
    %2906 = vmatprep.subr.mxu0 0.0
    %2907 = vmatpush2.xpose.msra.mxu0 0.0
    %2908 = vmatprep.subr.mxu0 0.0
    %2909 = vmatpush2.xpose.msra.mxu0 0.0
    %2910 = vmatprep.subr.mxu0 0.0
    %2911 = vmatpush2.xpose.msra.mxu0 0.0
    %2912 = vmatprep.subr.mxu0 0.0
    %2913 = vmatpush2.xpose.msra.mxu0 0.0
    %2914 = vmatprep.subr.mxu0 0.0
    %2915 = vmatpush2.xpose.msra.mxu0 0.0
    %2916 = vmatprep.subr.mxu0 0.0
    %2917 = vmatpush2.xpose.msra.mxu0 0.0
    %2918 = vmatprep.subr.mxu0 0.0
    %2919 = vmatpush2.xpose.msra.mxu0 0.0
    %2920 = vmatprep.subr.mxu0 0.0
    %2921 = vmatpush2.xpose.msra.mxu0 0.0
    %2922 = vmatprep.subr.mxu0 0.0
    %2923 = vmatpush2.xpose.msra.mxu0 0.0
    %2924 = vmatprep.mubr.f32.mxu0 0.0
    %2925 = vmatmul.mubr.f32.gmra.mxu0 %v2852
    %v2926 = vpop.f32.mrf.mxu0
    %v2927 = vadd.f32 %v198, %v2926
    %v2928 = vpop.f32.mrf.mxu0
    %2929 = vmatprep.mubr.f32.mxu0 0.0
    %2930 = vmatmul.mubr.f32.gmra.mxu0 %v2854
    %v2931 = vpop.f32.mrf.mxu0
    %v2932 = vadd.f32 %v199, %v2931
    %v2933 = vpop.f32.mrf.mxu0
    %2934 = vdwg.mxu0
    %v2935 = vsel %vm473, %v2927, -inf
    %2936 = vmax.xlane.f32.xlu0 %v2935
    %v2937 = vpop.xlane.xlu0 %2936
    %v2938 = vsel %vm473, %v2932, -inf
    %2939 = vmax.xlane.f32.xlu0 %v2938
    %v2940 = vpop.xlane.xlu0 %2939
    %v2941 = vsub.f32 %v2927, %v2937
    %v2942 = vsub.f32 %v2932, %v2940
    %2943 = vrot.lane.b32.xlu0 %v2741, 112
    %v2944 = vpop.permute.xlu0 %2943
    %2945 = vrot.lane.b32.xlu0 %v2742, 112
    %v2946 = vpop.permute.xlu0 %2945
    %2947 = vrot.lane.b32.xlu0 %v2723, 80
    %v2948 = vpop.permute.xlu0 %2947
    %2949 = vrot.lane.b32.xlu0 %v2728, 80
    %v2950 = vpop.permute.xlu0 %2949
    %v2951 = vsel %vm387, %v2944, 0
    %v2953 = vsel %vm387, %v2946, 0
    %v2955 = vsel %vm387, %v2948, 0
    %v2957 = vsel %vm387, %v2950, 0
    %2959 = vmatprep.subr.mxu0 0.0
    %2960 = vmatpush1.xpose.msra.mxu0 0.0
    %2961 = vmatprep.subr.mxu0 0.0
    %2962 = vmatpush1.xpose.msra.mxu0 0.0
    %2963 = vmatprep.subr.mxu0 0.0
    %2964 = vmatpush1.xpose.msra.mxu0 0.0
    %2965 = vmatprep.subr.mxu0 0.0
    %2966 = vmatpush1.xpose.msra.mxu0 0.0
    %2967 = vmatprep.subr.mxu0 0.0
    %2968 = vmatpush1.xpose.msra.mxu0 0.0
    %2969 = vmatprep.subr.mxu0 0.0
    %2970 = vmatpush1.xpose.msra.mxu0 0.0
    %2971 = vmatprep.subr.mxu0 0.0
    %2972 = vmatpush1.xpose.msra.mxu0 0.0
    %2973 = vmatprep.subr.mxu0 0.0
    %2974 = vmatpush1.xpose.msra.mxu0 0.0
    %2975 = vmatprep.subr.mxu0 0.0
    %2976 = vmatpush1.xpose.msra.mxu0 0.0
    %2977 = vmatprep.subr.mxu0 0.0
    %2978 = vmatpush1.xpose.msra.mxu0 0.0
    %2979 = vmatprep.subr.mxu0 0.0
    %2980 = vmatpush1.xpose.msra.mxu0 0.0
    %2981 = vmatprep.subr.mxu0 0.0
    %2982 = vmatpush1.xpose.msra.mxu0 0.0
    %2983 = vmatprep.subr.mxu0 0.0
    %2984 = vmatpush1.xpose.msra.mxu0 0.0
    %2985 = vmatprep.subr.mxu0 0.0
    %2986 = vmatpush1.xpose.msra.mxu0 0.0
    %2987 = vmatprep.subr.mxu0 0.0
    %2988 = vmatpush1.xpose.msra.mxu0 %v2957
    %2989 = vmatprep.subr.mxu0 0.0
    %2990 = vmatpush1.xpose.msra.mxu0 %v2955
    %2991 = vmatprep.subr.mxu0 0.0
    %2992 = vmatpush2.xpose.msra.mxu0 0.0
    %2993 = vmatprep.subr.mxu0 0.0
    %2994 = vmatpush2.xpose.msra.mxu0 0.0
    %2995 = vmatprep.subr.mxu0 0.0
    %2996 = vmatpush2.xpose.msra.mxu0 0.0
    %2997 = vmatprep.subr.mxu0 0.0
    %2998 = vmatpush2.xpose.msra.mxu0 0.0
    %2999 = vmatprep.subr.mxu0 0.0
    %3000 = vmatpush2.xpose.msra.mxu0 0.0
    %3001 = vmatprep.subr.mxu0 0.0
    %3002 = vmatpush2.xpose.msra.mxu0 0.0
    %3003 = vmatprep.subr.mxu0 0.0
    %3004 = vmatpush2.xpose.msra.mxu0 0.0
    %3005 = vmatprep.subr.mxu0 0.0
    %3006 = vmatpush2.xpose.msra.mxu0 0.0
    %3007 = vmatprep.subr.mxu0 0.0
    %3008 = vmatpush2.xpose.msra.mxu0 0.0
    %3009 = vmatprep.subr.mxu0 0.0
    %3010 = vmatpush2.xpose.msra.mxu0 0.0
    %3011 = vmatprep.subr.mxu0 0.0
    %3012 = vmatpush2.xpose.msra.mxu0 0.0
    %3013 = vmatprep.subr.mxu0 0.0
    %3014 = vmatpush2.xpose.msra.mxu0 0.0
    %3015 = vmatprep.subr.mxu0 0.0
    %3016 = vmatpush2.xpose.msra.mxu0 0.0
    %3017 = vmatprep.subr.mxu0 0.0
    %3018 = vmatpush2.xpose.msra.mxu0 0.0
    %3019 = vmatprep.subr.mxu0 0.0
    %3020 = vmatpush2.xpose.msra.mxu0 0.0
    %3021 = vmatprep.subr.mxu0 0.0
    %3022 = vmatpush2.xpose.msra.mxu0 0.0
    %3023 = vmatprep.mubr.f32.mxu0 0.0
    %3024 = vmatmul.mubr.f32.gmra.mxu0 %v2951
    %v3025 = vpop.f32.mrf.mxu0
    %v3026 = vadd.f32 %v198, %v3025
    %v3027 = vpop.f32.mrf.mxu0
    %3028 = vmatprep.mubr.f32.mxu0 0.0
    %3029 = vmatmul.mubr.f32.gmra.mxu0 %v2953
    %v3030 = vpop.f32.mrf.mxu0
    %v3031 = vadd.f32 %v199, %v3030
    %v3032 = vpop.f32.mrf.mxu0
    %3033 = vdwg.mxu0
    %v3034 = vsel %vm473, %v3026, -inf
    %3035 = vmax.xlane.f32.xlu0 %v3034
    %v3036 = vpop.xlane.xlu0 %3035
    %v3037 = vsel %vm473, %v3031, -inf
    %3038 = vmax.xlane.f32.xlu0 %v3037
    %v3039 = vpop.xlane.xlu0 %3038
    %v3040 = vsub.f32 %v3026, %v3036
    %v3041 = vsub.f32 %v3031, %v3039
    %3042 = vrot.lane.b32.xlu0 %v2741, 104
    %v3043 = vpop.permute.xlu0 %3042
    %3044 = vrot.lane.b32.xlu0 %v2742, 104
    %v3045 = vpop.permute.xlu0 %3044
    %3046 = vrot.lane.b32.xlu0 %v2723, 72
    %v3047 = vpop.permute.xlu0 %3046
    %3048 = vrot.lane.b32.xlu0 %v2728, 72
    %v3049 = vpop.permute.xlu0 %3048
    %v3050 = vsel %vm387, %v3043, 0
    %v3052 = vsel %vm387, %v3045, 0
    %v3054 = vsel %vm387, %v3047, 0
    %v3056 = vsel %vm387, %v3049, 0
    %3058 = vmatprep.subr.mxu0 0.0
    %3059 = vmatpush1.xpose.msra.mxu0 0.0
    %3060 = vmatprep.subr.mxu0 0.0
    %3061 = vmatpush1.xpose.msra.mxu0 0.0
    %3062 = vmatprep.subr.mxu0 0.0
    %3063 = vmatpush1.xpose.msra.mxu0 0.0
    %3064 = vmatprep.subr.mxu0 0.0
    %3065 = vmatpush1.xpose.msra.mxu0 0.0
    %3066 = vmatprep.subr.mxu0 0.0
    %3067 = vmatpush1.xpose.msra.mxu0 0.0
    %3068 = vmatprep.subr.mxu0 0.0
    %3069 = vmatpush1.xpose.msra.mxu0 0.0
    %3070 = vmatprep.subr.mxu0 0.0
    %3071 = vmatpush1.xpose.msra.mxu0 0.0
    %3072 = vmatprep.subr.mxu0 0.0
    %3073 = vmatpush1.xpose.msra.mxu0 0.0
    %3074 = vmatprep.subr.mxu0 0.0
    %3075 = vmatpush1.xpose.msra.mxu0 0.0
    %3076 = vmatprep.subr.mxu0 0.0
    %3077 = vmatpush1.xpose.msra.mxu0 0.0
    %3078 = vmatprep.subr.mxu0 0.0
    %3079 = vmatpush1.xpose.msra.mxu0 0.0
    %3080 = vmatprep.subr.mxu0 0.0
    %3081 = vmatpush1.xpose.msra.mxu0 0.0
    %3082 = vmatprep.subr.mxu0 0.0
    %3083 = vmatpush1.xpose.msra.mxu0 0.0
    %3084 = vmatprep.subr.mxu0 0.0
    %3085 = vmatpush1.xpose.msra.mxu0 0.0
    %3086 = vmatprep.subr.mxu0 0.0
    %3087 = vmatpush1.xpose.msra.mxu0 %v3056
    %3088 = vmatprep.subr.mxu0 0.0
    %3089 = vmatpush1.xpose.msra.mxu0 %v3054
    %3090 = vmatprep.subr.mxu0 0.0
    %3091 = vmatpush2.xpose.msra.mxu0 0.0
    %3092 = vmatprep.subr.mxu0 0.0
    %3093 = vmatpush2.xpose.msra.mxu0 0.0
    %3094 = vmatprep.subr.mxu0 0.0
    %3095 = vmatpush2.xpose.msra.mxu0 0.0
    %3096 = vmatprep.subr.mxu0 0.0
    %3097 = vmatpush2.xpose.msra.mxu0 0.0
    %3098 = vmatprep.subr.mxu0 0.0
    %3099 = vmatpush2.xpose.msra.mxu0 0.0
    %3100 = vmatprep.subr.mxu0 0.0
    %3101 = vmatpush2.xpose.msra.mxu0 0.0
    %3102 = vmatprep.subr.mxu0 0.0
    %3103 = vmatpush2.xpose.msra.mxu0 0.0
    %3104 = vmatprep.subr.mxu0 0.0
    %3105 = vmatpush2.xpose.msra.mxu0 0.0
    %3106 = vmatprep.subr.mxu0 0.0
    %3107 = vmatpush2.xpose.msra.mxu0 0.0
    %3108 = vmatprep.subr.mxu0 0.0
    %3109 = vmatpush2.xpose.msra.mxu0 0.0
    %3110 = vmatprep.subr.mxu0 0.0
    %3111 = vmatpush2.xpose.msra.mxu0 0.0
    %3112 = vmatprep.subr.mxu0 0.0
    %3113 = vmatpush2.xpose.msra.mxu0 0.0
    %3114 = vmatprep.subr.mxu0 0.0
    %3115 = vmatpush2.xpose.msra.mxu0 0.0
    %3116 = vmatprep.subr.mxu0 0.0
    %3117 = vmatpush2.xpose.msra.mxu0 0.0
    %3118 = vmatprep.subr.mxu0 0.0
    %3119 = vmatpush2.xpose.msra.mxu0 0.0
    %3120 = vmatprep.subr.mxu0 0.0
    %3121 = vmatpush2.xpose.msra.mxu0 0.0
    %3122 = vmatprep.mubr.f32.mxu0 0.0
    %3123 = vmatmul.mubr.f32.gmra.mxu0 %v3050
    %v3124 = vpop.f32.mrf.mxu0
    %v3125 = vadd.f32 %v198, %v3124
    %v3126 = vpop.f32.mrf.mxu0
    %3127 = vmatprep.mubr.f32.mxu0 0.0
    %3128 = vmatmul.mubr.f32.gmra.mxu0 %v3052
    %v3129 = vpop.f32.mrf.mxu0
    %v3130 = vadd.f32 %v199, %v3129
    %v3131 = vpop.f32.mrf.mxu0
    %3132 = vdwg.mxu0
    %v3133 = vsel %vm473, %v3125, -inf
    %3134 = vmax.xlane.f32.xlu0 %v3133
    %v3135 = vpop.xlane.xlu0 %3134
    %v3136 = vsel %vm473, %v3130, -inf
    %3137 = vmax.xlane.f32.xlu0 %v3136
    %v3138 = vpop.xlane.xlu0 %3137
    %v3139 = vsub.f32 %v3125, %v3135
    %v3140 = vsub.f32 %v3130, %v3138
    %3143 = vrot.lane.b32.xlu0 %v2941, 16
    %v3144 = vpop.permute.xlu0 %3143
    %3145 = vrot.lane.b32.xlu0 %v2942, 16
    %v3146 = vpop.permute.xlu0 %3145
    %3151 = vrot.lane.b32.xlu0 %v3040, 32
    %v3152 = vpop.permute.xlu0 %3151
    %3153 = vrot.lane.b32.xlu0 %v3041, 32
    %v3154 = vpop.permute.xlu0 %3153
    %3159 = vrot.lane.b32.xlu0 %v3139, 48
    %v3160 = vpop.permute.xlu0 %3159
    %3161 = vrot.lane.b32.xlu0 %v3140, 48
    %v3162 = vpop.permute.xlu0 %3161
    %v3165 = vsel %vm473, %v2842, %v3144
    %v3166 = vsel %vm473, %v2843, %v3146
    %v3167 = vsel %vm202, %v3165, %v3152
    %v3168 = vsel %vm202, %v3166, %v3154
    %v3169 = vsel %vm807, %v3167, %v3160
    %v3170 = vsel %vm807, %v3168, %v3162
    %v3171 = vmul.f32 %v3169, 1.442695
    %v3172 = vpow.pop %v3171
    %v3173 = vmul.f32 %v3170, 1.442695
    %v3174 = vpow.pop %v3173
    %v3175 = vsel %vm473, %v3172, 0.0
    %3176 = vadd.xlane.f32.xlu0 %v3175
    %v3177 = vpop.xlane.xlu0 %3176
    %v3178 = vsel %vm473, %v3174, 0.0
    %3179 = vadd.xlane.f32.xlu0 %v3178
    %v3180 = vpop.xlane.xlu0 %3179
    %v3181 = vrcp.pop %v3177
    %v3182 = vrcp.pop %v3180
    %v3183 = vmul.f32 %v3172, %v3181
    %v3184 = vmul.f32 %v3174, %v3182
    %3185 = vrot.lane.b32.xlu0 %v2723, 64
    %v3186 = vpop.permute.xlu0 %3185
    %3187 = vrot.lane.b32.xlu0 %v2728, 64
    %v3188 = vpop.permute.xlu0 %3187
    %v3192 = vsel %vm473, %v3183, 0
    %v3195 = vsel %vm473, %v3184, 0
    %3197 = vmatprep.subr.mxu0 0.0
    %3198 = vmatpush1.msra.mxu0 0.0
    %3199 = vmatprep.subr.mxu0 0.0
    %3200 = vmatpush1.msra.mxu0 0.0
    %3201 = vmatprep.subr.mxu0 0.0
    %3202 = vmatpush1.msra.mxu0 0.0
    %3203 = vmatprep.subr.mxu0 0.0
    %3204 = vmatpush1.msra.mxu0 0.0
    %3205 = vmatprep.subr.mxu0 0.0
    %3206 = vmatpush1.msra.mxu0 0.0
    %3207 = vmatprep.subr.mxu0 0.0
    %3208 = vmatpush1.msra.mxu0 0.0
    %3209 = vmatprep.subr.mxu0 0.0
    %3210 = vmatpush1.msra.mxu0 0.0
    %3211 = vmatprep.subr.mxu0 0.0
    %3212 = vmatpush1.msra.mxu0 0.0
    %3213 = vmatprep.subr.mxu0 0.0
    %3214 = vmatpush1.msra.mxu0 0.0
    %3215 = vmatprep.subr.mxu0 0.0
    %3216 = vmatpush1.msra.mxu0 0.0
    %3217 = vmatprep.subr.mxu0 0.0
    %3218 = vmatpush1.msra.mxu0 0.0
    %3219 = vmatprep.subr.mxu0 0.0
    %3220 = vmatpush1.msra.mxu0 0.0
    %3221 = vmatprep.subr.mxu0 0.0
    %3222 = vmatpush1.msra.mxu0 0.0
    %3223 = vmatprep.subr.mxu0 0.0
    %3224 = vmatpush1.msra.mxu0 0.0
    %3225 = vmatprep.subr.mxu0 0.0
    %3226 = vmatpush1.msra.mxu0 %v3188
    %3227 = vmatprep.subr.mxu0 0.0
    %3228 = vmatpush1.msra.mxu0 %v3186
    %3229 = vmatprep.subr.mxu0 0.0
    %3230 = vmatpush2.msra.mxu0 0.0
    %3231 = vmatprep.subr.mxu0 0.0
    %3232 = vmatpush2.msra.mxu0 0.0
    %3233 = vmatprep.subr.mxu0 0.0
    %3234 = vmatpush2.msra.mxu0 0.0
    %3235 = vmatprep.subr.mxu0 0.0
    %3236 = vmatpush2.msra.mxu0 0.0
    %3237 = vmatprep.subr.mxu0 0.0
    %3238 = vmatpush2.msra.mxu0 0.0
    %3239 = vmatprep.subr.mxu0 0.0
    %3240 = vmatpush2.msra.mxu0 0.0
    %3241 = vmatprep.subr.mxu0 0.0
    %3242 = vmatpush2.msra.mxu0 0.0
    %3243 = vmatprep.subr.mxu0 0.0
    %3244 = vmatpush2.msra.mxu0 0.0
    %3245 = vmatprep.subr.mxu0 0.0
    %3246 = vmatpush2.msra.mxu0 0.0
    %3247 = vmatprep.subr.mxu0 0.0
    %3248 = vmatpush2.msra.mxu0 0.0
    %3249 = vmatprep.subr.mxu0 0.0
    %3250 = vmatpush2.msra.mxu0 0.0
    %3251 = vmatprep.subr.mxu0 0.0
    %3252 = vmatpush2.msra.mxu0 0.0
    %3253 = vmatprep.subr.mxu0 0.0
    %3254 = vmatpush2.msra.mxu0 0.0
    %3255 = vmatprep.subr.mxu0 0.0
    %3256 = vmatpush2.msra.mxu0 0.0
    %3257 = vmatprep.subr.mxu0 0.0
    %3258 = vmatpush2.msra.mxu0 0.0
    %3259 = vmatprep.subr.mxu0 0.0
    %3260 = vmatpush2.msra.mxu0 0.0
    %3261 = vmatprep.mubr.f32.mxu0 0.0
    %3262 = vmatmul.mubr.f32.gmra.mxu0 %v3192
    %v3263 = vpop.f32.mrf.mxu0
    %v3264 = vadd.f32 0.0, %v3263
    %v3265 = vpop.f32.mrf.mxu0
    %3266 = vmatprep.mubr.f32.mxu0 0.0
    %3267 = vmatmul.mubr.f32.gmra.mxu0 %v3195
    %v3268 = vpop.f32.mrf.mxu0
    %v3269 = vadd.f32 0.0, %v3268
    %v3270 = vpop.f32.mrf.mxu0
    %3271 = vdwg.mxu0
    %3274 = vrot.lane.b32.xlu0 %v3172, 112
    %v3275 = vpop.permute.xlu0 %3274
    %3276 = vrot.lane.b32.xlu0 %v3174, 112
    %v3277 = vpop.permute.xlu0 %3276
    %v3280 = vsel %vm473, %v3275, 0.0
    %3281 = vadd.xlane.f32.xlu0 %v3280
    %v3282 = vpop.xlane.xlu0 %3281
    %v3283 = vsel %vm473, %v3277, 0.0
    %3284 = vadd.xlane.f32.xlu0 %v3283
    %v3285 = vpop.xlane.xlu0 %3284
    %v3286 = vrcp.pop %v3282
    %v3287 = vrcp.pop %v3285
    %v3288 = vmul.f32 %v3172, %v3286
    %v3289 = vmul.f32 %v3174, %v3287
    %3292 = vrot.lane.b32.xlu0 %v3288, 112
    %v3293 = vpop.permute.xlu0 %3292
    %3294 = vrot.lane.b32.xlu0 %v3289, 112
    %v3295 = vpop.permute.xlu0 %3294
    %3296 = vrot.lane.b32.xlu0 %v2723, 56
    %v3297 = vpop.permute.xlu0 %3296
    %3298 = vrot.lane.b32.xlu0 %v2728, 56
    %v3299 = vpop.permute.xlu0 %3298
    %v3302 = vsel %vm473, %v3293, 0
    %v3304 = vsel %vm473, %v3295, 0
    %3306 = vmatprep.subr.mxu0 0.0
    %3307 = vmatpush1.msra.mxu0 0.0
    %3308 = vmatprep.subr.mxu0 0.0
    %3309 = vmatpush1.msra.mxu0 0.0
    %3310 = vmatprep.subr.mxu0 0.0
    %3311 = vmatpush1.msra.mxu0 0.0
    %3312 = vmatprep.subr.mxu0 0.0
    %3313 = vmatpush1.msra.mxu0 0.0
    %3314 = vmatprep.subr.mxu0 0.0
    %3315 = vmatpush1.msra.mxu0 0.0
    %3316 = vmatprep.subr.mxu0 0.0
    %3317 = vmatpush1.msra.mxu0 0.0
    %3318 = vmatprep.subr.mxu0 0.0
    %3319 = vmatpush1.msra.mxu0 0.0
    %3320 = vmatprep.subr.mxu0 0.0
    %3321 = vmatpush1.msra.mxu0 0.0
    %3322 = vmatprep.subr.mxu0 0.0
    %3323 = vmatpush1.msra.mxu0 0.0
    %3324 = vmatprep.subr.mxu0 0.0
    %3325 = vmatpush1.msra.mxu0 0.0
    %3326 = vmatprep.subr.mxu0 0.0
    %3327 = vmatpush1.msra.mxu0 0.0
    %3328 = vmatprep.subr.mxu0 0.0
    %3329 = vmatpush1.msra.mxu0 0.0
    %3330 = vmatprep.subr.mxu0 0.0
    %3331 = vmatpush1.msra.mxu0 0.0
    %3332 = vmatprep.subr.mxu0 0.0
    %3333 = vmatpush1.msra.mxu0 0.0
    %3334 = vmatprep.subr.mxu0 0.0
    %3335 = vmatpush1.msra.mxu0 %v3299
    %3336 = vmatprep.subr.mxu0 0.0
    %3337 = vmatpush1.msra.mxu0 %v3297
    %3338 = vmatprep.subr.mxu0 0.0
    %3339 = vmatpush2.msra.mxu0 0.0
    %3340 = vmatprep.subr.mxu0 0.0
    %3341 = vmatpush2.msra.mxu0 0.0
    %3342 = vmatprep.subr.mxu0 0.0
    %3343 = vmatpush2.msra.mxu0 0.0
    %3344 = vmatprep.subr.mxu0 0.0
    %3345 = vmatpush2.msra.mxu0 0.0
    %3346 = vmatprep.subr.mxu0 0.0
    %3347 = vmatpush2.msra.mxu0 0.0
    %3348 = vmatprep.subr.mxu0 0.0
    %3349 = vmatpush2.msra.mxu0 0.0
    %3350 = vmatprep.subr.mxu0 0.0
    %3351 = vmatpush2.msra.mxu0 0.0
    %3352 = vmatprep.subr.mxu0 0.0
    %3353 = vmatpush2.msra.mxu0 0.0
    %3354 = vmatprep.subr.mxu0 0.0
    %3355 = vmatpush2.msra.mxu0 0.0
    %3356 = vmatprep.subr.mxu0 0.0
    %3357 = vmatpush2.msra.mxu0 0.0
    %3358 = vmatprep.subr.mxu0 0.0
    %3359 = vmatpush2.msra.mxu0 0.0
    %3360 = vmatprep.subr.mxu0 0.0
    %3361 = vmatpush2.msra.mxu0 0.0
    %3362 = vmatprep.subr.mxu0 0.0
    %3363 = vmatpush2.msra.mxu0 0.0
    %3364 = vmatprep.subr.mxu0 0.0
    %3365 = vmatpush2.msra.mxu0 0.0
    %3366 = vmatprep.subr.mxu0 0.0
    %3367 = vmatpush2.msra.mxu0 0.0
    %3368 = vmatprep.subr.mxu0 0.0
    %3369 = vmatpush2.msra.mxu0 0.0
    %3370 = vmatprep.mubr.f32.mxu0 0.0
    %3371 = vmatmul.mubr.f32.gmra.mxu0 %v3302
    %v3372 = vpop.f32.mrf.mxu0
    %v3373 = vadd.f32 0.0, %v3372
    %v3374 = vpop.f32.mrf.mxu0
    %3375 = vmatprep.mubr.f32.mxu0 0.0
    %3376 = vmatmul.mubr.f32.gmra.mxu0 %v3304
    %v3377 = vpop.f32.mrf.mxu0
    %v3378 = vadd.f32 0.0, %v3377
    %v3379 = vpop.f32.mrf.mxu0
    %3380 = vdwg.mxu0
    %3381 = vrot.lane.b32.xlu0 %v3172, 96
    %v3382 = vpop.permute.xlu0 %3381
    %3383 = vrot.lane.b32.xlu0 %v3174, 96
    %v3384 = vpop.permute.xlu0 %3383
    %v3387 = vsel %vm473, %v3382, 0.0
    %3388 = vadd.xlane.f32.xlu0 %v3387
    %v3389 = vpop.xlane.xlu0 %3388
    %v3390 = vsel %vm473, %v3384, 0.0
    %3391 = vadd.xlane.f32.xlu0 %v3390
    %v3392 = vpop.xlane.xlu0 %3391
    %v3393 = vrcp.pop %v3389
    %v3394 = vrcp.pop %v3392
    %v3395 = vmul.f32 %v3172, %v3393
    %v3396 = vmul.f32 %v3174, %v3394
    %3399 = vrot.lane.b32.xlu0 %v3395, 96
    %v3400 = vpop.permute.xlu0 %3399
    %3401 = vrot.lane.b32.xlu0 %v3396, 96
    %v3402 = vpop.permute.xlu0 %3401
    %3403 = vrot.lane.b32.xlu0 %v2723, 48
    %v3404 = vpop.permute.xlu0 %3403
    %3405 = vrot.lane.b32.xlu0 %v2728, 48
    %v3406 = vpop.permute.xlu0 %3405
    %v3409 = vsel %vm473, %v3400, 0
    %v3411 = vsel %vm473, %v3402, 0
    %3413 = vmatprep.subr.mxu0 0.0
    %3414 = vmatpush1.msra.mxu0 0.0
    %3415 = vmatprep.subr.mxu0 0.0
    %3416 = vmatpush1.msra.mxu0 0.0
    %3417 = vmatprep.subr.mxu0 0.0
    %3418 = vmatpush1.msra.mxu0 0.0
    %3419 = vmatprep.subr.mxu0 0.0
    %3420 = vmatpush1.msra.mxu0 0.0
    %3421 = vmatprep.subr.mxu0 0.0
    %3422 = vmatpush1.msra.mxu0 0.0
    %3423 = vmatprep.subr.mxu0 0.0
    %3424 = vmatpush1.msra.mxu0 0.0
    %3425 = vmatprep.subr.mxu0 0.0
    %3426 = vmatpush1.msra.mxu0 0.0
    %3427 = vmatprep.subr.mxu0 0.0
    %3428 = vmatpush1.msra.mxu0 0.0
    %3429 = vmatprep.subr.mxu0 0.0
    %3430 = vmatpush1.msra.mxu0 0.0
    %3431 = vmatprep.subr.mxu0 0.0
    %3432 = vmatpush1.msra.mxu0 0.0
    %3433 = vmatprep.subr.mxu0 0.0
    %3434 = vmatpush1.msra.mxu0 0.0
    %3435 = vmatprep.subr.mxu0 0.0
    %3436 = vmatpush1.msra.mxu0 0.0
    %3437 = vmatprep.subr.mxu0 0.0
    %3438 = vmatpush1.msra.mxu0 0.0
    %3439 = vmatprep.subr.mxu0 0.0
    %3440 = vmatpush1.msra.mxu0 0.0
    %3441 = vmatprep.subr.mxu0 0.0
    %3442 = vmatpush1.msra.mxu0 %v3406
    %3443 = vmatprep.subr.mxu0 0.0
    %3444 = vmatpush1.msra.mxu0 %v3404
    %3445 = vmatprep.subr.mxu0 0.0
    %3446 = vmatpush2.msra.mxu0 0.0
    %3447 = vmatprep.subr.mxu0 0.0
    %3448 = vmatpush2.msra.mxu0 0.0
    %3449 = vmatprep.subr.mxu0 0.0
    %3450 = vmatpush2.msra.mxu0 0.0
    %3451 = vmatprep.subr.mxu0 0.0
    %3452 = vmatpush2.msra.mxu0 0.0
    %3453 = vmatprep.subr.mxu0 0.0
    %3454 = vmatpush2.msra.mxu0 0.0
    %3455 = vmatprep.subr.mxu0 0.0
    %3456 = vmatpush2.msra.mxu0 0.0
    %3457 = vmatprep.subr.mxu0 0.0
    %3458 = vmatpush2.msra.mxu0 0.0
    %3459 = vmatprep.subr.mxu0 0.0
    %3460 = vmatpush2.msra.mxu0 0.0
    %3461 = vmatprep.subr.mxu0 0.0
    %3462 = vmatpush2.msra.mxu0 0.0
    %3463 = vmatprep.subr.mxu0 0.0
    %3464 = vmatpush2.msra.mxu0 0.0
    %3465 = vmatprep.subr.mxu0 0.0
    %3466 = vmatpush2.msra.mxu0 0.0
    %3467 = vmatprep.subr.mxu0 0.0
    %3468 = vmatpush2.msra.mxu0 0.0
    %3469 = vmatprep.subr.mxu0 0.0
    %3470 = vmatpush2.msra.mxu0 0.0
    %3471 = vmatprep.subr.mxu0 0.0
    %3472 = vmatpush2.msra.mxu0 0.0
    %3473 = vmatprep.subr.mxu0 0.0
    %3474 = vmatpush2.msra.mxu0 0.0
    %3475 = vmatprep.subr.mxu0 0.0
    %3476 = vmatpush2.msra.mxu0 0.0
    %3477 = vmatprep.mubr.f32.mxu0 0.0
    %3478 = vmatmul.mubr.f32.gmra.mxu0 %v3409
    %v3479 = vpop.f32.mrf.mxu0
    %v3480 = vadd.f32 0.0, %v3479
    %v3481 = vpop.f32.mrf.mxu0
    %3482 = vmatprep.mubr.f32.mxu0 0.0
    %3483 = vmatmul.mubr.f32.gmra.mxu0 %v3411
    %v3484 = vpop.f32.mrf.mxu0
    %v3485 = vadd.f32 0.0, %v3484
    %v3486 = vpop.f32.mrf.mxu0
    %3487 = vdwg.mxu0
    %3488 = vrot.lane.b32.xlu0 %v3172, 80
    %v3489 = vpop.permute.xlu0 %3488
    %3490 = vrot.lane.b32.xlu0 %v3174, 80
    %v3491 = vpop.permute.xlu0 %3490
    %v3494 = vsel %vm473, %v3489, 0.0
    %3495 = vadd.xlane.f32.xlu0 %v3494
    %v3496 = vpop.xlane.xlu0 %3495
    %v3497 = vsel %vm473, %v3491, 0.0
    %3498 = vadd.xlane.f32.xlu0 %v3497
    %v3499 = vpop.xlane.xlu0 %3498
    %v3500 = vrcp.pop %v3496
    %v3501 = vrcp.pop %v3499
    %v3502 = vmul.f32 %v3172, %v3500
    %v3503 = vmul.f32 %v3174, %v3501
    %3506 = vrot.lane.b32.xlu0 %v3502, 80
    %v3507 = vpop.permute.xlu0 %3506
    %3508 = vrot.lane.b32.xlu0 %v3503, 80
    %v3509 = vpop.permute.xlu0 %3508
    %3510 = vrot.lane.b32.xlu0 %v2723, 40
    %v3511 = vpop.permute.xlu0 %3510
    %3512 = vrot.lane.b32.xlu0 %v2728, 40
    %v3513 = vpop.permute.xlu0 %3512
    %v3516 = vsel %vm473, %v3507, 0
    %v3518 = vsel %vm473, %v3509, 0
    %3520 = vmatprep.subr.mxu0 0.0
    %3521 = vmatpush1.msra.mxu0 0.0
    %3522 = vmatprep.subr.mxu0 0.0
    %3523 = vmatpush1.msra.mxu0 0.0
    %3524 = vmatprep.subr.mxu0 0.0
    %3525 = vmatpush1.msra.mxu0 0.0
    %3526 = vmatprep.subr.mxu0 0.0
    %3527 = vmatpush1.msra.mxu0 0.0
    %3528 = vmatprep.subr.mxu0 0.0
    %3529 = vmatpush1.msra.mxu0 0.0
    %3530 = vmatprep.subr.mxu0 0.0
    %3531 = vmatpush1.msra.mxu0 0.0
    %3532 = vmatprep.subr.mxu0 0.0
    %3533 = vmatpush1.msra.mxu0 0.0
    %3534 = vmatprep.subr.mxu0 0.0
    %3535 = vmatpush1.msra.mxu0 0.0
    %3536 = vmatprep.subr.mxu0 0.0
    %3537 = vmatpush1.msra.mxu0 0.0
    %3538 = vmatprep.subr.mxu0 0.0
    %3539 = vmatpush1.msra.mxu0 0.0
    %3540 = vmatprep.subr.mxu0 0.0
    %3541 = vmatpush1.msra.mxu0 0.0
    %3542 = vmatprep.subr.mxu0 0.0
    %3543 = vmatpush1.msra.mxu0 0.0
    %3544 = vmatprep.subr.mxu0 0.0
    %3545 = vmatpush1.msra.mxu0 0.0
    %3546 = vmatprep.subr.mxu0 0.0
    %3547 = vmatpush1.msra.mxu0 0.0
    %3548 = vmatprep.subr.mxu0 0.0
    %3549 = vmatpush1.msra.mxu0 %v3513
    %3550 = vmatprep.subr.mxu0 0.0
    %3551 = vmatpush1.msra.mxu0 %v3511
    %3552 = vmatprep.subr.mxu0 0.0
    %3553 = vmatpush2.msra.mxu0 0.0
    %3554 = vmatprep.subr.mxu0 0.0
    %3555 = vmatpush2.msra.mxu0 0.0
    %3556 = vmatprep.subr.mxu0 0.0
    %3557 = vmatpush2.msra.mxu0 0.0
    %3558 = vmatprep.subr.mxu0 0.0
    %3559 = vmatpush2.msra.mxu0 0.0
    %3560 = vmatprep.subr.mxu0 0.0
    %3561 = vmatpush2.msra.mxu0 0.0
    %3562 = vmatprep.subr.mxu0 0.0
    %3563 = vmatpush2.msra.mxu0 0.0
    %3564 = vmatprep.subr.mxu0 0.0
    %3565 = vmatpush2.msra.mxu0 0.0
    %3566 = vmatprep.subr.mxu0 0.0
    %3567 = vmatpush2.msra.mxu0 0.0
    %3568 = vmatprep.subr.mxu0 0.0
    %3569 = vmatpush2.msra.mxu0 0.0
    %3570 = vmatprep.subr.mxu0 0.0
    %3571 = vmatpush2.msra.mxu0 0.0
    %3572 = vmatprep.subr.mxu0 0.0
    %3573 = vmatpush2.msra.mxu0 0.0
    %3574 = vmatprep.subr.mxu0 0.0
    %3575 = vmatpush2.msra.mxu0 0.0
    %3576 = vmatprep.subr.mxu0 0.0
    %3577 = vmatpush2.msra.mxu0 0.0
    %3578 = vmatprep.subr.mxu0 0.0
    %3579 = vmatpush2.msra.mxu0 0.0
    %3580 = vmatprep.subr.mxu0 0.0
    %3581 = vmatpush2.msra.mxu0 0.0
    %3582 = vmatprep.subr.mxu0 0.0
    %3583 = vmatpush2.msra.mxu0 0.0
    %3584 = vmatprep.mubr.f32.mxu0 0.0
    %3585 = vmatmul.mubr.f32.gmra.mxu0 %v3516
    %v3586 = vpop.f32.mrf.mxu0
    %v3587 = vadd.f32 0.0, %v3586
    %v3588 = vpop.f32.mrf.mxu0
    %3589 = vmatprep.mubr.f32.mxu0 0.0
    %3590 = vmatmul.mubr.f32.gmra.mxu0 %v3518
    %v3591 = vpop.f32.mrf.mxu0
    %v3592 = vadd.f32 0.0, %v3591
    %v3593 = vpop.f32.mrf.mxu0
    %3594 = vdwg.mxu0
    %3597 = vrot.lane.b32.xlu0 %v3373, 8
    %v3598 = vpop.permute.xlu0 %3597
    %3599 = vrot.lane.b32.xlu0 %v3378, 8
    %v3600 = vpop.permute.xlu0 %3599
    %3605 = vrot.lane.b32.xlu0 %v3480, 16
    %v3606 = vpop.permute.xlu0 %3605
    %3607 = vrot.lane.b32.xlu0 %v3485, 16
    %v3608 = vpop.permute.xlu0 %3607
    %3613 = vrot.lane.b32.xlu0 %v3587, 24
    %v3614 = vpop.permute.xlu0 %3613
    %3615 = vrot.lane.b32.xlu0 %v3592, 24
    %v3616 = vpop.permute.xlu0 %3615
    %v3619 = vsel %vm387, %v3264, %v3598
    %v3620 = vsel %vm387, %v3269, %v3600
    %v3621 = vsel %vm473, %v3619, %v3606
    %v3622 = vsel %vm473, %v3620, %v3608
    %v3623 = vsel %vm1262, %v3621, %v3614
    %v3624 = vsel %vm1262, %v3622, %v3616
    %3627 = vrot.lane.b32.xlu0 %v2733, 96
    %v3628 = vpop.permute.xlu0 %3627
    %3629 = vrot.lane.b32.xlu0 %v2738, 96
    %v3630 = vpop.permute.xlu0 %3629
    %v3632 = vsel %vm387, %v2743, 0
    %v3635 = vsel %vm387, %v2744, 0
    %v3637 = vsel %vm387, %v3628, 0
    %v3639 = vsel %vm387, %v3630, 0
    %3641 = vmatprep.subr.mxu0 0.0
    %3642 = vmatpush1.xpose.msra.mxu0 0.0
    %3643 = vmatprep.subr.mxu0 0.0
    %3644 = vmatpush1.xpose.msra.mxu0 0.0
    %3645 = vmatprep.subr.mxu0 0.0
    %3646 = vmatpush1.xpose.msra.mxu0 0.0
    %3647 = vmatprep.subr.mxu0 0.0
    %3648 = vmatpush1.xpose.msra.mxu0 0.0
    %3649 = vmatprep.subr.mxu0 0.0
    %3650 = vmatpush1.xpose.msra.mxu0 0.0
    %3651 = vmatprep.subr.mxu0 0.0
    %3652 = vmatpush1.xpose.msra.mxu0 0.0
    %3653 = vmatprep.subr.mxu0 0.0
    %3654 = vmatpush1.xpose.msra.mxu0 0.0
    %3655 = vmatprep.subr.mxu0 0.0
    %3656 = vmatpush1.xpose.msra.mxu0 0.0
    %3657 = vmatprep.subr.mxu0 0.0
    %3658 = vmatpush1.xpose.msra.mxu0 0.0
    %3659 = vmatprep.subr.mxu0 0.0
    %3660 = vmatpush1.xpose.msra.mxu0 0.0
    %3661 = vmatprep.subr.mxu0 0.0
    %3662 = vmatpush1.xpose.msra.mxu0 0.0
    %3663 = vmatprep.subr.mxu0 0.0
    %3664 = vmatpush1.xpose.msra.mxu0 0.0
    %3665 = vmatprep.subr.mxu0 0.0
    %3666 = vmatpush1.xpose.msra.mxu0 0.0
    %3667 = vmatprep.subr.mxu0 0.0
    %3668 = vmatpush1.xpose.msra.mxu0 0.0
    %3669 = vmatprep.subr.mxu0 0.0
    %3670 = vmatpush1.xpose.msra.mxu0 %v3639
    %3671 = vmatprep.subr.mxu0 0.0
    %3672 = vmatpush1.xpose.msra.mxu0 %v3637
    %3673 = vmatprep.subr.mxu0 0.0
    %3674 = vmatpush2.xpose.msra.mxu0 0.0
    %3675 = vmatprep.subr.mxu0 0.0
    %3676 = vmatpush2.xpose.msra.mxu0 0.0
    %3677 = vmatprep.subr.mxu0 0.0
    %3678 = vmatpush2.xpose.msra.mxu0 0.0
    %3679 = vmatprep.subr.mxu0 0.0
    %3680 = vmatpush2.xpose.msra.mxu0 0.0
    %3681 = vmatprep.subr.mxu0 0.0
    %3682 = vmatpush2.xpose.msra.mxu0 0.0
    %3683 = vmatprep.subr.mxu0 0.0
    %3684 = vmatpush2.xpose.msra.mxu0 0.0
    %3685 = vmatprep.subr.mxu0 0.0
    %3686 = vmatpush2.xpose.msra.mxu0 0.0
    %3687 = vmatprep.subr.mxu0 0.0
    %3688 = vmatpush2.xpose.msra.mxu0 0.0
    %3689 = vmatprep.subr.mxu0 0.0
    %3690 = vmatpush2.xpose.msra.mxu0 0.0
    %3691 = vmatprep.subr.mxu0 0.0
    %3692 = vmatpush2.xpose.msra.mxu0 0.0
    %3693 = vmatprep.subr.mxu0 0.0
    %3694 = vmatpush2.xpose.msra.mxu0 0.0
    %3695 = vmatprep.subr.mxu0 0.0
    %3696 = vmatpush2.xpose.msra.mxu0 0.0
    %3697 = vmatprep.subr.mxu0 0.0
    %3698 = vmatpush2.xpose.msra.mxu0 0.0
    %3699 = vmatprep.subr.mxu0 0.0
    %3700 = vmatpush2.xpose.msra.mxu0 0.0
    %3701 = vmatprep.subr.mxu0 0.0
    %3702 = vmatpush2.xpose.msra.mxu0 0.0
    %3703 = vmatprep.subr.mxu0 0.0
    %3704 = vmatpush2.xpose.msra.mxu0 0.0
    %3705 = vmatprep.mubr.f32.mxu0 0.0
    %3706 = vmatmul.mubr.f32.gmra.mxu0 %v3632
    %v3707 = vpop.f32.mrf.mxu0
    %v3708 = vadd.f32 %v198, %v3707
    %v3709 = vpop.f32.mrf.mxu0
    %3710 = vmatprep.mubr.f32.mxu0 0.0
    %3711 = vmatmul.mubr.f32.gmra.mxu0 %v3635
    %v3712 = vpop.f32.mrf.mxu0
    %v3713 = vadd.f32 %v199, %v3712
    %v3714 = vpop.f32.mrf.mxu0
    %3715 = vdwg.mxu0
    %v3716 = vsel %vm473, %v3708, -inf
    %3717 = vmax.xlane.f32.xlu0 %v3716
    %v3718 = vpop.xlane.xlu0 %3717
    %v3719 = vsel %vm473, %v3713, -inf
    %3720 = vmax.xlane.f32.xlu0 %v3719
    %v3721 = vpop.xlane.xlu0 %3720
    %v3722 = vsub.f32 %v3708, %v3718
    %v3723 = vsub.f32 %v3713, %v3721
    %3724 = vrot.lane.b32.xlu0 %v2743, 120
    %v3725 = vpop.permute.xlu0 %3724
    %3726 = vrot.lane.b32.xlu0 %v2744, 120
    %v3727 = vpop.permute.xlu0 %3726
    %3728 = vrot.lane.b32.xlu0 %v2733, 88
    %v3729 = vpop.permute.xlu0 %3728
    %3730 = vrot.lane.b32.xlu0 %v2738, 88
    %v3731 = vpop.permute.xlu0 %3730
    %v3732 = vsel %vm387, %v3725, 0
    %v3734 = vsel %vm387, %v3727, 0
    %v3736 = vsel %vm387, %v3729, 0
    %v3738 = vsel %vm387, %v3731, 0
    %3740 = vmatprep.subr.mxu0 0.0
    %3741 = vmatpush1.xpose.msra.mxu0 0.0
    %3742 = vmatprep.subr.mxu0 0.0
    %3743 = vmatpush1.xpose.msra.mxu0 0.0
    %3744 = vmatprep.subr.mxu0 0.0
    %3745 = vmatpush1.xpose.msra.mxu0 0.0
    %3746 = vmatprep.subr.mxu0 0.0
    %3747 = vmatpush1.xpose.msra.mxu0 0.0
    %3748 = vmatprep.subr.mxu0 0.0
    %3749 = vmatpush1.xpose.msra.mxu0 0.0
    %3750 = vmatprep.subr.mxu0 0.0
    %3751 = vmatpush1.xpose.msra.mxu0 0.0
    %3752 = vmatprep.subr.mxu0 0.0
    %3753 = vmatpush1.xpose.msra.mxu0 0.0
    %3754 = vmatprep.subr.mxu0 0.0
    %3755 = vmatpush1.xpose.msra.mxu0 0.0
    %3756 = vmatprep.subr.mxu0 0.0
    %3757 = vmatpush1.xpose.msra.mxu0 0.0
    %3758 = vmatprep.subr.mxu0 0.0
    %3759 = vmatpush1.xpose.msra.mxu0 0.0
    %3760 = vmatprep.subr.mxu0 0.0
    %3761 = vmatpush1.xpose.msra.mxu0 0.0
    %3762 = vmatprep.subr.mxu0 0.0
    %3763 = vmatpush1.xpose.msra.mxu0 0.0
    %3764 = vmatprep.subr.mxu0 0.0
    %3765 = vmatpush1.xpose.msra.mxu0 0.0
    %3766 = vmatprep.subr.mxu0 0.0
    %3767 = vmatpush1.xpose.msra.mxu0 0.0
    %3768 = vmatprep.subr.mxu0 0.0
    %3769 = vmatpush1.xpose.msra.mxu0 %v3738
    %3770 = vmatprep.subr.mxu0 0.0
    %3771 = vmatpush1.xpose.msra.mxu0 %v3736
    %3772 = vmatprep.subr.mxu0 0.0
    %3773 = vmatpush2.xpose.msra.mxu0 0.0
    %3774 = vmatprep.subr.mxu0 0.0
    %3775 = vmatpush2.xpose.msra.mxu0 0.0
    %3776 = vmatprep.subr.mxu0 0.0
    %3777 = vmatpush2.xpose.msra.mxu0 0.0
    %3778 = vmatprep.subr.mxu0 0.0
    %3779 = vmatpush2.xpose.msra.mxu0 0.0
    %3780 = vmatprep.subr.mxu0 0.0
    %3781 = vmatpush2.xpose.msra.mxu0 0.0
    %3782 = vmatprep.subr.mxu0 0.0
    %3783 = vmatpush2.xpose.msra.mxu0 0.0
    %3784 = vmatprep.subr.mxu0 0.0
    %3785 = vmatpush2.xpose.msra.mxu0 0.0
    %3786 = vmatprep.subr.mxu0 0.0
    %3787 = vmatpush2.xpose.msra.mxu0 0.0
    %3788 = vmatprep.subr.mxu0 0.0
    %3789 = vmatpush2.xpose.msra.mxu0 0.0
    %3790 = vmatprep.subr.mxu0 0.0
    %3791 = vmatpush2.xpose.msra.mxu0 0.0
    %3792 = vmatprep.subr.mxu0 0.0
    %3793 = vmatpush2.xpose.msra.mxu0 0.0
    %3794 = vmatprep.subr.mxu0 0.0
    %3795 = vmatpush2.xpose.msra.mxu0 0.0
    %3796 = vmatprep.subr.mxu0 0.0
    %3797 = vmatpush2.xpose.msra.mxu0 0.0
    %3798 = vmatprep.subr.mxu0 0.0
    %3799 = vmatpush2.xpose.msra.mxu0 0.0
    %3800 = vmatprep.subr.mxu0 0.0
    %3801 = vmatpush2.xpose.msra.mxu0 0.0
    %3802 = vmatprep.subr.mxu0 0.0
    %3803 = vmatpush2.xpose.msra.mxu0 0.0
    %3804 = vmatprep.mubr.f32.mxu0 0.0
    %3805 = vmatmul.mubr.f32.gmra.mxu0 %v3732
    %v3806 = vpop.f32.mrf.mxu0
    %v3807 = vadd.f32 %v198, %v3806
    %v3808 = vpop.f32.mrf.mxu0
    %3809 = vmatprep.mubr.f32.mxu0 0.0
    %3810 = vmatmul.mubr.f32.gmra.mxu0 %v3734
    %v3811 = vpop.f32.mrf.mxu0
    %v3812 = vadd.f32 %v199, %v3811
    %v3813 = vpop.f32.mrf.mxu0
    %3814 = vdwg.mxu0
    %v3815 = vsel %vm473, %v3807, -inf
    %3816 = vmax.xlane.f32.xlu0 %v3815
    %v3817 = vpop.xlane.xlu0 %3816
    %v3818 = vsel %vm473, %v3812, -inf
    %3819 = vmax.xlane.f32.xlu0 %v3818
    %v3820 = vpop.xlane.xlu0 %3819
    %v3821 = vsub.f32 %v3807, %v3817
    %v3822 = vsub.f32 %v3812, %v3820
    %3823 = vrot.lane.b32.xlu0 %v2743, 112
    %v3824 = vpop.permute.xlu0 %3823
    %3825 = vrot.lane.b32.xlu0 %v2744, 112
    %v3826 = vpop.permute.xlu0 %3825
    %3827 = vrot.lane.b32.xlu0 %v2733, 80
    %v3828 = vpop.permute.xlu0 %3827
    %3829 = vrot.lane.b32.xlu0 %v2738, 80
    %v3830 = vpop.permute.xlu0 %3829
    %v3831 = vsel %vm387, %v3824, 0
    %v3833 = vsel %vm387, %v3826, 0
    %v3835 = vsel %vm387, %v3828, 0
    %v3837 = vsel %vm387, %v3830, 0
    %3839 = vmatprep.subr.mxu0 0.0
    %3840 = vmatpush1.xpose.msra.mxu0 0.0
    %3841 = vmatprep.subr.mxu0 0.0
    %3842 = vmatpush1.xpose.msra.mxu0 0.0
    %3843 = vmatprep.subr.mxu0 0.0
    %3844 = vmatpush1.xpose.msra.mxu0 0.0
    %3845 = vmatprep.subr.mxu0 0.0
    %3846 = vmatpush1.xpose.msra.mxu0 0.0
    %3847 = vmatprep.subr.mxu0 0.0
    %3848 = vmatpush1.xpose.msra.mxu0 0.0
    %3849 = vmatprep.subr.mxu0 0.0
    %3850 = vmatpush1.xpose.msra.mxu0 0.0
    %3851 = vmatprep.subr.mxu0 0.0
    %3852 = vmatpush1.xpose.msra.mxu0 0.0
    %3853 = vmatprep.subr.mxu0 0.0
    %3854 = vmatpush1.xpose.msra.mxu0 0.0
    %3855 = vmatprep.subr.mxu0 0.0
    %3856 = vmatpush1.xpose.msra.mxu0 0.0
    %3857 = vmatprep.subr.mxu0 0.0
    %3858 = vmatpush1.xpose.msra.mxu0 0.0
    %3859 = vmatprep.subr.mxu0 0.0
    %3860 = vmatpush1.xpose.msra.mxu0 0.0
    %3861 = vmatprep.subr.mxu0 0.0
    %3862 = vmatpush1.xpose.msra.mxu0 0.0
    %3863 = vmatprep.subr.mxu0 0.0
    %3864 = vmatpush1.xpose.msra.mxu0 0.0
    %3865 = vmatprep.subr.mxu0 0.0
    %3866 = vmatpush1.xpose.msra.mxu0 0.0
    %3867 = vmatprep.subr.mxu0 0.0
    %3868 = vmatpush1.xpose.msra.mxu0 %v3837
    %3869 = vmatprep.subr.mxu0 0.0
    %3870 = vmatpush1.xpose.msra.mxu0 %v3835
    %3871 = vmatprep.subr.mxu0 0.0
    %3872 = vmatpush2.xpose.msra.mxu0 0.0
    %3873 = vmatprep.subr.mxu0 0.0
    %3874 = vmatpush2.xpose.msra.mxu0 0.0
    %3875 = vmatprep.subr.mxu0 0.0
    %3876 = vmatpush2.xpose.msra.mxu0 0.0
    %3877 = vmatprep.subr.mxu0 0.0
    %3878 = vmatpush2.xpose.msra.mxu0 0.0
    %3879 = vmatprep.subr.mxu0 0.0
    %3880 = vmatpush2.xpose.msra.mxu0 0.0
    %3881 = vmatprep.subr.mxu0 0.0
    %3882 = vmatpush2.xpose.msra.mxu0 0.0
    %3883 = vmatprep.subr.mxu0 0.0
    %3884 = vmatpush2.xpose.msra.mxu0 0.0
    %3885 = vmatprep.subr.mxu0 0.0
    %3886 = vmatpush2.xpose.msra.mxu0 0.0
    %3887 = vmatprep.subr.mxu0 0.0
    %3888 = vmatpush2.xpose.msra.mxu0 0.0
    %3889 = vmatprep.subr.mxu0 0.0
    %3890 = vmatpush2.xpose.msra.mxu0 0.0
    %3891 = vmatprep.subr.mxu0 0.0
    %3892 = vmatpush2.xpose.msra.mxu0 0.0
    %3893 = vmatprep.subr.mxu0 0.0
    %3894 = vmatpush2.xpose.msra.mxu0 0.0
    %3895 = vmatprep.subr.mxu0 0.0
    %3896 = vmatpush2.xpose.msra.mxu0 0.0
    %3897 = vmatprep.subr.mxu0 0.0
    %3898 = vmatpush2.xpose.msra.mxu0 0.0
    %3899 = vmatprep.subr.mxu0 0.0
    %3900 = vmatpush2.xpose.msra.mxu0 0.0
    %3901 = vmatprep.subr.mxu0 0.0
    %3902 = vmatpush2.xpose.msra.mxu0 0.0
    %3903 = vmatprep.mubr.f32.mxu0 0.0
    %3904 = vmatmul.mubr.f32.gmra.mxu0 %v3831
    %v3905 = vpop.f32.mrf.mxu0
    %v3906 = vadd.f32 %v198, %v3905
    %v3907 = vpop.f32.mrf.mxu0
    %3908 = vmatprep.mubr.f32.mxu0 0.0
    %3909 = vmatmul.mubr.f32.gmra.mxu0 %v3833
    %v3910 = vpop.f32.mrf.mxu0
    %v3911 = vadd.f32 %v199, %v3910
    %v3912 = vpop.f32.mrf.mxu0
    %3913 = vdwg.mxu0
    %v3914 = vsel %vm473, %v3906, -inf
    %3915 = vmax.xlane.f32.xlu0 %v3914
    %v3916 = vpop.xlane.xlu0 %3915
    %v3917 = vsel %vm473, %v3911, -inf
    %3918 = vmax.xlane.f32.xlu0 %v3917
    %v3919 = vpop.xlane.xlu0 %3918
    %v3920 = vsub.f32 %v3906, %v3916
    %v3921 = vsub.f32 %v3911, %v3919
    %3922 = vrot.lane.b32.xlu0 %v2743, 104
    %v3923 = vpop.permute.xlu0 %3922
    %3924 = vrot.lane.b32.xlu0 %v2744, 104
    %v3925 = vpop.permute.xlu0 %3924
    %3926 = vrot.lane.b32.xlu0 %v2733, 72
    %v3927 = vpop.permute.xlu0 %3926
    %3928 = vrot.lane.b32.xlu0 %v2738, 72
    %v3929 = vpop.permute.xlu0 %3928
    %v3930 = vsel %vm387, %v3923, 0
    %v3932 = vsel %vm387, %v3925, 0
    %v3934 = vsel %vm387, %v3927, 0
    %v3936 = vsel %vm387, %v3929, 0
    %3938 = vmatprep.subr.mxu0 0.0
    %3939 = vmatpush1.xpose.msra.mxu0 0.0
    %3940 = vmatprep.subr.mxu0 0.0
    %3941 = vmatpush1.xpose.msra.mxu0 0.0
    %3942 = vmatprep.subr.mxu0 0.0
    %3943 = vmatpush1.xpose.msra.mxu0 0.0
    %3944 = vmatprep.subr.mxu0 0.0
    %3945 = vmatpush1.xpose.msra.mxu0 0.0
    %3946 = vmatprep.subr.mxu0 0.0
    %3947 = vmatpush1.xpose.msra.mxu0 0.0
    %3948 = vmatprep.subr.mxu0 0.0
    %3949 = vmatpush1.xpose.msra.mxu0 0.0
    %3950 = vmatprep.subr.mxu0 0.0
    %3951 = vmatpush1.xpose.msra.mxu0 0.0
    %3952 = vmatprep.subr.mxu0 0.0
    %3953 = vmatpush1.xpose.msra.mxu0 0.0
    %3954 = vmatprep.subr.mxu0 0.0
    %3955 = vmatpush1.xpose.msra.mxu0 0.0
    %3956 = vmatprep.subr.mxu0 0.0
    %3957 = vmatpush1.xpose.msra.mxu0 0.0
    %3958 = vmatprep.subr.mxu0 0.0
    %3959 = vmatpush1.xpose.msra.mxu0 0.0
    %3960 = vmatprep.subr.mxu0 0.0
    %3961 = vmatpush1.xpose.msra.mxu0 0.0
    %3962 = vmatprep.subr.mxu0 0.0
    %3963 = vmatpush1.xpose.msra.mxu0 0.0
    %3964 = vmatprep.subr.mxu0 0.0
    %3965 = vmatpush1.xpose.msra.mxu0 0.0
    %3966 = vmatprep.subr.mxu0 0.0
    %3967 = vmatpush1.xpose.msra.mxu0 %v3936
    %3968 = vmatprep.subr.mxu0 0.0
    %3969 = vmatpush1.xpose.msra.mxu0 %v3934
    %3970 = vmatprep.subr.mxu0 0.0
    %3971 = vmatpush2.xpose.msra.mxu0 0.0
    %3972 = vmatprep.subr.mxu0 0.0
    %3973 = vmatpush2.xpose.msra.mxu0 0.0
    %3974 = vmatprep.subr.mxu0 0.0
    %3975 = vmatpush2.xpose.msra.mxu0 0.0
    %3976 = vmatprep.subr.mxu0 0.0
    %3977 = vmatpush2.xpose.msra.mxu0 0.0
    %3978 = vmatprep.subr.mxu0 0.0
    %3979 = vmatpush2.xpose.msra.mxu0 0.0
    %3980 = vmatprep.subr.mxu0 0.0
    %3981 = vmatpush2.xpose.msra.mxu0 0.0
    %3982 = vmatprep.subr.mxu0 0.0
    %3983 = vmatpush2.xpose.msra.mxu0 0.0
    %3984 = vmatprep.subr.mxu0 0.0
    %3985 = vmatpush2.xpose.msra.mxu0 0.0
    %3986 = vmatprep.subr.mxu0 0.0
    %3987 = vmatpush2.xpose.msra.mxu0 0.0
    %3988 = vmatprep.subr.mxu0 0.0
    %3989 = vmatpush2.xpose.msra.mxu0 0.0
    %3990 = vmatprep.subr.mxu0 0.0
    %3991 = vmatpush2.xpose.msra.mxu0 0.0
    %3992 = vmatprep.subr.mxu0 0.0
    %3993 = vmatpush2.xpose.msra.mxu0 0.0
    %3994 = vmatprep.subr.mxu0 0.0
    %3995 = vmatpush2.xpose.msra.mxu0 0.0
    %3996 = vmatprep.subr.mxu0 0.0
    %3997 = vmatpush2.xpose.msra.mxu0 0.0
    %3998 = vmatprep.subr.mxu0 0.0
    %3999 = vmatpush2.xpose.msra.mxu0 0.0
    %4000 = vmatprep.subr.mxu0 0.0
    %4001 = vmatpush2.xpose.msra.mxu0 0.0
    %4002 = vmatprep.mubr.f32.mxu0 0.0
    %4003 = vmatmul.mubr.f32.gmra.mxu0 %v3930
    %v4004 = vpop.f32.mrf.mxu0
    %v4005 = vadd.f32 %v198, %v4004
    %v4006 = vpop.f32.mrf.mxu0
    %4007 = vmatprep.mubr.f32.mxu0 0.0
    %4008 = vmatmul.mubr.f32.gmra.mxu0 %v3932
    %v4009 = vpop.f32.mrf.mxu0
    %v4010 = vadd.f32 %v199, %v4009
    %v4011 = vpop.f32.mrf.mxu0
    %4012 = vdwg.mxu0
    %v4013 = vsel %vm473, %v4005, -inf
    %4014 = vmax.xlane.f32.xlu0 %v4013
    %v4015 = vpop.xlane.xlu0 %4014
    %v4016 = vsel %vm473, %v4010, -inf
    %4017 = vmax.xlane.f32.xlu0 %v4016
    %v4018 = vpop.xlane.xlu0 %4017
    %v4019 = vsub.f32 %v4005, %v4015
    %v4020 = vsub.f32 %v4010, %v4018
    %4023 = vrot.lane.b32.xlu0 %v3821, 16
    %v4024 = vpop.permute.xlu0 %4023
    %4025 = vrot.lane.b32.xlu0 %v3822, 16
    %v4026 = vpop.permute.xlu0 %4025
    %4031 = vrot.lane.b32.xlu0 %v3920, 32
    %v4032 = vpop.permute.xlu0 %4031
    %4033 = vrot.lane.b32.xlu0 %v3921, 32
    %v4034 = vpop.permute.xlu0 %4033
    %4039 = vrot.lane.b32.xlu0 %v4019, 48
    %v4040 = vpop.permute.xlu0 %4039
    %4041 = vrot.lane.b32.xlu0 %v4020, 48
    %v4042 = vpop.permute.xlu0 %4041
    %v4045 = vsel %vm473, %v3722, %v4024
    %v4046 = vsel %vm473, %v3723, %v4026
    %v4047 = vsel %vm202, %v4045, %v4032
    %v4048 = vsel %vm202, %v4046, %v4034
    %v4049 = vsel %vm807, %v4047, %v4040
    %v4050 = vsel %vm807, %v4048, %v4042
    %v4051 = vmul.f32 %v4049, 1.442695
    %v4052 = vpow.pop %v4051
    %v4053 = vmul.f32 %v4050, 1.442695
    %v4054 = vpow.pop %v4053
    %v4055 = vsel %vm473, %v4052, 0.0
    %4056 = vadd.xlane.f32.xlu0 %v4055
    %v4057 = vpop.xlane.xlu0 %4056
    %v4058 = vsel %vm473, %v4054, 0.0
    %4059 = vadd.xlane.f32.xlu0 %v4058
    %v4060 = vpop.xlane.xlu0 %4059
    %v4061 = vrcp.pop %v4057
    %v4062 = vrcp.pop %v4060
    %v4063 = vmul.f32 %v4052, %v4061
    %v4064 = vmul.f32 %v4054, %v4062
    %4065 = vrot.lane.b32.xlu0 %v2733, 64
    %v4066 = vpop.permute.xlu0 %4065
    %4067 = vrot.lane.b32.xlu0 %v2738, 64
    %v4068 = vpop.permute.xlu0 %4067
    %v4072 = vsel %vm473, %v4063, 0
    %v4075 = vsel %vm473, %v4064, 0
    %4077 = vmatprep.subr.mxu0 0.0
    %4078 = vmatpush1.msra.mxu0 0.0
    %4079 = vmatprep.subr.mxu0 0.0
    %4080 = vmatpush1.msra.mxu0 0.0
    %4081 = vmatprep.subr.mxu0 0.0
    %4082 = vmatpush1.msra.mxu0 0.0
    %4083 = vmatprep.subr.mxu0 0.0
    %4084 = vmatpush1.msra.mxu0 0.0
    %4085 = vmatprep.subr.mxu0 0.0
    %4086 = vmatpush1.msra.mxu0 0.0
    %4087 = vmatprep.subr.mxu0 0.0
    %4088 = vmatpush1.msra.mxu0 0.0
    %4089 = vmatprep.subr.mxu0 0.0
    %4090 = vmatpush1.msra.mxu0 0.0
    %4091 = vmatprep.subr.mxu0 0.0
    %4092 = vmatpush1.msra.mxu0 0.0
    %4093 = vmatprep.subr.mxu0 0.0
    %4094 = vmatpush1.msra.mxu0 0.0
    %4095 = vmatprep.subr.mxu0 0.0
    %4096 = vmatpush1.msra.mxu0 0.0
    %4097 = vmatprep.subr.mxu0 0.0
    %4098 = vmatpush1.msra.mxu0 0.0
    %4099 = vmatprep.subr.mxu0 0.0
    %4100 = vmatpush1.msra.mxu0 0.0
    %4101 = vmatprep.subr.mxu0 0.0
    %4102 = vmatpush1.msra.mxu0 0.0
    %4103 = vmatprep.subr.mxu0 0.0
    %4104 = vmatpush1.msra.mxu0 0.0
    %4105 = vmatprep.subr.mxu0 0.0
    %4106 = vmatpush1.msra.mxu0 %v4068
    %4107 = vmatprep.subr.mxu0 0.0
    %4108 = vmatpush1.msra.mxu0 %v4066
    %4109 = vmatprep.subr.mxu0 0.0
    %4110 = vmatpush2.msra.mxu0 0.0
    %4111 = vmatprep.subr.mxu0 0.0
    %4112 = vmatpush2.msra.mxu0 0.0
    %4113 = vmatprep.subr.mxu0 0.0
    %4114 = vmatpush2.msra.mxu0 0.0
    %4115 = vmatprep.subr.mxu0 0.0
    %4116 = vmatpush2.msra.mxu0 0.0
    %4117 = vmatprep.subr.mxu0 0.0
    %4118 = vmatpush2.msra.mxu0 0.0
    %4119 = vmatprep.subr.mxu0 0.0
    %4120 = vmatpush2.msra.mxu0 0.0
    %4121 = vmatprep.subr.mxu0 0.0
    %4122 = vmatpush2.msra.mxu0 0.0
    %4123 = vmatprep.subr.mxu0 0.0
    %4124 = vmatpush2.msra.mxu0 0.0
    %4125 = vmatprep.subr.mxu0 0.0
    %4126 = vmatpush2.msra.mxu0 0.0
    %4127 = vmatprep.subr.mxu0 0.0
    %4128 = vmatpush2.msra.mxu0 0.0
    %4129 = vmatprep.subr.mxu0 0.0
    %4130 = vmatpush2.msra.mxu0 0.0
    %4131 = vmatprep.subr.mxu0 0.0
    %4132 = vmatpush2.msra.mxu0 0.0
    %4133 = vmatprep.subr.mxu0 0.0
    %4134 = vmatpush2.msra.mxu0 0.0
    %4135 = vmatprep.subr.mxu0 0.0
    %4136 = vmatpush2.msra.mxu0 0.0
    %4137 = vmatprep.subr.mxu0 0.0
    %4138 = vmatpush2.msra.mxu0 0.0
    %4139 = vmatprep.subr.mxu0 0.0
    %4140 = vmatpush2.msra.mxu0 0.0
    %4141 = vmatprep.mubr.f32.mxu0 0.0
    %4142 = vmatmul.mubr.f32.gmra.mxu0 %v4072
    %v4143 = vpop.f32.mrf.mxu0
    %v4144 = vadd.f32 0.0, %v4143
    %v4145 = vpop.f32.mrf.mxu0
    %4146 = vmatprep.mubr.f32.mxu0 0.0
    %4147 = vmatmul.mubr.f32.gmra.mxu0 %v4075
    %v4148 = vpop.f32.mrf.mxu0
    %v4149 = vadd.f32 0.0, %v4148
    %v4150 = vpop.f32.mrf.mxu0
    %4151 = vdwg.mxu0
    %4154 = vrot.lane.b32.xlu0 %v4052, 112
    %v4155 = vpop.permute.xlu0 %4154
    %4156 = vrot.lane.b32.xlu0 %v4054, 112
    %v4157 = vpop.permute.xlu0 %4156
    %v4160 = vsel %vm473, %v4155, 0.0
    %4161 = vadd.xlane.f32.xlu0 %v4160
    %v4162 = vpop.xlane.xlu0 %4161
    %v4163 = vsel %vm473, %v4157, 0.0
    %4164 = vadd.xlane.f32.xlu0 %v4163
    %v4165 = vpop.xlane.xlu0 %4164
    %v4166 = vrcp.pop %v4162
    %v4167 = vrcp.pop %v4165
    %v4168 = vmul.f32 %v4052, %v4166
    %v4169 = vmul.f32 %v4054, %v4167
    %4172 = vrot.lane.b32.xlu0 %v4168, 112
    %v4173 = vpop.permute.xlu0 %4172
    %4174 = vrot.lane.b32.xlu0 %v4169, 112
    %v4175 = vpop.permute.xlu0 %4174
    %4176 = vrot.lane.b32.xlu0 %v2733, 56
    %v4177 = vpop.permute.xlu0 %4176
    %4178 = vrot.lane.b32.xlu0 %v2738, 56
    %v4179 = vpop.permute.xlu0 %4178
    %v4182 = vsel %vm473, %v4173, 0
    %v4184 = vsel %vm473, %v4175, 0
    %4186 = vmatprep.subr.mxu0 0.0
    %4187 = vmatpush1.msra.mxu0 0.0
    %4188 = vmatprep.subr.mxu0 0.0
    %4189 = vmatpush1.msra.mxu0 0.0
    %4190 = vmatprep.subr.mxu0 0.0
    %4191 = vmatpush1.msra.mxu0 0.0
    %4192 = vmatprep.subr.mxu0 0.0
    %4193 = vmatpush1.msra.mxu0 0.0
    %4194 = vmatprep.subr.mxu0 0.0
    %4195 = vmatpush1.msra.mxu0 0.0
    %4196 = vmatprep.subr.mxu0 0.0
    %4197 = vmatpush1.msra.mxu0 0.0
    %4198 = vmatprep.subr.mxu0 0.0
    %4199 = vmatpush1.msra.mxu0 0.0
    %4200 = vmatprep.subr.mxu0 0.0
    %4201 = vmatpush1.msra.mxu0 0.0
    %4202 = vmatprep.subr.mxu0 0.0
    %4203 = vmatpush1.msra.mxu0 0.0
    %4204 = vmatprep.subr.mxu0 0.0
    %4205 = vmatpush1.msra.mxu0 0.0
    %4206 = vmatprep.subr.mxu0 0.0
    %4207 = vmatpush1.msra.mxu0 0.0
    %4208 = vmatprep.subr.mxu0 0.0
    %4209 = vmatpush1.msra.mxu0 0.0
    %4210 = vmatprep.subr.mxu0 0.0
    %4211 = vmatpush1.msra.mxu0 0.0
    %4212 = vmatprep.subr.mxu0 0.0
    %4213 = vmatpush1.msra.mxu0 0.0
    %4214 = vmatprep.subr.mxu0 0.0
    %4215 = vmatpush1.msra.mxu0 %v4179
    %4216 = vmatprep.subr.mxu0 0.0
    %4217 = vmatpush1.msra.mxu0 %v4177
    %4218 = vmatprep.subr.mxu0 0.0
    %4219 = vmatpush2.msra.mxu0 0.0
    %4220 = vmatprep.subr.mxu0 0.0
    %4221 = vmatpush2.msra.mxu0 0.0
    %4222 = vmatprep.subr.mxu0 0.0
    %4223 = vmatpush2.msra.mxu0 0.0
    %4224 = vmatprep.subr.mxu0 0.0
    %4225 = vmatpush2.msra.mxu0 0.0
    %4226 = vmatprep.subr.mxu0 0.0
    %4227 = vmatpush2.msra.mxu0 0.0
    %4228 = vmatprep.subr.mxu0 0.0
    %4229 = vmatpush2.msra.mxu0 0.0
    %4230 = vmatprep.subr.mxu0 0.0
    %4231 = vmatpush2.msra.mxu0 0.0
    %4232 = vmatprep.subr.mxu0 0.0
    %4233 = vmatpush2.msra.mxu0 0.0
    %4234 = vmatprep.subr.mxu0 0.0
    %4235 = vmatpush2.msra.mxu0 0.0
    %4236 = vmatprep.subr.mxu0 0.0
    %4237 = vmatpush2.msra.mxu0 0.0
    %4238 = vmatprep.subr.mxu0 0.0
    %4239 = vmatpush2.msra.mxu0 0.0
    %4240 = vmatprep.subr.mxu0 0.0
    %4241 = vmatpush2.msra.mxu0 0.0
    %4242 = vmatprep.subr.mxu0 0.0
    %4243 = vmatpush2.msra.mxu0 0.0
    %4244 = vmatprep.subr.mxu0 0.0
    %4245 = vmatpush2.msra.mxu0 0.0
    %4246 = vmatprep.subr.mxu0 0.0
    %4247 = vmatpush2.msra.mxu0 0.0
    %4248 = vmatprep.subr.mxu0 0.0
    %4249 = vmatpush2.msra.mxu0 0.0
    %4250 = vmatprep.mubr.f32.mxu0 0.0
    %4251 = vmatmul.mubr.f32.gmra.mxu0 %v4182
    %v4252 = vpop.f32.mrf.mxu0
    %v4253 = vadd.f32 0.0, %v4252
    %v4254 = vpop.f32.mrf.mxu0
    %4255 = vmatprep.mubr.f32.mxu0 0.0
    %4256 = vmatmul.mubr.f32.gmra.mxu0 %v4184
    %v4257 = vpop.f32.mrf.mxu0
    %v4258 = vadd.f32 0.0, %v4257
    %v4259 = vpop.f32.mrf.mxu0
    %4260 = vdwg.mxu0
    %4261 = vrot.lane.b32.xlu0 %v4052, 96
    %v4262 = vpop.permute.xlu0 %4261
    %4263 = vrot.lane.b32.xlu0 %v4054, 96
    %v4264 = vpop.permute.xlu0 %4263
    %v4267 = vsel %vm473, %v4262, 0.0
    %4268 = vadd.xlane.f32.xlu0 %v4267
    %v4269 = vpop.xlane.xlu0 %4268
    %v4270 = vsel %vm473, %v4264, 0.0
    %4271 = vadd.xlane.f32.xlu0 %v4270
    %v4272 = vpop.xlane.xlu0 %4271
    %v4273 = vrcp.pop %v4269
    %v4274 = vrcp.pop %v4272
    %v4275 = vmul.f32 %v4052, %v4273
    %v4276 = vmul.f32 %v4054, %v4274
    %4279 = vrot.lane.b32.xlu0 %v4275, 96
    %v4280 = vpop.permute.xlu0 %4279
    %4281 = vrot.lane.b32.xlu0 %v4276, 96
    %v4282 = vpop.permute.xlu0 %4281
    %4283 = vrot.lane.b32.xlu0 %v2733, 48
    %v4284 = vpop.permute.xlu0 %4283
    %4285 = vrot.lane.b32.xlu0 %v2738, 48
    %v4286 = vpop.permute.xlu0 %4285
    %v4289 = vsel %vm473, %v4280, 0
    %v4291 = vsel %vm473, %v4282, 0
    %4293 = vmatprep.subr.mxu0 0.0
    %4294 = vmatpush1.msra.mxu0 0.0
    %4295 = vmatprep.subr.mxu0 0.0
    %4296 = vmatpush1.msra.mxu0 0.0
    %4297 = vmatprep.subr.mxu0 0.0
    %4298 = vmatpush1.msra.mxu0 0.0
    %4299 = vmatprep.subr.mxu0 0.0
    %4300 = vmatpush1.msra.mxu0 0.0
    %4301 = vmatprep.subr.mxu0 0.0
    %4302 = vmatpush1.msra.mxu0 0.0
    %4303 = vmatprep.subr.mxu0 0.0
    %4304 = vmatpush1.msra.mxu0 0.0
    %4305 = vmatprep.subr.mxu0 0.0
    %4306 = vmatpush1.msra.mxu0 0.0
    %4307 = vmatprep.subr.mxu0 0.0
    %4308 = vmatpush1.msra.mxu0 0.0
    %4309 = vmatprep.subr.mxu0 0.0
    %4310 = vmatpush1.msra.mxu0 0.0
    %4311 = vmatprep.subr.mxu0 0.0
    %4312 = vmatpush1.msra.mxu0 0.0
    %4313 = vmatprep.subr.mxu0 0.0
    %4314 = vmatpush1.msra.mxu0 0.0
    %4315 = vmatprep.subr.mxu0 0.0
    %4316 = vmatpush1.msra.mxu0 0.0
    %4317 = vmatprep.subr.mxu0 0.0
    %4318 = vmatpush1.msra.mxu0 0.0
    %4319 = vmatprep.subr.mxu0 0.0
    %4320 = vmatpush1.msra.mxu0 0.0
    %4321 = vmatprep.subr.mxu0 0.0
    %4322 = vmatpush1.msra.mxu0 %v4286
    %4323 = vmatprep.subr.mxu0 0.0
    %4324 = vmatpush1.msra.mxu0 %v4284
    %4325 = vmatprep.subr.mxu0 0.0
    %4326 = vmatpush2.msra.mxu0 0.0
    %4327 = vmatprep.subr.mxu0 0.0
    %4328 = vmatpush2.msra.mxu0 0.0
    %4329 = vmatprep.subr.mxu0 0.0
    %4330 = vmatpush2.msra.mxu0 0.0
    %4331 = vmatprep.subr.mxu0 0.0
    %4332 = vmatpush2.msra.mxu0 0.0
    %4333 = vmatprep.subr.mxu0 0.0
    %4334 = vmatpush2.msra.mxu0 0.0
    %4335 = vmatprep.subr.mxu0 0.0
    %4336 = vmatpush2.msra.mxu0 0.0
    %4337 = vmatprep.subr.mxu0 0.0
    %4338 = vmatpush2.msra.mxu0 0.0
    %4339 = vmatprep.subr.mxu0 0.0
    %4340 = vmatpush2.msra.mxu0 0.0
    %4341 = vmatprep.subr.mxu0 0.0
    %4342 = vmatpush2.msra.mxu0 0.0
    %4343 = vmatprep.subr.mxu0 0.0
    %4344 = vmatpush2.msra.mxu0 0.0
    %4345 = vmatprep.subr.mxu0 0.0
    %4346 = vmatpush2.msra.mxu0 0.0
    %4347 = vmatprep.subr.mxu0 0.0
    %4348 = vmatpush2.msra.mxu0 0.0
    %4349 = vmatprep.subr.mxu0 0.0
    %4350 = vmatpush2.msra.mxu0 0.0
    %4351 = vmatprep.subr.mxu0 0.0
    %4352 = vmatpush2.msra.mxu0 0.0
    %4353 = vmatprep.subr.mxu0 0.0
    %4354 = vmatpush2.msra.mxu0 0.0
    %4355 = vmatprep.subr.mxu0 0.0
    %4356 = vmatpush2.msra.mxu0 0.0
    %4357 = vmatprep.mubr.f32.mxu0 0.0
    %4358 = vmatmul.mubr.f32.gmra.mxu0 %v4289
    %v4359 = vpop.f32.mrf.mxu0
    %v4360 = vadd.f32 0.0, %v4359
    %v4361 = vpop.f32.mrf.mxu0
    %4362 = vmatprep.mubr.f32.mxu0 0.0
    %4363 = vmatmul.mubr.f32.gmra.mxu0 %v4291
    %v4364 = vpop.f32.mrf.mxu0
    %v4365 = vadd.f32 0.0, %v4364
    %v4366 = vpop.f32.mrf.mxu0
    %4367 = vdwg.mxu0
    %4368 = vrot.lane.b32.xlu0 %v4052, 80
    %v4369 = vpop.permute.xlu0 %4368
    %4370 = vrot.lane.b32.xlu0 %v4054, 80
    %v4371 = vpop.permute.xlu0 %4370
    %v4374 = vsel %vm473, %v4369, 0.0
    %4375 = vadd.xlane.f32.xlu0 %v4374
    %v4376 = vpop.xlane.xlu0 %4375
    %v4377 = vsel %vm473, %v4371, 0.0
    %4378 = vadd.xlane.f32.xlu0 %v4377
    %v4379 = vpop.xlane.xlu0 %4378
    %v4380 = vrcp.pop %v4376
    %v4381 = vrcp.pop %v4379
    %v4382 = vmul.f32 %v4052, %v4380
    %v4383 = vmul.f32 %v4054, %v4381
    %4386 = vrot.lane.b32.xlu0 %v4382, 80
    %v4387 = vpop.permute.xlu0 %4386
    %4388 = vrot.lane.b32.xlu0 %v4383, 80
    %v4389 = vpop.permute.xlu0 %4388
    %4390 = vrot.lane.b32.xlu0 %v2733, 40
    %v4391 = vpop.permute.xlu0 %4390
    %4392 = vrot.lane.b32.xlu0 %v2738, 40
    %v4393 = vpop.permute.xlu0 %4392
    %v4396 = vsel %vm473, %v4387, 0
    %v4398 = vsel %vm473, %v4389, 0
    %4400 = vmatprep.subr.mxu0 0.0
    %4401 = vmatpush1.msra.mxu0 0.0
    %4402 = vmatprep.subr.mxu0 0.0
    %4403 = vmatpush1.msra.mxu0 0.0
    %4404 = vmatprep.subr.mxu0 0.0
    %4405 = vmatpush1.msra.mxu0 0.0
    %4406 = vmatprep.subr.mxu0 0.0
    %4407 = vmatpush1.msra.mxu0 0.0
    %4408 = vmatprep.subr.mxu0 0.0
    %4409 = vmatpush1.msra.mxu0 0.0
    %4410 = vmatprep.subr.mxu0 0.0
    %4411 = vmatpush1.msra.mxu0 0.0
    %4412 = vmatprep.subr.mxu0 0.0
    %4413 = vmatpush1.msra.mxu0 0.0
    %4414 = vmatprep.subr.mxu0 0.0
    %4415 = vmatpush1.msra.mxu0 0.0
    %4416 = vmatprep.subr.mxu0 0.0
    %4417 = vmatpush1.msra.mxu0 0.0
    %4418 = vmatprep.subr.mxu0 0.0
    %4419 = vmatpush1.msra.mxu0 0.0
    %4420 = vmatprep.subr.mxu0 0.0
    %4421 = vmatpush1.msra.mxu0 0.0
    %4422 = vmatprep.subr.mxu0 0.0
    %4423 = vmatpush1.msra.mxu0 0.0
    %4424 = vmatprep.subr.mxu0 0.0
    %4425 = vmatpush1.msra.mxu0 0.0
    %4426 = vmatprep.subr.mxu0 0.0
    %4427 = vmatpush1.msra.mxu0 0.0
    %4428 = vmatprep.subr.mxu0 0.0
    %4429 = vmatpush1.msra.mxu0 %v4393
    %4430 = vmatprep.subr.mxu0 0.0
    %4431 = vmatpush1.msra.mxu0 %v4391
    %4432 = vmatprep.subr.mxu0 0.0
    %4433 = vmatpush2.msra.mxu0 0.0
    %4434 = vmatprep.subr.mxu0 0.0
    %4435 = vmatpush2.msra.mxu0 0.0
    %4436 = vmatprep.subr.mxu0 0.0
    %4437 = vmatpush2.msra.mxu0 0.0
    %4438 = vmatprep.subr.mxu0 0.0
    %4439 = vmatpush2.msra.mxu0 0.0
    %4440 = vmatprep.subr.mxu0 0.0
    %4441 = vmatpush2.msra.mxu0 0.0
    %4442 = vmatprep.subr.mxu0 0.0
    %4443 = vmatpush2.msra.mxu0 0.0
    %4444 = vmatprep.subr.mxu0 0.0
    %4445 = vmatpush2.msra.mxu0 0.0
    %4446 = vmatprep.subr.mxu0 0.0
    %4447 = vmatpush2.msra.mxu0 0.0
    %4448 = vmatprep.subr.mxu0 0.0
    %4449 = vmatpush2.msra.mxu0 0.0
    %4450 = vmatprep.subr.mxu0 0.0
    %4451 = vmatpush2.msra.mxu0 0.0
    %4452 = vmatprep.subr.mxu0 0.0
    %4453 = vmatpush2.msra.mxu0 0.0
    %4454 = vmatprep.subr.mxu0 0.0
    %4455 = vmatpush2.msra.mxu0 0.0
    %4456 = vmatprep.subr.mxu0 0.0
    %4457 = vmatpush2.msra.mxu0 0.0
    %4458 = vmatprep.subr.mxu0 0.0
    %4459 = vmatpush2.msra.mxu0 0.0
    %4460 = vmatprep.subr.mxu0 0.0
    %4461 = vmatpush2.msra.mxu0 0.0
    %4462 = vmatprep.subr.mxu0 0.0
    %4463 = vmatpush2.msra.mxu0 0.0
    %4464 = vmatprep.mubr.f32.mxu0 0.0
    %4465 = vmatmul.mubr.f32.gmra.mxu0 %v4396
    %v4466 = vpop.f32.mrf.mxu0
    %v4467 = vadd.f32 0.0, %v4466
    %v4468 = vpop.f32.mrf.mxu0
    %4469 = vmatprep.mubr.f32.mxu0 0.0
    %4470 = vmatmul.mubr.f32.gmra.mxu0 %v4398
    %v4471 = vpop.f32.mrf.mxu0
    %v4472 = vadd.f32 0.0, %v4471
    %v4473 = vpop.f32.mrf.mxu0
    %4474 = vdwg.mxu0
    %4477 = vrot.lane.b32.xlu0 %v4253, 8
    %v4478 = vpop.permute.xlu0 %4477
    %4479 = vrot.lane.b32.xlu0 %v4258, 8
    %v4480 = vpop.permute.xlu0 %4479
    %4485 = vrot.lane.b32.xlu0 %v4360, 16
    %v4486 = vpop.permute.xlu0 %4485
    %4487 = vrot.lane.b32.xlu0 %v4365, 16
    %v4488 = vpop.permute.xlu0 %4487
    %4493 = vrot.lane.b32.xlu0 %v4467, 24
    %v4494 = vpop.permute.xlu0 %4493
    %4495 = vrot.lane.b32.xlu0 %v4472, 24
    %v4496 = vpop.permute.xlu0 %4495
    %v4499 = vsel %vm387, %v4144, %v4478
    %v4500 = vsel %vm387, %v4149, %v4480
    %v4501 = vsel %vm473, %v4499, %v4486
    %v4502 = vsel %vm473, %v4500, %v4488
    %v4503 = vsel %vm1262, %v4501, %v4494
    %v4504 = vsel %vm1262, %v4502, %v4496
    %s4505 = scalar_lea.vmem %s6, 32
    %v4506 = vld [vmem:[%s4505] sm:$0xff]
    %v4507 = vld [vmem:[%s4505 + $0x8] sm:$0xff]
    %v4508 = vld [vmem:[%s4505 + $0x10] sm:$0xff]
    %v4509 = vld [vmem:[%s4505 + $0x18] sm:$0xff]
    %v4511 = vsel %vm202, %v3623, 0
    %v4514 = vsel %vm202, %v3624, 0
    %v4517 = vsel %vm202, %v4503, 0
    %v4520 = vsel %vm202, %v4504, 0
    %4522 = vmatprep.subr.mxu0 0.0
    %4523 = vmatpush1.msra.mxu0 0.0
    %4524 = vmatprep.subr.mxu0 0.0
    %4525 = vmatpush1.msra.mxu0 0.0
    %4526 = vmatprep.subr.mxu0 0.0
    %4527 = vmatpush1.msra.mxu0 0.0
    %4528 = vmatprep.subr.mxu0 0.0
    %4529 = vmatpush1.msra.mxu0 0.0
    %4530 = vmatprep.subr.mxu0 0.0
    %4531 = vmatpush1.msra.mxu0 0.0
    %4532 = vmatprep.subr.mxu0 0.0
    %4533 = vmatpush1.msra.mxu0 0.0
    %4534 = vmatprep.subr.mxu0 0.0
    %4535 = vmatpush1.msra.mxu0 0.0
    %4536 = vmatprep.subr.mxu0 0.0
    %4537 = vmatpush1.msra.mxu0 0.0
    %4538 = vmatprep.subr.mxu0 0.0
    %4539 = vmatpush1.msra.mxu0 0.0
    %4540 = vmatprep.subr.mxu0 0.0
    %4541 = vmatpush1.msra.mxu0 0.0
    %4542 = vmatprep.subr.mxu0 0.0
    %4543 = vmatpush1.msra.mxu0 0.0
    %4544 = vmatprep.subr.mxu0 0.0
    %4545 = vmatpush1.msra.mxu0 0.0
    %4546 = vmatprep.subr.mxu0 0.0
    %4547 = vmatpush1.msra.mxu0 %v4509
    %4548 = vmatprep.subr.mxu0 0.0
    %4549 = vmatpush1.msra.mxu0 %v4508
    %4550 = vmatprep.subr.mxu0 0.0
    %4551 = vmatpush1.msra.mxu0 %v4507
    %4552 = vmatprep.subr.mxu0 0.0
    %4553 = vmatpush1.msra.mxu0 %v4506
    %4554 = vmatprep.subr.mxu0 0.0
    %4555 = vmatpush2.msra.mxu0 0.0
    %4556 = vmatprep.subr.mxu0 0.0
    %4557 = vmatpush2.msra.mxu0 0.0
    %4558 = vmatprep.subr.mxu0 0.0
    %4559 = vmatpush2.msra.mxu0 0.0
    %4560 = vmatprep.subr.mxu0 0.0
    %4561 = vmatpush2.msra.mxu0 0.0
    %4562 = vmatprep.subr.mxu0 0.0
    %4563 = vmatpush2.msra.mxu0 0.0
    %4564 = vmatprep.subr.mxu0 0.0
    %4565 = vmatpush2.msra.mxu0 0.0
    %4566 = vmatprep.subr.mxu0 0.0
    %4567 = vmatpush2.msra.mxu0 0.0
    %4568 = vmatprep.subr.mxu0 0.0
    %4569 = vmatpush2.msra.mxu0 0.0
    %4570 = vmatprep.subr.mxu0 0.0
    %4571 = vmatpush2.msra.mxu0 0.0
    %4572 = vmatprep.subr.mxu0 0.0
    %4573 = vmatpush2.msra.mxu0 0.0
    %4574 = vmatprep.subr.mxu0 0.0
    %4575 = vmatpush2.msra.mxu0 0.0
    %4576 = vmatprep.subr.mxu0 0.0
    %4577 = vmatpush2.msra.mxu0 0.0
    %4578 = vmatprep.subr.mxu0 0.0
    %4579 = vmatpush2.msra.mxu0 0.0
    %4580 = vmatprep.subr.mxu0 0.0
    %4581 = vmatpush2.msra.mxu0 0.0
    %4582 = vmatprep.subr.mxu0 0.0
    %4583 = vmatpush2.msra.mxu0 0.0
    %4584 = vmatprep.subr.mxu0 0.0
    %4585 = vmatpush2.msra.mxu0 0.0
    %4586 = vmatprep.mubr.f32.mxu0 0.0
    %4587 = vmatmul.mubr.f32.gmra.mxu0 %v4511
    %v4588 = vpop.f32.mrf.mxu0
    %v4589 = vadd.f32 0.0, %v4588
    %v4590 = vpop.f32.mrf.mxu0
    %4591 = vmatprep.mubr.f32.mxu0 0.0
    %4592 = vmatmul.mubr.f32.gmra.mxu0 %v4514
    %v4593 = vpop.f32.mrf.mxu0
    %v4594 = vadd.f32 0.0, %v4593
    %v4595 = vpop.f32.mrf.mxu0
    %4596 = vmatprep.mubr.f32.mxu0 0.0
    %4597 = vmatmul.mubr.f32.gmra.mxu0 %v4517
    %v4598 = vpop.f32.mrf.mxu0
    %v4599 = vadd.f32 0.0, %v4598
    %v4600 = vpop.f32.mrf.mxu0
    %4601 = vmatprep.mubr.f32.mxu0 0.0
    %4602 = vmatmul.mubr.f32.gmra.mxu0 %v4520
    %v4603 = vpop.f32.mrf.mxu0
    %v4604 = vadd.f32 0.0, %v4603
    %v4605 = vpop.f32.mrf.mxu0
    %4606 = vdwg.mxu0
    %v4607 = vadd.f32 %v2559, %v4589
    %v4608 = vadd.f32 %v2560, %v4594
    %v4609 = vadd.f32 %v2561, %v4599
    %v4610 = vadd.f32 %v2562, %v4604
    %s4611 = scalar_lea.vmem %s7, 1
    %v4612 = vld [vmem:[%s4611] sm:$0x1]
    %v4614 = vlaneseq
    %v4615 = vshrl.u32 %v4614, 7
    %v4616 = vsub.s32 0, %v4615
    %v4617 = vrot.slane %v4612, %v4616
    %v4619 = vadd.f32 %v4607, %v4617
    %v4620 = vadd.f32 %v4608, %v4617
    %v4621 = vadd.f32 %v4609, %v4617
    %v4622 = vadd.f32 %v4610, %v4617
    %s4623 = scalar_lea.vmem %s8, 1
    %v4624 = vld [vmem:[%s4623] sm:$0x1]
    %s4625 = scalar_lea.vmem %s9, 1
    %v4626 = vld [vmem:[%s4625] sm:$0x1]
    %v4627 = vsel %vm202, %v4619, 0.0
    %4628 = vadd.xlane.f32.xlu0 %v4627
    %v4629 = vpop.xlane.xlu0 %4628
    %v4630 = vsel %vm202, %v4620, 0.0
    %4631 = vadd.xlane.f32.xlu0 %v4630
    %v4632 = vpop.xlane.xlu0 %4631
    %v4633 = vsel %vm202, %v4621, 0.0
    %4634 = vadd.xlane.f32.xlu0 %v4633
    %v4635 = vpop.xlane.xlu0 %4634
    %v4636 = vsel %vm202, %v4622, 0.0
    %4637 = vadd.xlane.f32.xlu0 %v4636
    %v4638 = vpop.xlane.xlu0 %4637
    %v4639 = vmul.f32 %v4629, %v215
    %v4640 = vmul.f32 %v4632, %v215
    %v4641 = vmul.f32 %v4635, %v215
    %v4642 = vmul.f32 %v4638, %v215
    %v4643 = vsub.f32 %v4619, %v4639
    %v4644 = vsub.f32 %v4620, %v4640
    %v4645 = vsub.f32 %v4621, %v4641
    %v4646 = vsub.f32 %v4622, %v4642
    %v4647 = vmul.f32 %v4643, %v4643
    %v4648 = vmul.f32 %v4644, %v4644
    %v4649 = vmul.f32 %v4645, %v4645
    %v4650 = vmul.f32 %v4646, %v4646
    %v4651 = vsel %vm202, %v4647, 0.0
    %4652 = vadd.xlane.f32.xlu0 %v4651
    %v4653 = vpop.xlane.xlu0 %4652
    %v4654 = vsel %vm202, %v4648, 0.0
    %4655 = vadd.xlane.f32.xlu0 %v4654
    %v4656 = vpop.xlane.xlu0 %4655
    %v4657 = vsel %vm202, %v4649, 0.0
    %4658 = vadd.xlane.f32.xlu0 %v4657
    %v4659 = vpop.xlane.xlu0 %4658
    %v4660 = vsel %vm202, %v4650, 0.0
    %4661 = vadd.xlane.f32.xlu0 %v4660
    %v4662 = vpop.xlane.xlu0 %4661
    %v4663 = vmul.f32 %v4653, %v215
    %v4664 = vmul.f32 %v4656, %v215
    %v4665 = vmul.f32 %v4659, %v215
    %v4666 = vmul.f32 %v4662, %v215
    %v4667 = vadd.f32 %v4663, 1e-05
    %v4668 = vadd.f32 %v4664, 1e-05
    %v4669 = vadd.f32 %v4665, 1e-05
    %v4670 = vadd.f32 %v4666, 1e-05
    %v4671 = vrsqrt.pop %v4667
    %v4672 = vrsqrt.pop %v4668
    %v4673 = vrsqrt.pop %v4669
    %v4674 = vrsqrt.pop %v4670
    %v4675 = vmul.f32 %v4643, %v4671
    %v4676 = vmul.f32 %v4644, %v4672
    %v4677 = vmul.f32 %v4645, %v4673
    %v4678 = vmul.f32 %v4646, %v4674
    %v4680 = vlaneseq
    %v4681 = vshrl.u32 %v4680, 7
    %v4682 = vsub.s32 0, %v4681
    %v4683 = vrot.slane %v4624, %v4682
    %v4685 = vmul.f32 %v4675, %v4683
    %v4686 = vmul.f32 %v4676, %v4683
    %v4687 = vmul.f32 %v4677, %v4683
    %v4688 = vmul.f32 %v4678, %v4683
    %v4690 = vlaneseq
    %v4691 = vshrl.u32 %v4690, 7
    %v4692 = vsub.s32 0, %v4691
    %v4693 = vrot.slane %v4626, %v4692
    %v4695 = vadd.f32 %v4685, %v4693
    %v4696 = vadd.f32 %v4686, %v4693
    %v4697 = vadd.f32 %v4687, %v4693
    %v4698 = vadd.f32 %v4688, %v4693
    %s4699 = scalar_lea.vmem %s10, 32
    %v4700 = vld [vmem:[%s4699] sm:$0xff]
    %v4701 = vld [vmem:[%s4699 + $0x8] sm:$0xff]
    %v4702 = vld [vmem:[%s4699 + $0x10] sm:$0xff]
    %v4703 = vld [vmem:[%s4699 + $0x18] sm:$0xff]
    %s4704 = scalar_lea.vmem %s11, 1
    %v4705 = vld [vmem:[%s4704] sm:$0x1]
    %v4707 = vlaneseq
    %v4708 = vshrl.u32 %v4707, 7
    %v4709 = vsub.s32 0, %v4708
    %v4710 = vrot.slane %v4705, %v4709
    %v4713 = vsel %vm202, %v4695, 0
    %v4716 = vsel %vm202, %v4696, 0
    %v4719 = vsel %vm202, %v4697, 0
    %v4722 = vsel %vm202, %v4698, 0
    %4724 = vmatprep.subr.mxu0 0.0
    %4725 = vmatpush1.msra.mxu0 0.0
    %4726 = vmatprep.subr.mxu0 0.0
    %4727 = vmatpush1.msra.mxu0 0.0
    %4728 = vmatprep.subr.mxu0 0.0
    %4729 = vmatpush1.msra.mxu0 0.0
    %4730 = vmatprep.subr.mxu0 0.0
    %4731 = vmatpush1.msra.mxu0 0.0
    %4732 = vmatprep.subr.mxu0 0.0
    %4733 = vmatpush1.msra.mxu0 0.0
    %4734 = vmatprep.subr.mxu0 0.0
    %4735 = vmatpush1.msra.mxu0 0.0
    %4736 = vmatprep.subr.mxu0 0.0
    %4737 = vmatpush1.msra.mxu0 0.0
    %4738 = vmatprep.subr.mxu0 0.0
    %4739 = vmatpush1.msra.mxu0 0.0
    %4740 = vmatprep.subr.mxu0 0.0
    %4741 = vmatpush1.msra.mxu0 0.0
    %4742 = vmatprep.subr.mxu0 0.0
    %4743 = vmatpush1.msra.mxu0 0.0
    %4744 = vmatprep.subr.mxu0 0.0
    %4745 = vmatpush1.msra.mxu0 0.0
    %4746 = vmatprep.subr.mxu0 0.0
    %4747 = vmatpush1.msra.mxu0 0.0
    %4748 = vmatprep.subr.mxu0 0.0
    %4749 = vmatpush1.msra.mxu0 %v4703
    %4750 = vmatprep.subr.mxu0 0.0
    %4751 = vmatpush1.msra.mxu0 %v4702
    %4752 = vmatprep.subr.mxu0 0.0
    %4753 = vmatpush1.msra.mxu0 %v4701
    %4754 = vmatprep.subr.mxu0 0.0
    %4755 = vmatpush1.msra.mxu0 %v4700
    %4756 = vmatprep.subr.mxu0 0.0
    %4757 = vmatpush2.msra.mxu0 0.0
    %4758 = vmatprep.subr.mxu0 0.0
    %4759 = vmatpush2.msra.mxu0 0.0
    %4760 = vmatprep.subr.mxu0 0.0
    %4761 = vmatpush2.msra.mxu0 0.0
    %4762 = vmatprep.subr.mxu0 0.0
    %4763 = vmatpush2.msra.mxu0 0.0
    %4764 = vmatprep.subr.mxu0 0.0
    %4765 = vmatpush2.msra.mxu0 0.0
    %4766 = vmatprep.subr.mxu0 0.0
    %4767 = vmatpush2.msra.mxu0 0.0
    %4768 = vmatprep.subr.mxu0 0.0
    %4769 = vmatpush2.msra.mxu0 0.0
    %4770 = vmatprep.subr.mxu0 0.0
    %4771 = vmatpush2.msra.mxu0 0.0
    %4772 = vmatprep.subr.mxu0 0.0
    %4773 = vmatpush2.msra.mxu0 0.0
    %4774 = vmatprep.subr.mxu0 0.0
    %4775 = vmatpush2.msra.mxu0 0.0
    %4776 = vmatprep.subr.mxu0 0.0
    %4777 = vmatpush2.msra.mxu0 0.0
    %4778 = vmatprep.subr.mxu0 0.0
    %4779 = vmatpush2.msra.mxu0 0.0
    %4780 = vmatprep.subr.mxu0 0.0
    %4781 = vmatpush2.msra.mxu0 0.0
    %4782 = vmatprep.subr.mxu0 0.0
    %4783 = vmatpush2.msra.mxu0 0.0
    %4784 = vmatprep.subr.mxu0 0.0
    %4785 = vmatpush2.msra.mxu0 0.0
    %4786 = vmatprep.subr.mxu0 0.0
    %4787 = vmatpush2.msra.mxu0 0.0
    %4788 = vmatprep.mubr.f32.mxu0 0.0
    %4789 = vmatmul.mubr.f32.gmra.mxu0 %v4713
    %v4790 = vpop.f32.mrf.mxu0
    %v4791 = vadd.f32 %v4710, %v4790
    %v4792 = vpop.f32.mrf.mxu0
    %4793 = vmatprep.mubr.f32.mxu0 0.0
    %4794 = vmatmul.mubr.f32.gmra.mxu0 %v4716
    %v4795 = vpop.f32.mrf.mxu0
    %v4796 = vadd.f32 %v4710, %v4795
    %v4797 = vpop.f32.mrf.mxu0
    %4798 = vmatprep.mubr.f32.mxu0 0.0
    %4799 = vmatmul.mubr.f32.gmra.mxu0 %v4719
    %v4800 = vpop.f32.mrf.mxu0
    %v4801 = vadd.f32 %v4710, %v4800
    %v4802 = vpop.f32.mrf.mxu0
    %4803 = vmatprep.mubr.f32.mxu0 0.0
    %4804 = vmatmul.mubr.f32.gmra.mxu0 %v4722
    %v4805 = vpop.f32.mrf.mxu0
    %v4806 = vadd.f32 %v4710, %v4805
    %v4807 = vpop.f32.mrf.mxu0
    %4808 = vdwg.mxu0
    %v4809 = vmax.f32 %v4791, 0.0
    %v4810 = vmax.f32 %v4796, 0.0
    %v4811 = vmax.f32 %v4801, 0.0
    %v4812 = vmax.f32 %v4806, 0.0
    %s4813 = scalar_lea.vmem %s12, 128
    %v4814 = vld [vmem:[%s4813] sm:$0xff]
    %v4815 = vld [vmem:[%s4813 + $0x8] sm:$0xff]
    %v4816 = vld [vmem:[%s4813 + $0x10] sm:$0xff]
    %v4817 = vld [vmem:[%s4813 + $0x18] sm:$0xff]
    %v4818 = vld [vmem:[%s4813 + $0x20] sm:$0xff]
    %v4819 = vld [vmem:[%s4813 + $0x28] sm:$0xff]
    %v4820 = vld [vmem:[%s4813 + $0x30] sm:$0xff]
    %v4821 = vld [vmem:[%s4813 + $0x38] sm:$0xff]
    %v4822 = vld [vmem:[%s4813 + $0x40] sm:$0xff]
    %v4823 = vld [vmem:[%s4813 + $0x48] sm:$0xff]
    %v4824 = vld [vmem:[%s4813 + $0x50] sm:$0xff]
    %v4825 = vld [vmem:[%s4813 + $0x58] sm:$0xff]
    %v4826 = vld [vmem:[%s4813 + $0x60] sm:$0xff]
    %v4827 = vld [vmem:[%s4813 + $0x68] sm:$0xff]
    %v4828 = vld [vmem:[%s4813 + $0x70] sm:$0xff]
    %v4829 = vld [vmem:[%s4813 + $0x78] sm:$0xff]
    %4830 = vmatprep.subr.mxu0 0.0
    %4831 = vmatpush1.msra.mxu0 %v4829
    %4832 = vmatprep.subr.mxu0 0.0
    %4833 = vmatpush1.msra.mxu0 %v4828
    %4834 = vmatprep.subr.mxu0 0.0
    %4835 = vmatpush1.msra.mxu0 %v4827
    %4836 = vmatprep.subr.mxu0 0.0
    %4837 = vmatpush1.msra.mxu0 %v4826
    %4838 = vmatprep.subr.mxu0 0.0
    %4839 = vmatpush1.msra.mxu0 %v4825
    %4840 = vmatprep.subr.mxu0 0.0
    %4841 = vmatpush1.msra.mxu0 %v4824
    %4842 = vmatprep.subr.mxu0 0.0
    %4843 = vmatpush1.msra.mxu0 %v4823
    %4844 = vmatprep.subr.mxu0 0.0
    %4845 = vmatpush1.msra.mxu0 %v4822
    %4846 = vmatprep.subr.mxu0 0.0
    %4847 = vmatpush1.msra.mxu0 %v4821
    %4848 = vmatprep.subr.mxu0 0.0
    %4849 = vmatpush1.msra.mxu0 %v4820
    %4850 = vmatprep.subr.mxu0 0.0
    %4851 = vmatpush1.msra.mxu0 %v4819
    %4852 = vmatprep.subr.mxu0 0.0
    %4853 = vmatpush1.msra.mxu0 %v4818
    %4854 = vmatprep.subr.mxu0 0.0
    %4855 = vmatpush1.msra.mxu0 %v4817
    %4856 = vmatprep.subr.mxu0 0.0
    %4857 = vmatpush1.msra.mxu0 %v4816
    %4858 = vmatprep.subr.mxu0 0.0
    %4859 = vmatpush1.msra.mxu0 %v4815
    %4860 = vmatprep.subr.mxu0 0.0
    %4861 = vmatpush1.msra.mxu0 %v4814
    %4862 = vmatprep.subr.mxu0 0.0
    %4863 = vmatpush2.msra.mxu0 0.0
    %4864 = vmatprep.subr.mxu0 0.0
    %4865 = vmatpush2.msra.mxu0 0.0
    %4866 = vmatprep.subr.mxu0 0.0
    %4867 = vmatpush2.msra.mxu0 0.0
    %4868 = vmatprep.subr.mxu0 0.0
    %4869 = vmatpush2.msra.mxu0 0.0
    %4870 = vmatprep.subr.mxu0 0.0
    %4871 = vmatpush2.msra.mxu0 0.0
    %4872 = vmatprep.subr.mxu0 0.0
    %4873 = vmatpush2.msra.mxu0 0.0
    %4874 = vmatprep.subr.mxu0 0.0
    %4875 = vmatpush2.msra.mxu0 0.0
    %4876 = vmatprep.subr.mxu0 0.0
    %4877 = vmatpush2.msra.mxu0 0.0
    %4878 = vmatprep.subr.mxu0 0.0
    %4879 = vmatpush2.msra.mxu0 0.0
    %4880 = vmatprep.subr.mxu0 0.0
    %4881 = vmatpush2.msra.mxu0 0.0
    %4882 = vmatprep.subr.mxu0 0.0
    %4883 = vmatpush2.msra.mxu0 0.0
    %4884 = vmatprep.subr.mxu0 0.0
    %4885 = vmatpush2.msra.mxu0 0.0
    %4886 = vmatprep.subr.mxu0 0.0
    %4887 = vmatpush2.msra.mxu0 0.0
    %4888 = vmatprep.subr.mxu0 0.0
    %4889 = vmatpush2.msra.mxu0 0.0
    %4890 = vmatprep.subr.mxu0 0.0
    %4891 = vmatpush2.msra.mxu0 0.0
    %4892 = vmatprep.subr.mxu0 0.0
    %4893 = vmatpush2.msra.mxu0 0.0
    %4894 = vmatprep.mubr.f32.mxu0 0.0
    %4895 = vmatmul.mubr.f32.gmra.mxu0 %v4809
    %v4896 = vpop.f32.mrf.mxu0
    %v4897 = vadd.f32 0.0, %v4896
    %v4898 = vpop.f32.mrf.mxu0
    %4899 = vmatprep.mubr.f32.mxu0 0.0
    %4900 = vmatmul.mubr.f32.gmra.mxu0 %v4810
    %v4901 = vpop.f32.mrf.mxu0
    %v4902 = vadd.f32 0.0, %v4901
    %v4903 = vpop.f32.mrf.mxu0
    %4904 = vmatprep.mubr.f32.mxu0 0.0
    %4905 = vmatmul.mubr.f32.gmra.mxu0 %v4811
    %v4906 = vpop.f32.mrf.mxu0
    %v4907 = vadd.f32 0.0, %v4906
    %v4908 = vpop.f32.mrf.mxu0
    %4909 = vmatprep.mubr.f32.mxu0 0.0
    %4910 = vmatmul.mubr.f32.gmra.mxu0 %v4812
    %v4911 = vpop.f32.mrf.mxu0
    %v4912 = vadd.f32 0.0, %v4911
    %v4913 = vpop.f32.mrf.mxu0
    %4914 = vdwg.mxu0
    %v4915 = vadd.f32 %v4619, %v4897
    %v4916 = vadd.f32 %v4620, %v4902
    %v4917 = vadd.f32 %v4621, %v4907
    %v4918 = vadd.f32 %v4622, %v4912
    %s4919 = scalar_lea.vmem %s13, 1
    %v4920 = vld [vmem:[%s4919] sm:$0x1]
    %v4922 = vlaneseq
    %v4923 = vshrl.u32 %v4922, 7
    %v4924 = vsub.s32 0, %v4923
    %v4925 = vrot.slane %v4920, %v4924
    %v4927 = vadd.f32 %v4915, %v4925
    %v4928 = vadd.f32 %v4916, %v4925
    %v4929 = vadd.f32 %v4917, %v4925
    %v4930 = vadd.f32 %v4918, %v4925
    %v4931 = vld [vmem:[%s14] sm:$0x1]
    %v4932 = vld [vmem:[%s15] sm:$0x1]
    %v4933 = vsel %vm202, %v4927, 0.0
    %4934 = vadd.xlane.f32.xlu0 %v4933
    %v4935 = vpop.xlane.xlu0 %4934
    %v4936 = vsel %vm202, %v4928, 0.0
    %4937 = vadd.xlane.f32.xlu0 %v4936
    %v4938 = vpop.xlane.xlu0 %4937
    %v4939 = vsel %vm202, %v4929, 0.0
    %4940 = vadd.xlane.f32.xlu0 %v4939
    %v4941 = vpop.xlane.xlu0 %4940
    %v4942 = vsel %vm202, %v4930, 0.0
    %4943 = vadd.xlane.f32.xlu0 %v4942
    %v4944 = vpop.xlane.xlu0 %4943
    %v4945 = vmul.f32 %v4935, %v215
    %v4946 = vmul.f32 %v4938, %v215
    %v4947 = vmul.f32 %v4941, %v215
    %v4948 = vmul.f32 %v4944, %v215
    %v4949 = vsub.f32 %v4927, %v4945
    %v4950 = vsub.f32 %v4928, %v4946
    %v4951 = vsub.f32 %v4929, %v4947
    %v4952 = vsub.f32 %v4930, %v4948
    %v4953 = vmul.f32 %v4949, %v4949
    %v4954 = vmul.f32 %v4950, %v4950
    %v4955 = vmul.f32 %v4951, %v4951
    %v4956 = vmul.f32 %v4952, %v4952
    %v4957 = vsel %vm202, %v4953, 0.0
    %4958 = vadd.xlane.f32.xlu0 %v4957
    %v4959 = vpop.xlane.xlu0 %4958
    %v4960 = vsel %vm202, %v4954, 0.0
    %4961 = vadd.xlane.f32.xlu0 %v4960
    %v4962 = vpop.xlane.xlu0 %4961
    %v4963 = vsel %vm202, %v4955, 0.0
    %4964 = vadd.xlane.f32.xlu0 %v4963
    %v4965 = vpop.xlane.xlu0 %4964
    %v4966 = vsel %vm202, %v4956, 0.0
    %4967 = vadd.xlane.f32.xlu0 %v4966
    %v4968 = vpop.xlane.xlu0 %4967
    %v4969 = vmul.f32 %v4959, %v215
    %v4970 = vmul.f32 %v4962, %v215
    %v4971 = vmul.f32 %v4965, %v215
    %v4972 = vmul.f32 %v4968, %v215
    %v4973 = vadd.f32 %v4969, 1e-05
    %v4974 = vadd.f32 %v4970, 1e-05
    %v4975 = vadd.f32 %v4971, 1e-05
    %v4976 = vadd.f32 %v4972, 1e-05
    %v4977 = vrsqrt.pop %v4973
    %v4978 = vrsqrt.pop %v4974
    %v4979 = vrsqrt.pop %v4975
    %v4980 = vrsqrt.pop %v4976
    %v4981 = vmul.f32 %v4949, %v4977
    %v4982 = vmul.f32 %v4950, %v4978
    %v4983 = vmul.f32 %v4951, %v4979
    %v4984 = vmul.f32 %v4952, %v4980
    %v4986 = vlaneseq
    %v4987 = vshrl.u32 %v4986, 7
    %v4988 = vsub.s32 0, %v4987
    %v4989 = vrot.slane %v4931, %v4988
    %v4991 = vmul.f32 %v4981, %v4989
    %v4992 = vmul.f32 %v4982, %v4989
    %v4993 = vmul.f32 %v4983, %v4989
    %v4994 = vmul.f32 %v4984, %v4989
    %v4996 = vlaneseq
    %v4997 = vshrl.u32 %v4996, 7
    %v4998 = vsub.s32 0, %v4997
    %v4999 = vrot.slane %v4932, %v4998
    %v5001 = vadd.f32 %v4991, %v4999
    %v5002 = vadd.f32 %v4992, %v4999
    %v5003 = vadd.f32 %v4993, %v4999
    %v5004 = vadd.f32 %v4994, %v4999
    %v5005 = vld [vmem:[%s16] sm:$0xff]
    %v5006 = vld [vmem:[%s16 + $0x8] sm:$0xff]
    %v5007 = vld [vmem:[%s16 + $0x10] sm:$0xff]
    %v5008 = vld [vmem:[%s16 + $0x18] sm:$0xff]
    %v5009 = vld [vmem:[%s17] sm:$0x1]
    %v5011 = vlaneseq
    %v5012 = vshrl.u32 %v5011, 7
    %v5013 = vsub.s32 0, %v5012
    %v5014 = vrot.slane %v5009, %v5013
    %v5017 = vsel %vm202, %v5001, 0
    %v5020 = vsel %vm202, %v5002, 0
    %v5023 = vsel %vm202, %v5003, 0
    %v5026 = vsel %vm202, %v5004, 0
    %5028 = vmatprep.subr.mxu0 0.0
    %5029 = vmatpush1.msra.mxu0 0.0
    %5030 = vmatprep.subr.mxu0 0.0
    %5031 = vmatpush1.msra.mxu0 0.0
    %5032 = vmatprep.subr.mxu0 0.0
    %5033 = vmatpush1.msra.mxu0 0.0
    %5034 = vmatprep.subr.mxu0 0.0
    %5035 = vmatpush1.msra.mxu0 0.0
    %5036 = vmatprep.subr.mxu0 0.0
    %5037 = vmatpush1.msra.mxu0 0.0
    %5038 = vmatprep.subr.mxu0 0.0
    %5039 = vmatpush1.msra.mxu0 0.0
    %5040 = vmatprep.subr.mxu0 0.0
    %5041 = vmatpush1.msra.mxu0 0.0
    %5042 = vmatprep.subr.mxu0 0.0
    %5043 = vmatpush1.msra.mxu0 0.0
    %5044 = vmatprep.subr.mxu0 0.0
    %5045 = vmatpush1.msra.mxu0 0.0
    %5046 = vmatprep.subr.mxu0 0.0
    %5047 = vmatpush1.msra.mxu0 0.0
    %5048 = vmatprep.subr.mxu0 0.0
    %5049 = vmatpush1.msra.mxu0 0.0
    %5050 = vmatprep.subr.mxu0 0.0
    %5051 = vmatpush1.msra.mxu0 0.0
    %5052 = vmatprep.subr.mxu0 0.0
    %5053 = vmatpush1.msra.mxu0 %v5008
    %5054 = vmatprep.subr.mxu0 0.0
    %5055 = vmatpush1.msra.mxu0 %v5007
    %5056 = vmatprep.subr.mxu0 0.0
    %5057 = vmatpush1.msra.mxu0 %v5006
    %5058 = vmatprep.subr.mxu0 0.0
    %5059 = vmatpush1.msra.mxu0 %v5005
    %5060 = vmatprep.subr.mxu0 0.0
    %5061 = vmatpush2.msra.mxu0 0.0
    %5062 = vmatprep.subr.mxu0 0.0
    %5063 = vmatpush2.msra.mxu0 0.0
    %5064 = vmatprep.subr.mxu0 0.0
    %5065 = vmatpush2.msra.mxu0 0.0
    %5066 = vmatprep.subr.mxu0 0.0
    %5067 = vmatpush2.msra.mxu0 0.0
    %5068 = vmatprep.subr.mxu0 0.0
    %5069 = vmatpush2.msra.mxu0 0.0
    %5070 = vmatprep.subr.mxu0 0.0
    %5071 = vmatpush2.msra.mxu0 0.0
    %5072 = vmatprep.subr.mxu0 0.0
    %5073 = vmatpush2.msra.mxu0 0.0
    %5074 = vmatprep.subr.mxu0 0.0
    %5075 = vmatpush2.msra.mxu0 0.0
    %5076 = vmatprep.subr.mxu0 0.0
    %5077 = vmatpush2.msra.mxu0 0.0
    %5078 = vmatprep.subr.mxu0 0.0
    %5079 = vmatpush2.msra.mxu0 0.0
    %5080 = vmatprep.subr.mxu0 0.0
    %5081 = vmatpush2.msra.mxu0 0.0
    %5082 = vmatprep.subr.mxu0 0.0
    %5083 = vmatpush2.msra.mxu0 0.0
    %5084 = vmatprep.subr.mxu0 0.0
    %5085 = vmatpush2.msra.mxu0 0.0
    %5086 = vmatprep.subr.mxu0 0.0
    %5087 = vmatpush2.msra.mxu0 0.0
    %5088 = vmatprep.subr.mxu0 0.0
    %5089 = vmatpush2.msra.mxu0 0.0
    %5090 = vmatprep.subr.mxu0 0.0
    %5091 = vmatpush2.msra.mxu0 0.0
    %5092 = vmatprep.mubr.f32.mxu0 0.0
    %5093 = vmatmul.mubr.f32.gmra.mxu0 %v5017
    %v5094 = vpop.f32.mrf.mxu0
    %v5095 = vadd.f32 %v5014, %v5094
    %v5096 = vpop.f32.mrf.mxu0
    %5097 = vmatprep.mubr.f32.mxu0 0.0
    %5098 = vmatmul.mubr.f32.gmra.mxu0 %v5020
    %v5099 = vpop.f32.mrf.mxu0
    %v5100 = vadd.f32 %v5014, %v5099
    %v5101 = vpop.f32.mrf.mxu0
    %5102 = vmatprep.mubr.f32.mxu0 0.0
    %5103 = vmatmul.mubr.f32.gmra.mxu0 %v5023
    %v5104 = vpop.f32.mrf.mxu0
    %v5105 = vadd.f32 %v5014, %v5104
    %v5106 = vpop.f32.mrf.mxu0
    %5107 = vmatprep.mubr.f32.mxu0 0.0
    %5108 = vmatmul.mubr.f32.gmra.mxu0 %v5026
    %v5109 = vpop.f32.mrf.mxu0
    %v5110 = vadd.f32 %v5014, %v5109
    %v5111 = vpop.f32.mrf.mxu0
    %5112 = vdwg.mxu0
    %5113 = vst [vmem:[#allocation2] sm:$0xff] %v5095
    %5114 = vst [vmem:[#allocation2 + $0x8] sm:$0xff] %v5100
    %5115 = vst [vmem:[#allocation2 + $0x10] sm:$0xff] %v5105
    %5116 = vst [vmem:[#allocation2 + $0x18] sm:$0xff] %v5110
    // Predicated region
    $region74: #{tpu_custom_call.1} parent=1 // pred_check
      _
    $region75: #{tpu_custom_call.1} parent=1 // pred_check_branch
      %5118 = sbr.rel (0) target = $region77
    $region76: #{tpu_custom_call.1} parent=1 // pred_region
      %s5120 = ssub.s32 512, 512
      %5121 = vsyncadd [#allocation3], %s5120
      %s5122 = sshll.u32 [#allocation2], 4
      %s5123 = int_to_ptr.vmem [resolvable:$true] %s5122
      %5128 = dma.vmem_to_hbm [thread:$0]  %s5123, 512, %s18, [#allocation3], 128, 128, 8
    $region77: #{tpu_custom_call.1} parent=1 // pred_fallthru
      _
    // Predicated region
    $region78: #{tpu_custom_call.1} parent=1 // pred_check
      _
    $region79: #{tpu_custom_call.1} parent=1 // pred_check_branch
      %5130 = sbr.rel (0) target = $region81
    $region80: #{tpu_custom_call.1} parent=1 // pred_region
      %5131 = dma.done [#allocation3], 512
    $region81: #{tpu_custom_call.1} parent=1 // pred_fallthru
      _
    %5132 = vsyncpa [#allocation3], 1

</llo_original>
